<compile_context>
chip_gen: v7x
topology: tpu7x:2x2x1
jax: 0.10.0
libtpu: 0.0.40
codegen_flags: <defaults>
</compile_context>

<pallas_src>
import math
import jax
import jax.numpy as jnp
from jax.experimental import pallas as pl
from jax.experimental.pallas import tpu as pltpu

LN_EPS = 1e-5


# ---------------------------------------------------------------------------
# in-kernel math helpers (traced inside Pallas kernels; pure jnp outside too)
# ---------------------------------------------------------------------------
def _erf(x):
    # Abramowitz & Stegun 7.1.26 (|abs err| < 1.5e-7): exp/mul/add only, so it
    # always lowers on Mosaic (no reliance on an erf primitive lowering).
    ax = jnp.abs(x)
    t = 1.0 / (1.0 + 0.3275911 * ax)
    poly = t * (0.254829592 + t * (-0.284496736 + t * (1.421413741
             + t * (-1.453152027 + t * 1.061405429))))
    y = 1.0 - poly * jnp.exp(-ax * ax)
    return jnp.where(x >= 0.0, y, -y)


def _gelu_exact(x):
    return 0.5 * x * (1.0 + _erf(x * 0.7071067811865476))


def _hardswish(x):
    return x * jnp.clip(x + 3.0, 0.0, 6.0) * (1.0 / 6.0)


def _hardsigmoid(x):
    return jnp.clip(x + 3.0, 0.0, 6.0) * (1.0 / 6.0)


def _layernorm_lastdim(x, gamma, beta):
    mean = jnp.mean(x, axis=-1, keepdims=True)
    var = jnp.mean(jnp.square(x - mean), axis=-1, keepdims=True)
    return (x - mean) * jax.lax.rsqrt(var + LN_EPS) * gamma + beta


def _row_tile(n, cap=512, align=128):
    """MXU-aligned row tile.

    Full dim if n <= align; else the largest multiple of `align` (<= cap) that
    divides n; else an `align`-aligned tile with a ragged last block (handled
    by a pl.cdiv grid; rows are independent in every kernel that uses this).
    """
    if n <= align:
        return n
    best = 0
    t = align
    lim = min(n, cap)
    while t <= lim:
        if n % t == 0:
            best = t
        t += align
    if best:
        return best
    t = min(((n + align - 1) // align) * align, cap)
    return n if t >= n else t


# ---------------------------------------------------------------------------
# per-generation VMEM limit (large on v5e/v6e's 128 MiB, capped on v7x's 64)
# ---------------------------------------------------------------------------
_VMEM_LIMIT_CACHE = None


def _vmem_limit_bytes():
    global _VMEM_LIMIT_CACHE
    if _VMEM_LIMIT_CACHE is None:
        try:
            cap = int(pltpu.get_tpu_info().vmem_capacity_bytes)
        except Exception:
            cap = 64 * 1024 * 1024          # conservative: safe on every gen
        _VMEM_LIMIT_CACHE = min((cap * 3) // 4, 100 * 1024 * 1024)
    return _VMEM_LIMIT_CACHE


# ---------------------------------------------------------------------------
# one-time probes (resolve BEFORE jit tracing; they degrade safely otherwise)
# ---------------------------------------------------------------------------
_STRIDED_DS_OK = None
_BUFFERED1_OK = None


def _strided_ds_ok():
    """Does this backend lower strided pl.ds loads from a VMEM ref?"""
    global _STRIDED_DS_OK
    if _STRIDED_DS_OK is None:
        try:
            def k(x_ref, o_ref):
                a = x_ref[pl.ds(0, 3, stride=2), pl.ds(1, 3, stride=2), :]
                b = x_ref[pl.ds(2, 3, stride=2), pl.ds(2, 3, stride=2), :]
                o_ref[...] = a + b

            xs = jnp.arange(8 * 8 * 128, dtype=jnp.float32).reshape(8, 8, 128)
            out = pl.pallas_call(
                k, out_shape=jax.ShapeDtypeStruct((3, 3, 128), jnp.float32))(xs)
            out = jax.block_until_ready(out)
            want = xs[0:5:2, 1:6:2, :] + xs[2:7:2, 2:7:2, :]
            _STRIDED_DS_OK = bool(jnp.allclose(out, want))
        except Exception:
            _STRIDED_DS_OK = False
    return _STRIDED_DS_OK


def _buffered1_ok():
    """Does pipeline_mode=pl.Buffered(1) lower correctly for constant blocks?"""
    global _BUFFERED1_OK
    if _BUFFERED1_OK is None:
        try:
            def k(x_ref, w_ref, o_ref):
                o_ref[...] = x_ref[...] + w_ref[...]

            x = jnp.ones((16, 128), jnp.float32)
            w = jnp.full((8, 128), 2.0, jnp.float32)
            out = pl.pallas_call(
                k, out_shape=jax.ShapeDtypeStruct((16, 128), jnp.float32),
                grid=(2,),
                in_specs=[pl.BlockSpec((8, 128), lambda i: (i, 0)),
                          pl.BlockSpec((8, 128), lambda i: (0, 0),
                                       pipeline_mode=pl.Buffered(1))],
                out_specs=pl.BlockSpec((8, 128), lambda i: (i, 0)),
            )(x, w)
            out = jax.block_until_ready(out)
            _BUFFERED1_OK = bool(jnp.allclose(out, 3.0))
        except Exception:
            _BUFFERED1_OK = False
    return _BUFFERED1_OK


def resolve_backend_probes():
    _strided_ds_ok()
    _buffered1_ok()


def _weight_spec(block_shape, index_map):
    """Constant-index weight spec; single-buffered when supported (weights
    never change across the grid, so double-buffering only wastes VMEM)."""
    if _buffered1_ok():
        return pl.BlockSpec(block_shape, index_map, pipeline_mode=pl.Buffered(1))
    return pl.BlockSpec(block_shape, index_map)


# ---------------------------------------------------------------------------
# Kernel 1: token MLP (Linear -> exact GELU -> Linear), row-tiled over B*T
# ---------------------------------------------------------------------------
def _mlp_kernel(x_ref, w1_ref, b1_ref, w2_ref, b2_ref, o_ref):
    w1 = w1_ref[...]                                              # bf16 (or f32)
    w2 = w2_ref[...]
    x = x_ref[...].astype(w1.dtype)                               # (tm, inc)
    h = jnp.dot(x, w1, preferred_element_type=jnp.float32) \
        + b1_ref[...].astype(jnp.float32)
    h = _gelu_exact(h)
    y = jnp.dot(h.astype(w2.dtype), w2, preferred_element_type=jnp.float32) \
        + b2_ref[...].astype(jnp.float32)
    o_ref[...] = y.astype(o_ref.dtype)


def mlp_pallas(x2d, w1, b1, w2, b2, out_dtype=None):
    N, inc = x2d.shape
    ouc = w1.shape[1]
    out_dtype = out_dtype if out_dtype is not None else x2d.dtype
    tm = _row_tile(N, cap=512)
    const = lambda i: (0, 0)
    return pl.pallas_call(
        _mlp_kernel,
        out_shape=jax.ShapeDtypeStruct((N, ouc), out_dtype),
        grid=(pl.cdiv(N, tm),),
        in_specs=[
            pl.BlockSpec((tm, inc), lambda i: (i, 0)),
            _weight_spec((inc, ouc), const),
            _weight_spec((1, ouc), const),
            _weight_spec((ouc, ouc), const),
            _weight_spec((1, ouc), const),
        ],
        out_specs=pl.BlockSpec((tm, ouc), lambda i: (i, 0)),
        compiler_params=pltpu.CompilerParams(
            dimension_semantics=("parallel",),
            vmem_limit_bytes=_vmem_limit_bytes()),
    )(x2d, w1, b1, w2, b2)


# ---------------------------------------------------------------------------
# Kernel 2: depthwise 3x3 conv (in-kernel zero pad, stride 1 or 2)
#           + LayerNorm(C) + Hardswish, and the SE gate (hoisted here so it
#           runs once per image instead of once per K3 row tile)
# ---------------------------------------------------------------------------
def _make_dw_kernel(stride):
    def kernel(x_ref, w_ref, g_ref, b_ref, sw1_ref, sb1_ref, sw2_ref, sb2_ref,
               y_ref, gate_ref, xp_ref):
        H, W = x_ref.shape[1], x_ref.shape[2]
        Ho, Wo = y_ref.shape[1], y_ref.shape[2]
        C = x_ref.shape[3]

        # Zero only the 1-wide halo strips; the interior is fully overwritten
        # below.  Done every grid step (NOT gated on program_id: the scratch is
        # per-core and the grid may be megacore-sharded).
        xp_ref[pl.ds(0, 1), :, :] = jnp.zeros((1, W + 2, C), xp_ref.dtype)
        xp_ref[pl.ds(H + 1, 1), :, :] = jnp.zeros((1, W + 2, C), xp_ref.dtype)
        xp_ref[pl.ds(1, H), pl.ds(0, 1), :] = jnp.zeros((H, 1, C), xp_ref.dtype)
        xp_ref[pl.ds(1, H), pl.ds(W + 1, 1), :] = jnp.zeros((H, 1, C), xp_ref.dtype)
        xp_ref[pl.ds(1, H), pl.ds(1, W), :] = x_ref[0]

        w = w_ref[...].astype(jnp.float32)                        # (9, C)
        acc = jnp.zeros((Ho, Wo, C), jnp.float32)
        # TODO(synk): at production 24x24x2048, process output-row slabs in a
        # fori_loop (partial pool accumulation) so acc never spills.
        for dy in range(3):
            for dx in range(3):
                if stride == 1:
                    tap = xp_ref[pl.ds(dy, Ho), pl.ds(dx, Wo), :]
                else:
                    tap = xp_ref[pl.ds(dy, Ho, stride=stride),
                                 pl.ds(dx, Wo, stride=stride), :]
                acc = acc + tap.astype(jnp.float32) * w[3 * dy + dx][None, None, :]

        y = _hardswish(_layernorm_lastdim(
            acc,
            g_ref[...][None].astype(jnp.float32),
            b_ref[...][None].astype(jnp.float32)))

        # SqueezeExcitation gate (global avg pool -> fc1 -> ReLU -> fc2 -> hsig)
        pool = jnp.sum(jnp.sum(y, axis=0), axis=0, keepdims=True) * (1.0 / (Ho * Wo))
        sw1 = sw1_ref[...]
        hid = jnp.dot(pool.astype(sw1.dtype), sw1,
                      preferred_element_type=jnp.float32) + sb1_ref[...].astype(jnp.float32)
        hid = jnp.maximum(hid, 0.0)
        sw2 = sw2_ref[...]
        gate = jnp.dot(hid.astype(sw2.dtype), sw2,
                       preferred_element_type=jnp.float32) + sb2_ref[...].astype(jnp.float32)
        gate_ref[0] = _hardsigmoid(gate)
        y_ref[0] = y.astype(y_ref.dtype)
    return kernel


def dw_ln_hs_gate_pallas(x, w9, gamma, beta, sw1, sb1, sw2, sb2, stride=1):
    B, H, W, C = x.shape
    if stride == 2 and not _strided_ds_ok():
        # Safe fallback when strided ref loads do not lower: stride-1 kernel,
        # downsample + pool + gate with XLA.  Correctness is never at risk.
        y_full, _ = dw_ln_hs_gate_pallas(x, w9, gamma, beta,
                                         sw1, sb1, sw2, sb2, stride=1)
        y = y_full[:, ::2, ::2, :]
        pool = jnp.mean(y.astype(jnp.float32), axis=(1, 2))          # (B, C)
        hid = jnp.maximum(pool @ sw1.astype(jnp.float32) + sb1, 0.0)
        gate = _hardsigmoid(hid @ sw2.astype(jnp.float32) + sb2)
        return y, gate[:, None, :]

    Ho = (H - 1) // stride + 1
    Wo = (W - 1) // stride + 1
    S = sw1.shape[1]
    const = lambda b: (0, 0)
    return pl.pallas_call(
        _make_dw_kernel(stride),
        out_shape=(jax.ShapeDtypeStruct((B, Ho, Wo, C), x.dtype),
                   jax.ShapeDtypeStruct((B, 1, C), jnp.float32)),
        grid=(B,),
        in_specs=[
            pl.BlockSpec((1, H, W, C), lambda b: (b, 0, 0, 0)),
            _weight_spec((9, C), const),
            _weight_spec((1, C), const),
            _weight_spec((1, C), const),
            _weight_spec((C, S), const),
            _weight_spec((1, S), const),
            _weight_spec((S, C), const),
            _weight_spec((1, C), const),
        ],
        out_specs=(pl.BlockSpec((1, Ho, Wo, C), lambda b: (b, 0, 0, 0)),
                   pl.BlockSpec((1, 1, C), lambda b: (b, 0, 0))),
        scratch_shapes=[pltpu.VMEM((H + 2, W + 2, C), x.dtype)],
        compiler_params=pltpu.CompilerParams(
            dimension_semantics=("parallel",),
            vmem_limit_bytes=_vmem_limit_bytes()),
    )(x, w9, gamma, beta, sw1, sb1, sw2, sb2)


# ---------------------------------------------------------------------------
# Kernel 3 (fused IR tail): channel scale by precomputed SE gate + 1x1 conv
#           (no bias) + LayerNorm(C) [+ residual], row-tiled over (B, H*W)
# ---------------------------------------------------------------------------
def _make_tail_kernel(with_residual):
    def kernel(*refs):
        if with_residual:
            gate_ref, x_ref, res_ref, wp_ref, g_ref, bt_ref, o_ref = refs
        else:
            gate_ref, x_ref, wp_ref, g_ref, bt_ref, o_ref = refs
            res_ref = None
        gate = gate_ref[0].astype(jnp.float32)                       # (1, C)
        xs = x_ref[0].astype(jnp.float32) * gate                     # (tr, C)
        wp = wp_ref[...]
        y = jnp.dot(xs.astype(wp.dtype), wp,
                    preferred_element_type=jnp.float32)              # 1x1 conv
        y = _layernorm_lastdim(y, g_ref[...].astype(jnp.float32),
                               bt_ref[...].astype(jnp.float32))
        if with_residual:
            y = y + res_ref[0].astype(jnp.float32)
        o_ref[0] = y.astype(o_ref.dtype)
    return kernel


def se_proj_ln_pallas(x, gate, w_proj, gamma, beta, residual=None):
    B, HW, C = x.shape
    tr = _row_tile(HW, cap=512)
    grid = (B, pl.cdiv(HW, tr))
    row = lambda b, r: (b, r, 0)
    const = lambda b, r: (0, 0)

    in_specs = [
        pl.BlockSpec((1, 1, C), lambda b, r: (b, 0, 0)),
        pl.BlockSpec((1, tr, C), row),
    ]
    args = [gate, x]
    if residual is not None:
        in_specs.append(pl.BlockSpec((1, tr, C), row))
        args.append(residual)
    in_specs += [
        _weight_spec((C, C), const),
        _weight_spec((1, C), const),
        _weight_spec((1, C), const),
    ]
    args += [w_proj, gamma, beta]

    return pl.pallas_call(
        _make_tail_kernel(residual is not None),
        out_shape=jax.ShapeDtypeStruct((B, HW, C), x.dtype),
        grid=grid,
        in_specs=in_specs,
        out_specs=pl.BlockSpec((1, tr, C), row),
        compiler_params=pltpu.CompilerParams(
            dimension_semantics=("parallel", "parallel"),
            vmem_limit_bytes=_vmem_limit_bytes()),
    )(*args)


# ---------------------------------------------------------------------------
# Full LDPNetProjector forward (glue is free XLA reshapes + weight casts)
# ---------------------------------------------------------------------------
def ldp_projector_forward(x, p, act_dtype=None, param_dtype=jnp.bfloat16):
    B, T, inc = x.shape
    h = int(math.sqrt(T))
    C = p["w2"].shape[1]
    inter_dtype = act_dtype if act_dtype is not None else x.dtype
    wd = (lambda w: w) if param_dtype is None else (lambda w: w.astype(param_dtype))

    # token MLP over all B*T rows (full MXU M tiles, lane-dense output)
    y_rows = mlp_pallas(x.reshape(B * T, inc), wd(p["w1"]), p["b1"],
                        wd(p["w2"]), p["b2"], out_dtype=inter_dtype)   # (B*T, C)
    y = y_rows.reshape(B, h, h, C)                                     # NHWC

    # InvertedResidual block 1: stride 1, residual connection
    d1, gate1 = dw_ln_hs_gate_pallas(
        y, p["dw1"], p["ln1_g"], p["ln1_b"],
        wd(p["se1_w1"]), p["se1_b1"], wd(p["se1_w2"]), p["se1_b2"], stride=1)
    out1 = se_proj_ln_pallas(d1.reshape(B, h * h, C), gate1,
                             wd(p["p1_w"]), p["ln2_g"], p["ln2_b"],
                             residual=y_rows.reshape(B, h * h, C))
    out1 = out1.reshape(B, h, h, C)

    # InvertedResidual block 2: stride 2, no residual
    d2, gate2 = dw_ln_hs_gate_pallas(
        out1, p["dw2"], p["ln3_g"], p["ln3_b"],
        wd(p["se2_w1"]), p["se2_b1"], wd(p["se2_w2"]), p["se2_b2"], stride=2)
    _, Ho, Wo, _ = d2.shape
    out2 = se_proj_ln_pallas(d2.reshape(B, Ho * Wo, C), gate2,
                             wd(p["p2_w"]), p["ln4_g"], p["ln4_b"], residual=None)
    return out2                                                        # (B, Ho*Wo, C)


# ---------------------------------------------------------------------------
# parameter init (f32 master weights; matmul weights cast to bf16 per call)
# ---------------------------------------------------------------------------
def _make_divisible(v, divisor=8):
    new_v = max(divisor, int(v + divisor / 2) // divisor * divisor)
    if new_v < 0.9 * v:
        new_v += divisor
    return new_v


def init_params(key, inc, ouc):
    S = _make_divisible(ouc // 4, 8)   # SE squeeze channels
    ks = jax.random.split(key, 24)
    n = lambda k, shp, sc: jax.random.normal(k, shp, jnp.float32) * sc
    p = {
        "w1": n(ks[0], (inc, ouc), 1.0 / math.sqrt(inc)),
        "b1": n(ks[1], (1, ouc), 0.02),
        "w2": n(ks[2], (ouc, ouc), 1.0 / math.sqrt(ouc)),
        "b2": n(ks[3], (1, ouc), 0.02),
    }
    for i, base in enumerate(["1", "2"]):
        o = 4 + i * 10
        p["dw" + base] = n(ks[o + 0], (9, ouc), 0.2)
        p["ln" + str(2 * i + 1) + "_g"] = 1.0 + n(ks[o + 1], (1, ouc), 0.02)
        p["ln" + str(2 * i + 1) + "_b"] = n(ks[o + 2], (1, ouc), 0.02)
        p["se" + base + "_w1"] = n(ks[o + 3], (ouc, S), 1.0 / math.sqrt(ouc))
        p["se" + base + "_b1"] = n(ks[o + 4], (1, S), 0.02)
        p["se" + base + "_w2"] = n(ks[o + 5], (S, ouc), 1.0 / math.sqrt(S))
        p["se" + base + "_b2"] = n(ks[o + 6], (1, ouc), 0.02)
        p["p" + base + "_w"] = n(ks[o + 7], (ouc, ouc), 1.0 / math.sqrt(ouc))
        p["ln" + str(2 * i + 2) + "_g"] = 1.0 + n(ks[o + 8], (1, ouc), 0.02)
        p["ln" + str(2 * i + 2) + "_b"] = n(ks[o + 9], (1, ouc), 0.02)
    return p


# ---------------------------------------------------------------------------
# pure-JAX f32 reference (loose correctness check; kernel uses bf16 weights)
# ---------------------------------------------------------------------------
def _reference_forward(x, p):
    B, T, inc = x.shape
    h = int(math.sqrt(T))
    C = p["w2"].shape[1]

    def ln(z, g, b):
        m = jnp.mean(z, axis=-1, keepdims=True)
        v = jnp.mean(jnp.square(z - m), axis=-1, keepdims=True)
        return (z - m) * jax.lax.rsqrt(v + LN_EPS) * g + b

    def hswish(z):
        return z * jnp.clip(z + 3.0, 0.0, 6.0) / 6.0

    def hsig(z):
        return jnp.clip(z + 3.0, 0.0, 6.0) / 6.0

    y = jnp.dot(x.reshape(-1, inc), p["w1"]) + p["b1"]
    y = jax.nn.gelu(y, approximate=False)
    y = jnp.dot(y, p["w2"]) + p["b2"]
    y = y.reshape(B, h, h, C)

    def ir_block(z, w9, g1, b1, sw1, sb1, sw2, sb2, wp, g2, b2_, stride, residual):
        Bz, H, W, Cz = z.shape
        Ho = (H - 1) // stride + 1
        Wo = (W - 1) // stride + 1
        zp = jnp.pad(z, ((0, 0), (1, 1), (1, 1), (0, 0)))
        acc = jnp.zeros((Bz, Ho, Wo, Cz), jnp.float32)
        for dy in range(3):
            for dx in range(3):
                tap = zp[:, dy:dy + stride * (Ho - 1) + 1:stride,
                         dx:dx + stride * (Wo - 1) + 1:stride, :]
                acc = acc + tap * w9[3 * dy + dx][None, None, None, :]
        d = hswish(ln(acc, g1, b1))
        pool = jnp.mean(d, axis=(1, 2), keepdims=True)
        gate = hsig(jnp.dot(jnp.maximum(jnp.dot(pool, sw1) + sb1, 0.0), sw2) + sb2)
        d = d * gate
        out = ln(jnp.einsum("bhwc,cd->bhwd", d, wp), g2, b2_)
        if residual is not None:
            out = out + residual
        return out

    out1 = ir_block(y, p["dw1"], p["ln1_g"], p["ln1_b"],
                    p["se1_w1"], p["se1_b1"], p["se1_w2"], p["se1_b2"],
                    p["p1_w"], p["ln2_g"], p["ln2_b"], 1, residual=y)
    out2 = ir_block(out1, p["dw2"], p["ln3_g"], p["ln3_b"],
                    p["se2_w1"], p["se2_b1"], p["se2_w2"], p["se2_b2"],
                    p["p2_w"], p["ln4_g"], p["ln4_b"], 2, residual=None)
    Bo, Ho, Wo, Co = out2.shape
    return out2.reshape(Bo, Ho * Wo, Co)


if __name__ == "__main__":
    # config: mm_hidden_size=16, hidden_size=32, 16 image tokens (4x4), batch=2
    B, T, INC, OUC = 2, 16, 16, 32
    key = jax.random.PRNGKey(0)
    k_x, k_p = jax.random.split(key)
    x = jax.random.normal(k_x, (B, T, INC), jnp.float32)
    params = init_params(k_p, INC, OUC)

    resolve_backend_probes()   # run eager probes before jit tracing

    fwd = jax.jit(ldp_projector_forward)
    out = jax.block_until_ready(fwd(x, params))

    h = int(math.sqrt(T))
    ho = (h - 1) // 2 + 1              # stride-2 output spatial size (padding=1, k=3)
    assert out.shape == (B, ho * ho, OUC), out.shape
    assert bool(jnp.all(jnp.isfinite(out)))

    ref = _reference_forward(x, params)
    err = float(jnp.max(jnp.abs(out.astype(jnp.float32) - ref)))
    scale = max(1.0, float(jnp.max(jnp.abs(ref))))
    # bf16 matmul weights/operands vs an f32 reference: allow 10% of ref scale
    assert err < 0.1 * scale, f"max abs err {err} vs ref scale {scale}"
    print("KERNEL_OK")
</pallas_src>

<mosaic_0001>
module attributes {stable_mosaic.version = 11 : i64} {
  func.func @k(%arg0: memref<8x8x128xf32, #tpu.memory_space<vmem>>, %arg1: memref<3x3x128xf32, #tpu.memory_space<vmem>>) attributes {dimension_semantics = [], scalar_prefetch = 0 : i64, scratch_operands = 0 : i64, tpu.core_type = #tpu.core_type<tc>} {
    %c0 = arith.constant 0 : index
    %c1 = arith.constant 1 : index
    %c0_0 = arith.constant 0 : index
    %0 = tpu.strided_load %arg0[%c0, %c1, %c0_0] {strides = array<i32: 2, 2, 1>} : memref<8x8x128xf32, #tpu.memory_space<vmem>>, vector<3x3x128xf32>
    %c2 = arith.constant 2 : index
    %c2_1 = arith.constant 2 : index
    %c0_2 = arith.constant 0 : index
    %1 = tpu.strided_load %arg0[%c2, %c2_1, %c0_2] {strides = array<i32: 2, 2, 1>} : memref<8x8x128xf32, #tpu.memory_space<vmem>>, vector<3x3x128xf32>
    %2 = arith.addf %0, %1 : vector<3x3x128xf32>
    %c0_3 = arith.constant 0 : index
    %c0_4 = arith.constant 0 : index
    %c0_5 = arith.constant 0 : index
    %3 = vector.load %arg1[%c0_3, %c0_4, %c0_5] : memref<3x3x128xf32, #tpu.memory_space<vmem>>, vector<3x3x128xf32>
    tpu.vector_store %arg1[%c0_3, %c0_4, %c0_5], %2 {strides = array<i32>} : memref<3x3x128xf32, #tpu.memory_space<vmem>>, vector<3x3x128xf32>,
    return
  }
}

module attributes {stable_mosaic.version = 11 : i64} {
  func.func @k(%arg0: i32, %arg1: memref<8x128xf32, #tpu.memory_space<vmem>>, %arg2: memref<8x128xf32, #tpu.memory_space<vmem>>, %arg3: memref<8x128xf32, #tpu.memory_space<vmem>>) attributes {dimension_semantics = [#tpu.dimension_semantics<arbitrary>], iteration_bounds = array<i64: 2>, scalar_prefetch = 0 : i64, scratch_operands = 0 : i64, tpu.core_type = #tpu.core_type<tc>, window_params = [{transform_indices = @transform_0, window_bounds = array<i64: 8, 128>}, {pipeline_mode = #tpu.pipeline_mode<synchronous>, transform_indices = @transform_1, window_bounds = array<i64: 8, 128>}, {transform_indices = @transform_2, window_bounds = array<i64: 8, 128>}]} {
    %c0 = arith.constant 0 : index
    %c0_0 = arith.constant 0 : index
    %0 = vector.load %arg1[%c0, %c0_0] : memref<8x128xf32, #tpu.memory_space<vmem>>, vector<8x128xf32>
    %c0_1 = arith.constant 0 : index
    %c0_2 = arith.constant 0 : index
    %1 = vector.load %arg2[%c0_1, %c0_2] : memref<8x128xf32, #tpu.memory_space<vmem>>, vector<8x128xf32>
    %2 = arith.addf %0, %1 : vector<8x128xf32>
    %c0_3 = arith.constant 0 : index
    %c0_4 = arith.constant 0 : index
    %3 = vector.load %arg3[%c0_3, %c0_4] : memref<8x128xf32, #tpu.memory_space<vmem>>, vector<8x128xf32>
    tpu.vector_store %arg3[%c0_3, %c0_4], %2 {strides = array<i32>} : memref<8x128xf32, #tpu.memory_space<vmem>>, vector<8x128xf32>,
    return
  }
  func.func @transform_0(%arg0: i32) -> (i32, i32) {
    %c0_i32 = arith.constant 0 : i32
    %c0_i32_0 = arith.constant 0 : i32
    return %arg0, %c0_i32 : i32, i32
  }
  func.func @transform_1(%arg0: i32) -> (i32, i32) {
    %c0_i32 = arith.constant 0 : i32
    %c0_i32_0 = arith.constant 0 : i32
    %c0_i32_1 = arith.constant 0 : i32
    return %c0_i32, %c0_i32_0 : i32, i32
  }
  func.func @transform_2(%arg0: i32) -> (i32, i32) {
    %c0_i32 = arith.constant 0 : i32
    %c0_i32_0 = arith.constant 0 : i32
    return %arg0, %c0_i32 : i32, i32
  }
}

module attributes {stable_mosaic.version = 11 : i64} {
  func.func @_mlp_kernel(%arg0: i32, %arg1: memref<32x16xf32, #tpu.memory_space<vmem>>, %arg2: memref<16x32xbf16, #tpu.memory_space<vmem>>, %arg3: memref<1x32xf32, #tpu.memory_space<vmem>>, %arg4: memref<32x32xbf16, #tpu.memory_space<vmem>>, %arg5: memref<1x32xf32, #tpu.memory_space<vmem>>, %arg6: memref<32x32xf32, #tpu.memory_space<vmem>>) attributes {dimension_semantics = [#tpu.dimension_semantics<parallel>], iteration_bounds = array<i64: 1>, scalar_prefetch = 0 : i64, scratch_operands = 0 : i64, tpu.core_type = #tpu.core_type<tc>, window_params = [{transform_indices = @transform_0, window_bounds = array<i64: 32, 16>}, {pipeline_mode = #tpu.pipeline_mode<synchronous>, transform_indices = @transform_1, window_bounds = array<i64: 16, 32>}, {pipeline_mode = #tpu.pipeline_mode<synchronous>, transform_indices = @transform_2, window_bounds = array<i64: 1, 32>}, {pipeline_mode = #tpu.pipeline_mode<synchronous>, transform_indices = @transform_3, window_bounds = array<i64: 32, 32>}, {pipeline_mode = #tpu.pipeline_mode<synchronous>, transform_indices = @transform_4, window_bounds = array<i64: 1, 32>}, {transform_indices = @transform_5, window_bounds = array<i64: 32, 32>}]} {
    %c0 = arith.constant 0 : index
    %c0_0 = arith.constant 0 : index
    %0 = vector.load %arg2[%c0, %c0_0] : memref<16x32xbf16, #tpu.memory_space<vmem>>, vector<16x32xbf16>
    %c0_1 = arith.constant 0 : index
    %c0_2 = arith.constant 0 : index
    %1 = vector.load %arg4[%c0_1, %c0_2] : memref<32x32xbf16, #tpu.memory_space<vmem>>, vector<32x32xbf16>
    %c0_3 = arith.constant 0 : index
    %c0_4 = arith.constant 0 : index
    %2 = vector.load %arg1[%c0_3, %c0_4] : memref<32x16xf32, #tpu.memory_space<vmem>>, vector<32x16xf32>
    %3 = arith.truncf %2 : vector<32x16xf32> to vector<32x16xbf16>
    %cst = arith.constant dense<0.000000e+00> : vector<32x32xf32>
    %4 = tpu.matmul %3, %0, %cst {dimension_numbers = #tpu.dot_dimension_numbers<[1], [0], [0], [1], [0, 0, 1, 1], [], []>} : vector<32x16xbf16>, vector<16x32xbf16>, vector<32x32xf32> -> vector<32x32xf32>
    %c0_5 = arith.constant 0 : index
    %c0_6 = arith.constant 0 : index
    %5 = vector.load %arg3[%c0_5, %c0_6] : memref<1x32xf32, #tpu.memory_space<vmem>>, vector<1x32xf32>
    %6 = vector.broadcast %5 : vector<1x32xf32> to vector<32x32xf32>
    %7 = arith.addf %4, %6 : vector<32x32xf32>
    %cst_7 = arith.constant 5.000000e-01 : f32
    %8 = vector.broadcast %cst_7 : f32 to vector<32x32xf32>
    %9 = arith.mulf %8, %7 : vector<32x32xf32>
    %cst_8 = arith.constant 0.707106769 : f32
    %10 = vector.broadcast %cst_8 : f32 to vector<32x32xf32>
    %11 = arith.mulf %7, %10 : vector<32x32xf32>
    %12 = math.absf %11 : vector<32x32xf32>
    %cst_9 = arith.constant 0.327591091 : f32
    %13 = vector.broadcast %cst_9 : f32 to vector<32x32xf32>
    %14 = arith.mulf %13, %12 : vector<32x32xf32>
    %cst_10 = arith.constant 1.000000e+00 : f32
    %15 = vector.broadcast %cst_10 : f32 to vector<32x32xf32>
    %16 = arith.addf %15, %14 : vector<32x32xf32>
    %cst_11 = arith.constant 1.000000e+00 : f32
    %17 = vector.broadcast %cst_11 : f32 to vector<32x32xf32>
    %18 = arith.divf %17, %16 : vector<32x32xf32>
    %cst_12 = arith.constant 1.06140542 : f32
    %19 = vector.broadcast %cst_12 : f32 to vector<32x32xf32>
    %20 = arith.mulf %18, %19 : vector<32x32xf32>
    %cst_13 = arith.constant -1.45315206 : f32
    %21 = vector.broadcast %cst_13 : f32 to vector<32x32xf32>
    %22 = arith.addf %21, %20 : vector<32x32xf32>
    %23 = arith.mulf %18, %22 : vector<32x32xf32>
    %cst_14 = arith.constant 1.42141378 : f32
    %24 = vector.broadcast %cst_14 : f32 to vector<32x32xf32>
    %25 = arith.addf %24, %23 : vector<32x32xf32>
    %26 = arith.mulf %18, %25 : vector<32x32xf32>
    %cst_15 = arith.constant -0.284496725 : f32
    %27 = vector.broadcast %cst_15 : f32 to vector<32x32xf32>
    %28 = arith.addf %27, %26 : vector<32x32xf32>
    %29 = arith.mulf %18, %28 : vector<32x32xf32>
    %cst_16 = arith.constant 0.254829586 : f32
    %30 = vector.broadcast %cst_16 : f32 to vector<32x32xf32>
    %31 = arith.addf %30, %29 : vector<32x32xf32>
    %32 = arith.mulf %18, %31 : vector<32x32xf32>
    %cst_17 = arith.constant 0.000000e+00 : f32
    %33 = vector.broadcast %cst_17 : f32 to vector<32x32xf32>
    %34 = arith.subf %33, %12 : vector<32x32xf32>
    %35 = arith.mulf %34, %12 : vector<32x32xf32>
    %36 = math.exp %35 : vector<32x32xf32>
    %37 = arith.mulf %32, %36 : vector<32x32xf32>
    %cst_18 = arith.constant 1.000000e+00 : f32
    %38 = vector.broadcast %cst_18 : f32 to vector<32x32xf32>
    %39 = arith.subf %38, %37 : vector<32x32xf32>
    %cst_19 = arith.constant 0.000000e+00 : f32
    %40 = vector.broadcast %cst_19 : f32 to vector<32x32xf32>
    %41 = arith.cmpf oge, %11, %40 : vector<32x32xf32>
    %cst_20 = arith.constant 0.000000e+00 : f32
    %42 = vector.broadcast %cst_20 : f32 to vector<32x32xf32>
    %43 = arith.subf %42, %39 : vector<32x32xf32>
    %44 = arith.select %41, %39, %43 : vector<32x32xi1>, vector<32x32xf32>
    %cst_21 = arith.constant 1.000000e+00 : f32
    %45 = vector.broadcast %cst_21 : f32 to vector<32x32xf32>
    %46 = arith.addf %45, %44 : vector<32x32xf32>
    %47 = arith.mulf %9, %46 : vector<32x32xf32>
    %48 = arith.truncf %47 : vector<32x32xf32> to vector<32x32xbf16>
    %cst_22 = arith.constant dense<0.000000e+00> : vector<32x32xf32>
    %49 = tpu.matmul %48, %1, %cst_22 {dimension_numbers = #tpu.dot_dimension_numbers<[1], [0], [0], [1], [0, 0, 1, 1], [], []>} : vector<32x32xbf16>, vector<32x32xbf16>, vector<32x32xf32> -> vector<32x32xf32>
    %c0_23 = arith.constant 0 : index
    %c0_24 = arith.constant 0 : index
    %50 = vector.load %arg5[%c0_23, %c0_24] : memref<1x32xf32, #tpu.memory_space<vmem>>, vector<1x32xf32>
    %51 = vector.broadcast %50 : vector<1x32xf32> to vector<32x32xf32>
    %52 = arith.addf %49, %51 : vector<32x32xf32>
    %c0_25 = arith.constant 0 : index
    %c0_26 = arith.constant 0 : index
    %53 = vector.load %arg6[%c0_25, %c0_26] : memref<32x32xf32, #tpu.memory_space<vmem>>, vector<32x32xf32>
    tpu.vector_store %arg6[%c0_25, %c0_26], %52 {strides = array<i32>} : memref<32x32xf32, #tpu.memory_space<vmem>>, vector<32x32xf32>,
    return
  }
  func.func @transform_0(%arg0: i32) -> (i32, i32) {
    %c0_i32 = arith.constant 0 : i32
    %c0_i32_0 = arith.constant 0 : i32
    return %arg0, %c0_i32 : i32, i32
  }
  func.func @transform_1(%arg0: i32) -> (i32, i32) {
    %c0_i32 = arith.constant 0 : i32
    %c0_i32_0 = arith.constant 0 : i32
    %c0_i32_1 = arith.constant 0 : i32
    return %c0_i32, %c0_i32_0 : i32, i32
  }
  func.func @transform_2(%arg0: i32) -> (i32, i32) {
    %c0_i32 = arith.constant 0 : i32
    %c0_i32_0 = arith.constant 0 : i32
    %c0_i32_1 = arith.constant 0 : i32
    return %c0_i32, %c0_i32_0 : i32, i32
  }
  func.func @transform_3(%arg0: i32) -> (i32, i32) {
    %c0_i32 = arith.constant 0 : i32
    %c0_i32_0 = arith.constant 0 : i32
    %c0_i32_1 = arith.constant 0 : i32
    return %c0_i32, %c0_i32_0 : i32, i32
  }
  func.func @transform_4(%arg0: i32) -> (i32, i32) {
    %c0_i32 = arith.constant 0 : i32
    %c0_i32_0 = arith.constant 0 : i32
    %c0_i32_1 = arith.constant 0 : i32
    return %c0_i32, %c0_i32_0 : i32, i32
  }
  func.func @transform_5(%arg0: i32) -> (i32, i32) {
    %c0_i32 = arith.constant 0 : i32
    %c0_i32_0 = arith.constant 0 : i32
    return %arg0, %c0_i32 : i32, i32
  }
}

module attributes {stable_mosaic.version = 11 : i64} {
  func.func @kernel(%arg0: i32, %arg1: memref<1x4x4x32xf32, #tpu.memory_space<vmem>>, %arg2: memref<9x32xf32, #tpu.memory_space<vmem>>, %arg3: memref<1x32xf32, #tpu.memory_space<vmem>>, %arg4: memref<1x32xf32, #tpu.memory_space<vmem>>, %arg5: memref<32x8xbf16, #tpu.memory_space<vmem>>, %arg6: memref<1x8xf32, #tpu.memory_space<vmem>>, %arg7: memref<8x32xbf16, #tpu.memory_space<vmem>>, %arg8: memref<1x32xf32, #tpu.memory_space<vmem>>, %arg9: memref<1x4x4x32xf32, #tpu.memory_space<vmem>>, %arg10: memref<1x1x32xf32, #tpu.memory_space<vmem>>, %arg11: memref<6x6x32xf32, #tpu.memory_space<vmem>>) attributes {dimension_semantics = [#tpu.dimension_semantics<parallel>], iteration_bounds = array<i64: 2>, scalar_prefetch = 0 : i64, scratch_operands = 1 : i64, tpu.core_type = #tpu.core_type<tc>, window_params = [{transform_indices = @transform_0, window_bounds = array<i64: 1, 4, 4, 32>}, {pipeline_mode = #tpu.pipeline_mode<synchronous>, transform_indices = @transform_1, window_bounds = array<i64: 9, 32>}, {pipeline_mode = #tpu.pipeline_mode<synchronous>, transform_indices = @transform_2, window_bounds = array<i64: 1, 32>}, {pipeline_mode = #tpu.pipeline_mode<synchronous>, transform_indices = @transform_3, window_bounds = array<i64: 1, 32>}, {pipeline_mode = #tpu.pipeline_mode<synchronous>, transform_indices = @transform_4, window_bounds = array<i64: 32, 8>}, {pipeline_mode = #tpu.pipeline_mode<synchronous>, transform_indices = @transform_5, window_bounds = array<i64: 1, 8>}, {pipeline_mode = #tpu.pipeline_mode<synchronous>, transform_indices = @transform_6, window_bounds = array<i64: 8, 32>}, {pipeline_mode = #tpu.pipeline_mode<synchronous>, transform_indices = @transform_7, window_bounds = array<i64: 1, 32>}, {transform_indices = @transform_8, window_bounds = array<i64: 1, 4, 4, 32>}, {transform_indices = @transform_9, window_bounds = array<i64: 1, 1, 32>}]} {
    %cst = arith.constant 0.000000e+00 : f32
    %0 = vector.broadcast %cst : f32 to vector<1x6x32xf32>
    %c0 = arith.constant 0 : index
    %c0_0 = arith.constant 0 : index
    %c0_1 = arith.constant 0 : index
    %1 = vector.load %arg11[%c0, %c0_0, %c0_1] : memref<6x6x32xf32, #tpu.memory_space<vmem>>, vector<1x6x32xf32>
    tpu.vector_store %arg11[%c0, %c0_0, %c0_1], %0 {strides = array<i32>} : memref<6x6x32xf32, #tpu.memory_space<vmem>>, vector<1x6x32xf32>,
    %cst_2 = arith.constant 0.000000e+00 : f32
    %2 = vector.broadcast %cst_2 : f32 to vector<1x6x32xf32>
    %c5 = arith.constant 5 : index
    %c0_3 = arith.constant 0 : index
    %c0_4 = arith.constant 0 : index
    %3 = vector.load %arg11[%c5, %c0_3, %c0_4] : memref<6x6x32xf32, #tpu.memory_space<vmem>>, vector<1x6x32xf32>
    tpu.vector_store %arg11[%c5, %c0_3, %c0_4], %2 {strides = array<i32>} : memref<6x6x32xf32, #tpu.memory_space<vmem>>, vector<1x6x32xf32>,
    %cst_5 = arith.constant 0.000000e+00 : f32
    %4 = vector.broadcast %cst_5 : f32 to vector<4x1x32xf32>
    %c1 = arith.constant 1 : index
    %c0_6 = arith.constant 0 : index
    %c0_7 = arith.constant 0 : index
    %5 = vector.load %arg11[%c1, %c0_6, %c0_7] : memref<6x6x32xf32, #tpu.memory_space<vmem>>, vector<4x1x32xf32>
    tpu.vector_store %arg11[%c1, %c0_6, %c0_7], %4 {strides = array<i32>} : memref<6x6x32xf32, #tpu.memory_space<vmem>>, vector<4x1x32xf32>,
    %cst_8 = arith.constant 0.000000e+00 : f32
    %6 = vector.broadcast %cst_8 : f32 to vector<4x1x32xf32>
    %c1_9 = arith.constant 1 : index
    %c5_10 = arith.constant 5 : index
    %c0_11 = arith.constant 0 : index
    %7 = vector.load %arg11[%c1_9, %c5_10, %c0_11] : memref<6x6x32xf32, #tpu.memory_space<vmem>>, vector<4x1x32xf32>
    tpu.vector_store %arg11[%c1_9, %c5_10, %c0_11], %6 {strides = array<i32>} : memref<6x6x32xf32, #tpu.memory_space<vmem>>, vector<4x1x32xf32>,
    %c0_12 = arith.constant 0 : index
    %c0_13 = arith.constant 0 : index
    %c0_14 = arith.constant 0 : index
    %c0_15 = arith.constant 0 : index
    %8 = vector.load %arg1[%c0_12, %c0_13, %c0_14, %c0_15] : memref<1x4x4x32xf32, #tpu.memory_space<vmem>>, vector<1x4x4x32xf32>
    %9 = vector.shape_cast %8 : vector<1x4x4x32xf32> to vector<4x4x32xf32>
    %c1_16 = arith.constant 1 : index
    %c1_17 = arith.constant 1 : index
    %c0_18 = arith.constant 0 : index
    %10 = vector.load %arg11[%c1_16, %c1_17, %c0_18] : memref<6x6x32xf32, #tpu.memory_space<vmem>>, vector<4x4x32xf32>
    tpu.vector_store %arg11[%c1_16, %c1_17, %c0_18], %9 {strides = array<i32>} : memref<6x6x32xf32, #tpu.memory_space<vmem>>, vector<4x4x32xf32>,
    %c0_19 = arith.constant 0 : index
    %c0_20 = arith.constant 0 : index
    %11 = vector.load %arg2[%c0_19, %c0_20] : memref<9x32xf32, #tpu.memory_space<vmem>>, vector<9x32xf32>
    %cst_21 = arith.constant 0.000000e+00 : f32
    %12 = vector.broadcast %cst_21 : f32 to vector<4x4x32xf32>
    %c0_22 = arith.constant 0 : index
    %c0_23 = arith.constant 0 : index
    %c0_24 = arith.constant 0 : index
    %13 = vector.load %arg11[%c0_22, %c0_23, %c0_24] : memref<6x6x32xf32, #tpu.memory_space<vmem>>, vector<4x4x32xf32>
    %14 = vector.extract_strided_slice %11 {offsets = [0, 0], sizes = [1, 32], strides = [1, 1]} : vector<9x32xf32> to vector<1x32xf32>
    %15 = vector.shape_cast %14 : vector<1x32xf32> to vector<32xf32>
    %16 = vector.shape_cast %15 : vector<32xf32> to vector<1x1x32xf32>
    %17 = vector.broadcast %16 : vector<1x1x32xf32> to vector<4x4x32xf32>
    %18 = arith.mulf %13, %17 : vector<4x4x32xf32>
    %19 = arith.addf %12, %18 : vector<4x4x32xf32>
    %c0_25 = arith.constant 0 : index
    %c1_26 = arith.constant 1 : index
    %c0_27 = arith.constant 0 : index
    %20 = vector.load %arg11[%c0_25, %c1_26, %c0_27] : memref<6x6x32xf32, #tpu.memory_space<vmem>>, vector<4x4x32xf32>
    %21 = vector.extract_strided_slice %11 {offsets = [1, 0], sizes = [1, 32], strides = [1, 1]} : vector<9x32xf32> to vector<1x32xf32>
    %22 = vector.shape_cast %21 : vector<1x32xf32> to vector<32xf32>
    %23 = vector.shape_cast %22 : vector<32xf32> to vector<1x1x32xf32>
    %24 = vector.broadcast %23 : vector<1x1x32xf32> to vector<4x4x32xf32>
    %25 = arith.mulf %20, %24 : vector<4x4x32xf32>
    %26 = arith.addf %19, %25 : vector<4x4x32xf32>
    %c0_28 = arith.constant 0 : index
    %c2 = arith.constant 2 : index
    %c0_29 = arith.constant 0 : index
    %27 = vector.load %arg11[%c0_28, %c2, %c0_29] : memref<6x6x32xf32, #tpu.memory_space<vmem>>, vector<4x4x32xf32>
    %28 = vector.extract_strided_slice %11 {offsets = [2, 0], sizes = [1, 32], strides = [1, 1]} : vector<9x32xf32> to vector<1x32xf32>
    %29 = vector.shape_cast %28 : vector<1x32xf32> to vector<32xf32>
    %30 = vector.shape_cast %29 : vector<32xf32> to vector<1x1x32xf32>
    %31 = vector.broadcast %30 : vector<1x1x32xf32> to vector<4x4x32xf32>
    %32 = arith.mulf %27, %31 : vector<4x4x32xf32>
    %33 = arith.addf %26, %32 : vector<4x4x32xf32>
    %c1_30 = arith.constant 1 : index
    %c0_31 = arith.constant 0 : index
    %c0_32 = arith.constant 0 : index
    %34 = vector.load %arg11[%c1_30, %c0_31, %c0_32] : memref<6x6x32xf32, #tpu.memory_space<vmem>>, vector<4x4x32xf32>
    %35 = vector.extract_strided_slice %11 {offsets = [3, 0], sizes = [1, 32], strides = [1, 1]} : vector<9x32xf32> to vector<1x32xf32>
    %36 = vector.shape_cast %35 : vector<1x32xf32> to vector<32xf32>
    %37 = vector.shape_cast %36 : vector<32xf32> to vector<1x1x32xf32>
    %38 = vector.broadcast %37 : vector<1x1x32xf32> to vector<4x4x32xf32>
    %39 = arith.mulf %34, %38 : vector<4x4x32xf32>
    %40 = arith.addf %33, %39 : vector<4x4x32xf32>
    %c1_33 = arith.constant 1 : index
    %c1_34 = arith.constant 1 : index
    %c0_35 = arith.constant 0 : index
    %41 = vector.load %arg11[%c1_33, %c1_34, %c0_35] : memref<6x6x32xf32, #tpu.memory_space<vmem>>, vector<4x4x32xf32>
    %42 = vector.extract_strided_slice %11 {offsets = [4, 0], sizes = [1, 32], strides = [1, 1]} : vector<9x32xf32> to vector<1x32xf32>
    %43 = vector.shape_cast %42 : vector<1x32xf32> to vector<32xf32>
    %44 = vector.shape_cast %43 : vector<32xf32> to vector<1x1x32xf32>
    %45 = vector.broadcast %44 : vector<1x1x32xf32> to vector<4x4x32xf32>
    %46 = arith.mulf %41, %45 : vector<4x4x32xf32>
    %47 = arith.addf %40, %46 : vector<4x4x32xf32>
    %c1_36 = arith.constant 1 : index
    %c2_37 = arith.constant 2 : index
    %c0_38 = arith.constant 0 : index
    %48 = vector.load %arg11[%c1_36, %c2_37, %c0_38] : memref<6x6x32xf32, #tpu.memory_space<vmem>>, vector<4x4x32xf32>
    %49 = vector.extract_strided_slice %11 {offsets = [5, 0], sizes = [1, 32], strides = [1, 1]} : vector<9x32xf32> to vector<1x32xf32>
    %50 = vector.shape_cast %49 : vector<1x32xf32> to vector<32xf32>
    %51 = vector.shape_cast %50 : vector<32xf32> to vector<1x1x32xf32>
    %52 = vector.broadcast %51 : vector<1x1x32xf32> to vector<4x4x32xf32>
    %53 = arith.mulf %48, %52 : vector<4x4x32xf32>
    %54 = arith.addf %47, %53 : vector<4x4x32xf32>
    %c2_39 = arith.constant 2 : index
    %c0_40 = arith.constant 0 : index
    %c0_41 = arith.constant 0 : index
    %55 = vector.load %arg11[%c2_39, %c0_40, %c0_41] : memref<6x6x32xf32, #tpu.memory_space<vmem>>, vector<4x4x32xf32>
    %56 = vector.extract_strided_slice %11 {offsets = [6, 0], sizes = [1, 32], strides = [1, 1]} : vector<9x32xf32> to vector<1x32xf32>
    %57 = vector.shape_cast %56 : vector<1x32xf32> to vector<32xf32>
    %58 = vector.shape_cast %57 : vector<32xf32> to vector<1x1x32xf32>
    %59 = vector.broadcast %58 : vector<1x1x32xf32> to vector<4x4x32xf32>
    %60 = arith.mulf %55, %59 : vector<4x4x32xf32>
    %61 = arith.addf %54, %60 : vector<4x4x32xf32>
    %c2_42 = arith.constant 2 : index
    %c1_43 = arith.constant 1 : index
    %c0_44 = arith.constant 0 : index
    %62 = vector.load %arg11[%c2_42, %c1_43, %c0_44] : memref<6x6x32xf32, #tpu.memory_space<vmem>>, vector<4x4x32xf32>
    %63 = vector.extract_strided_slice %11 {offsets = [7, 0], sizes = [1, 32], strides = [1, 1]} : vector<9x32xf32> to vector<1x32xf32>
    %64 = vector.shape_cast %63 : vector<1x32xf32> to vector<32xf32>
    %65 = vector.shape_cast %64 : vector<32xf32> to vector<1x1x32xf32>
    %66 = vector.broadcast %65 : vector<1x1x32xf32> to vector<4x4x32xf32>
    %67 = arith.mulf %62, %66 : vector<4x4x32xf32>
    %68 = arith.addf %61, %67 : vector<4x4x32xf32>
    %c2_45 = arith.constant 2 : index
    %c2_46 = arith.constant 2 : index
    %c0_47 = arith.constant 0 : index
    %69 = vector.load %arg11[%c2_45, %c2_46, %c0_47] : memref<6x6x32xf32, #tpu.memory_space<vmem>>, vector<4x4x32xf32>
    %70 = vector.extract_strided_slice %11 {offsets = [8, 0], sizes = [1, 32], strides = [1, 1]} : vector<9x32xf32> to vector<1x32xf32>
    %71 = vector.shape_cast %70 : vector<1x32xf32> to vector<32xf32>
    %72 = vector.shape_cast %71 : vector<32xf32> to vector<1x1x32xf32>
    %73 = vector.broadcast %72 : vector<1x1x32xf32> to vector<4x4x32xf32>
    %74 = arith.mulf %69, %73 : vector<4x4x32xf32>
    %75 = arith.addf %68, %74 : vector<4x4x32xf32>
    %c0_48 = arith.constant 0 : index
    %c0_49 = arith.constant 0 : index
    %76 = vector.load %arg3[%c0_48, %c0_49] : memref<1x32xf32, #tpu.memory_space<vmem>>, vector<1x32xf32>
    %77 = vector.shape_cast %76 : vector<1x32xf32> to vector<1x1x32xf32>
    %c0_50 = arith.constant 0 : index
    %c0_51 = arith.constant 0 : index
    %78 = vector.load %arg4[%c0_50, %c0_51] : memref<1x32xf32, #tpu.memory_space<vmem>>, vector<1x32xf32>
    %79 = vector.shape_cast %78 : vector<1x32xf32> to vector<1x1x32xf32>
    %cst_52 = arith.constant dense<0.000000e+00> : vector<4x4xf32>
    %80 = vector.multi_reduction <add>, %75, %cst_52 [2] : vector<4x4x32xf32> to vector<4x4xf32>
    %81 = vector.shape_cast %80 : vector<4x4xf32> to vector<4x4x1xf32>
    %cst_53 = arith.constant 3.200000e+01 : f32
    %82 = vector.broadcast %cst_53 : f32 to vector<4x4x1xf32>
    %83 = arith.divf %81, %82 : vector<4x4x1xf32>
    %84 = vector.broadcast %83 : vector<4x4x1xf32> to vector<4x4x32xf32>
    %85 = arith.subf %75, %84 : vector<4x4x32xf32>
    %86 = arith.mulf %85, %85 : vector<4x4x32xf32>
    %cst_54 = arith.constant dense<0.000000e+00> : vector<4x4xf32>
    %87 = vector.multi_reduction <add>, %86, %cst_54 [2] : vector<4x4x32xf32> to vector<4x4xf32>
    %88 = vector.shape_cast %87 : vector<4x4xf32> to vector<4x4x1xf32>
    %cst_55 = arith.constant 3.200000e+01 : f32
    %89 = vector.broadcast %cst_55 : f32 to vector<4x4x1xf32>
    %90 = arith.divf %88, %89 : vector<4x4x1xf32>
    %91 = vector.broadcast %83 : vector<4x4x1xf32> to vector<4x4x32xf32>
    %92 = arith.subf %75, %91 : vector<4x4x32xf32>
    %cst_56 = arith.constant 9.99999974E-6 : f32
    %93 = vector.broadcast %cst_56 : f32 to vector<4x4x1xf32>
    %94 = arith.addf %90, %93 : vector<4x4x1xf32>
    %95 = math.rsqrt %94 : vector<4x4x1xf32>
    %96 = vector.broadcast %95 : vector<4x4x1xf32> to vector<4x4x32xf32>
    %97 = arith.mulf %92, %96 : vector<4x4x32xf32>
    %98 = vector.broadcast %77 : vector<1x1x32xf32> to vector<4x4x32xf32>
    %99 = arith.mulf %97, %98 : vector<4x4x32xf32>
    %100 = vector.broadcast %79 : vector<1x1x32xf32> to vector<4x4x32xf32>
    %101 = arith.addf %99, %100 : vector<4x4x32xf32>
    %cst_57 = arith.constant 3.000000e+00 : f32
    %102 = vector.broadcast %cst_57 : f32 to vector<4x4x32xf32>
    %103 = arith.addf %101, %102 : vector<4x4x32xf32>
    %cst_58 = arith.constant 0.000000e+00 : f32
    %cst_59 = arith.constant 6.000000e+00 : f32
    %104 = vector.broadcast %cst_58 : f32 to vector<4x4x32xf32>
    %105 = arith.maximumf %104, %103 : vector<4x4x32xf32>
    %106 = vector.broadcast %cst_59 : f32 to vector<4x4x32xf32>
    %107 = arith.minimumf %106, %105 : vector<4x4x32xf32>
    %108 = arith.mulf %101, %107 : vector<4x4x32xf32>
    %cst_60 = arith.constant 0.166666672 : f32
    %109 = vector.broadcast %cst_60 : f32 to vector<4x4x32xf32>
    %110 = arith.mulf %108, %109 : vector<4x4x32xf32>
    %cst_61 = arith.constant dense<0.000000e+00> : vector<4x32xf32>
    %111 = vector.multi_reduction <add>, %110, %cst_61 [0] : vector<4x4x32xf32> to vector<4x32xf32>
    %cst_62 = arith.constant dense<0.000000e+00> : vector<32xf32>
    %112 = vector.multi_reduction <add>, %111, %cst_62 [0] : vector<4x32xf32> to vector<32xf32>
    %113 = vector.shape_cast %112 : vector<32xf32> to vector<1x32xf32>
    %cst_63 = arith.constant 6.250000e-02 : f32
    %114 = vector.broadcast %cst_63 : f32 to vector<1x32xf32>
    %115 = arith.mulf %113, %114 : vector<1x32xf32>
    %c0_64 = arith.constant 0 : index
    %c0_65 = arith.constant 0 : index
    %116 = vector.load %arg5[%c0_64, %c0_65] : memref<32x8xbf16, #tpu.memory_space<vmem>>, vector<32x8xbf16>
    %117 = arith.truncf %115 : vector<1x32xf32> to vector<1x32xbf16>
    %cst_66 = arith.constant dense<0.000000e+00> : vector<1x8xf32>
    %118 = tpu.matmul %117, %116, %cst_66 {dimension_numbers = #tpu.dot_dimension_numbers<[1], [0], [0], [1], [0, 0, 1, 1], [], []>} : vector<1x32xbf16>, vector<32x8xbf16>, vector<1x8xf32> -> vector<1x8xf32>
    %c0_67 = arith.constant 0 : index
    %c0_68 = arith.constant 0 : index
    %119 = vector.load %arg6[%c0_67, %c0_68] : memref<1x8xf32, #tpu.memory_space<vmem>>, vector<1x8xf32>
    %120 = arith.addf %118, %119 : vector<1x8xf32>
    %cst_69 = arith.constant 0.000000e+00 : f32
    %121 = vector.broadcast %cst_69 : f32 to vector<1x8xf32>
    %122 = arith.maximumf %120, %121 : vector<1x8xf32>
    %c0_70 = arith.constant 0 : index
    %c0_71 = arith.constant 0 : index
    %123 = vector.load %arg7[%c0_70, %c0_71] : memref<8x32xbf16, #tpu.memory_space<vmem>>, vector<8x32xbf16>
    %124 = arith.truncf %122 : vector<1x8xf32> to vector<1x8xbf16>
    %cst_72 = arith.constant dense<0.000000e+00> : vector<1x32xf32>
    %125 = tpu.matmul %124, %123, %cst_72 {dimension_numbers = #tpu.dot_dimension_numbers<[1], [0], [0], [1], [0, 0, 1, 1], [], []>} : vector<1x8xbf16>, vector<8x32xbf16>, vector<1x32xf32> -> vector<1x32xf32>
    %c0_73 = arith.constant 0 : index
    %c0_74 = arith.constant 0 : index
    %126 = vector.load %arg8[%c0_73, %c0_74] : memref<1x32xf32, #tpu.memory_space<vmem>>, vector<1x32xf32>
    %127 = arith.addf %125, %126 : vector<1x32xf32>
    %cst_75 = arith.constant 3.000000e+00 : f32
    %128 = vector.broadcast %cst_75 : f32 to vector<1x32xf32>
    %129 = arith.addf %127, %128 : vector<1x32xf32>
    %cst_76 = arith.constant 0.000000e+00 : f32
    %cst_77 = arith.constant 6.000000e+00 : f32
    %130 = vector.broadcast %cst_76 : f32 to vector<1x32xf32>
    %131 = arith.maximumf %130, %129 : vector<1x32xf32>
    %132 = vector.broadcast %cst_77 : f32 to vector<1x32xf32>
    %133 = arith.minimumf %132, %131 : vector<1x32xf32>
    %cst_78 = arith.constant 0.166666672 : f32
    %134 = vector.broadcast %cst_78 : f32 to vector<1x32xf32>
    %135 = arith.mulf %133, %134 : vector<1x32xf32>
    %c0_79 = arith.constant 0 : index
    %c0_80 = arith.constant 0 : index
    %c0_81 = arith.constant 0 : index
    %136 = vector.load %arg10[%c0_79, %c0_80, %c0_81] : memref<1x1x32xf32, #tpu.memory_space<vmem>>, vector<1x1x32xf32>
    %137 = vector.shape_cast %136 : vector<1x1x32xf32> to vector<1x32xf32>
    %138 = vector.shape_cast %135 : vector<1x32xf32> to vector<1x1x32xf32>
    tpu.vector_store %arg10[%c0_79, %c0_80, %c0_81], %138 {strides = array<i32>} : memref<1x1x32xf32, #tpu.memory_space<vmem>>, vector<1x1x32xf32>,
    %c0_82 = arith.constant 0 : index
    %c0_83 = arith.constant 0 : index
    %c0_84 = arith.constant 0 : index
    %c0_85 = arith.constant 0 : index
    %139 = vector.load %arg9[%c0_82, %c0_83, %c0_84, %c0_85] : memref<1x4x4x32xf32, #tpu.memory_space<vmem>>, vector<1x4x4x32xf32>
    %140 = vector.shape_cast %139 : vector<1x4x4x32xf32> to vector<4x4x32xf32>
    %141 = vector.shape_cast %110 : vector<4x4x32xf32> to vector<1x4x4x32xf32>
    tpu.vector_store %arg9[%c0_82, %c0_83, %c0_84, %c0_85], %141 {strides = array<i32>} : memref<1x4x4x32xf32, #tpu.memory_space<vmem>>, vector<1x4x4x32xf32>,
    return
  }
  func.func @transform_0(%arg0: i32) -> (i32, i32, i32, i32) {
    %c0_i32 = arith.constant 0 : i32
    %c0_i32_0 = arith.constant 0 : i32
    %c0_i32_1 = arith.constant 0 : i32
    %c0_i32_2 = arith.constant 0 : i32
    return %arg0, %c0_i32, %c0_i32_0, %c0_i32_1 : i32, i32, i32, i32
  }
  func.func @transform_1(%arg0: i32) -> (i32, i32) {
    %c0_i32 = arith.constant 0 : i32
    %c0_i32_0 = arith.constant 0 : i32
    %c0_i32_1 = arith.constant 0 : i32
    return %c0_i32, %c0_i32_0 : i32, i32
  }
  func.func @transform_2(%arg0: i32) -> (i32, i32) {
    %c0_i32 = arith.constant 0 : i32
    %c0_i32_0 = arith.constant 0 : i32
    %c0_i32_1 = arith.constant 0 : i32
    return %c0_i32, %c0_i32_0 : i32, i32
  }
  func.func @transform_3(%arg0: i32) -> (i32, i32) {
    %c0_i32 = arith.constant 0 : i32
    %c0_i32_0 = arith.constant 0 : i32
    %c0_i32_1 = arith.constant 0 : i32
    return %c0_i32, %c0_i32_0 : i32, i32
  }
  func.func @transform_4(%arg0: i32) -> (i32, i32) {
    %c0_i32 = arith.constant 0 : i32
    %c0_i32_0 = arith.constant 0 : i32
    %c0_i32_1 = arith.constant 0 : i32
    return %c0_i32, %c0_i32_0 : i32, i32
  }
  func.func @transform_5(%arg0: i32) -> (i32, i32) {
    %c0_i32 = arith.constant 0 : i32
    %c0_i32_0 = arith.constant 0 : i32
    %c0_i32_1 = arith.constant 0 : i32
    return %c0_i32, %c0_i32_0 : i32, i32
  }
  func.func @transform_6(%arg0: i32) -> (i32, i32) {
    %c0_i32 = arith.constant 0 : i32
    %c0_i32_0 = arith.constant 0 : i32
    %c0_i32_1 = arith.constant 0 : i32
    return %c0_i32, %c0_i32_0 : i32, i32
  }
  func.func @transform_7(%arg0: i32) -> (i32, i32) {
    %c0_i32 = arith.constant 0 : i32
    %c0_i32_0 = arith.constant 0 : i32
    %c0_i32_1 = arith.constant 0 : i32
    return %c0_i32, %c0_i32_0 : i32, i32
  }
  func.func @transform_8(%arg0: i32) -> (i32, i32, i32, i32) {
    %c0_i32 = arith.constant 0 : i32
    %c0_i32_0 = arith.constant 0 : i32
    %c0_i32_1 = arith.constant 0 : i32
    %c0_i32_2 = arith.constant 0 : i32
    return %arg0, %c0_i32, %c0_i32_0, %c0_i32_1 : i32, i32, i32, i32
  }
  func.func @transform_9(%arg0: i32) -> (i32, i32, i32) {
    %c0_i32 = arith.constant 0 : i32
    %c0_i32_0 = arith.constant 0 : i32
    %c0_i32_1 = arith.constant 0 : i32
    return %arg0, %c0_i32, %c0_i32_0 : i32, i32, i32
  }
}

module attributes {stable_mosaic.version = 11 : i64} {
  func.func @kernel(%arg0: i32, %arg1: memref<1x4x4x32xf32, #tpu.memory_space<vmem>>, %arg2: memref<9x32xf32, #tpu.memory_space<vmem>>, %arg3: memref<1x32xf32, #tpu.memory_space<vmem>>, %arg4: memref<1x32xf32, #tpu.memory_space<vmem>>, %arg5: memref<32x8xbf16, #tpu.memory_space<vmem>>, %arg6: memref<1x8xf32, #tpu.memory_space<vmem>>, %arg7: memref<8x32xbf16, #tpu.memory_space<vmem>>, %arg8: memref<1x32xf32, #tpu.memory_space<vmem>>, %arg9: memref<1x4x4x32xf32, #tpu.memory_space<vmem>>, %arg10: memref<1x1x32xf32, #tpu.memory_space<vmem>>, %arg11: memref<6x6x32xf32, #tpu.memory_space<vmem>>) attributes {dimension_semantics = [#tpu.dimension_semantics<parallel>], iteration_bounds = array<i64: 2>, scalar_prefetch = 0 : i64, scratch_operands = 1 : i64, tpu.core_type = #tpu.core_type<tc>, window_params = [{transform_indices = @transform_0, window_bounds = array<i64: 1, 4, 4, 32>}, {pipeline_mode = #tpu.pipeline_mode<synchronous>, transform_indices = @transform_1, window_bounds = array<i64: 9, 32>}, {pipeline_mode = #tpu.pipeline_mode<synchronous>, transform_indices = @transform_2, window_bounds = array<i64: 1, 32>}, {pipeline_mode = #tpu.pipeline_mode<synchronous>, transform_indices = @transform_3, window_bounds = array<i64: 1, 32>}, {pipeline_mode = #tpu.pipeline_mode<synchronous>, transform_indices = @transform_4, window_bounds = array<i64: 32, 8>}, {pipeline_mode = #tpu.pipeline_mode<synchronous>, transform_indices = @transform_5, window_bounds = array<i64: 1, 8>}, {pipeline_mode = #tpu.pipeline_mode<synchronous>, transform_indices = @transform_6, window_bounds = array<i64: 8, 32>}, {pipeline_mode = #tpu.pipeline_mode<synchronous>, transform_indices = @transform_7, window_bounds = array<i64: 1, 32>}, {transform_indices = @transform_8, window_bounds = array<i64: 1, 4, 4, 32>}, {transform_indices = @transform_9, window_bounds = array<i64: 1, 1, 32>}]} {
    %cst = arith.constant 0.000000e+00 : f32
    %0 = vector.broadcast %cst : f32 to vector<1x6x32xf32>
    %c0 = arith.constant 0 : index
    %c0_0 = arith.constant 0 : index
    %c0_1 = arith.constant 0 : index
    %1 = vector.load %arg11[%c0, %c0_0, %c0_1] : memref<6x6x32xf32, #tpu.memory_space<vmem>>, vector<1x6x32xf32>
    tpu.vector_store %arg11[%c0, %c0_0, %c0_1], %0 {strides = array<i32>} : memref<6x6x32xf32, #tpu.memory_space<vmem>>, vector<1x6x32xf32>,
    %cst_2 = arith.constant 0.000000e+00 : f32
    %2 = vector.broadcast %cst_2 : f32 to vector<1x6x32xf32>
    %c5 = arith.constant 5 : index
    %c0_3 = arith.constant 0 : index
    %c0_4 = arith.constant 0 : index
    %3 = vector.load %arg11[%c5, %c0_3, %c0_4] : memref<6x6x32xf32, #tpu.memory_space<vmem>>, vector<1x6x32xf32>
    tpu.vector_store %arg11[%c5, %c0_3, %c0_4], %2 {strides = array<i32>} : memref<6x6x32xf32, #tpu.memory_space<vmem>>, vector<1x6x32xf32>,
    %cst_5 = arith.constant 0.000000e+00 : f32
    %4 = vector.broadcast %cst_5 : f32 to vector<4x1x32xf32>
    %c1 = arith.constant 1 : index
    %c0_6 = arith.constant 0 : index
    %c0_7 = arith.constant 0 : index
    %5 = vector.load %arg11[%c1, %c0_6, %c0_7] : memref<6x6x32xf32, #tpu.memory_space<vmem>>, vector<4x1x32xf32>
    tpu.vector_store %arg11[%c1, %c0_6, %c0_7], %4 {strides = array<i32>} : memref<6x6x32xf32, #tpu.memory_space<vmem>>, vector<4x1x32xf32>,
    %cst_8 = arith.constant 0.000000e+00 : f32
    %6 = vector.broadcast %cst_8 : f32 to vector<4x1x32xf32>
    %c1_9 = arith.constant 1 : index
    %c5_10 = arith.constant 5 : index
    %c0_11 = arith.constant 0 : index
    %7 = vector.load %arg11[%c1_9, %c5_10, %c0_11] : memref<6x6x32xf32, #tpu.memory_space<vmem>>, vector<4x1x32xf32>
    tpu.vector_store %arg11[%c1_9, %c5_10, %c0_11], %6 {strides = array<i32>} : memref<6x6x32xf32, #tpu.memory_space<vmem>>, vector<4x1x32xf32>,
    %c0_12 = arith.constant 0 : index
    %c0_13 = arith.constant 0 : index
    %c0_14 = arith.constant 0 : index
    %c0_15 = arith.constant 0 : index
    %8 = vector.load %arg1[%c0_12, %c0_13, %c0_14, %c0_15] : memref<1x4x4x32xf32, #tpu.memory_space<vmem>>, vector<1x4x4x32xf32>
    %9 = vector.shape_cast %8 : vector<1x4x4x32xf32> to vector<4x4x32xf32>
    %c1_16 = arith.constant 1 : index
    %c1_17 = arith.constant 1 : index
    %c0_18 = arith.constant 0 : index
    %10 = vector.load %arg11[%c1_16, %c1_17, %c0_18] : memref<6x6x32xf32, #tpu.memory_space<vmem>>, vector<4x4x32xf32>
    tpu.vector_store %arg11[%c1_16, %c1_17, %c0_18], %9 {strides = array<i32>} : memref<6x6x32xf32, #tpu.memory_space<vmem>>, vector<4x4x32xf32>,
    %c0_19 = arith.constant 0 : index
    %c0_20 = arith.constant 0 : index
    %11 = vector.load %arg2[%c0_19, %c0_20] : memref<9x32xf32, #tpu.memory_space<vmem>>, vector<9x32xf32>
    %cst_21 = arith.constant 0.000000e+00 : f32
    %12 = vector.broadcast %cst_21 : f32 to vector<4x4x32xf32>
    %c0_22 = arith.constant 0 : index
    %c0_23 = arith.constant 0 : index
    %c0_24 = arith.constant 0 : index
    %13 = vector.load %arg11[%c0_22, %c0_23, %c0_24] : memref<6x6x32xf32, #tpu.memory_space<vmem>>, vector<4x4x32xf32>
    %14 = vector.extract_strided_slice %11 {offsets = [0, 0], sizes = [1, 32], strides = [1, 1]} : vector<9x32xf32> to vector<1x32xf32>
    %15 = vector.shape_cast %14 : vector<1x32xf32> to vector<32xf32>
    %16 = vector.shape_cast %15 : vector<32xf32> to vector<1x1x32xf32>
    %17 = vector.broadcast %16 : vector<1x1x32xf32> to vector<4x4x32xf32>
    %18 = arith.mulf %13, %17 : vector<4x4x32xf32>
    %19 = arith.addf %12, %18 : vector<4x4x32xf32>
    %c0_25 = arith.constant 0 : index
    %c1_26 = arith.constant 1 : index
    %c0_27 = arith.constant 0 : index
    %20 = vector.load %arg11[%c0_25, %c1_26, %c0_27] : memref<6x6x32xf32, #tpu.memory_space<vmem>>, vector<4x4x32xf32>
    %21 = vector.extract_strided_slice %11 {offsets = [1, 0], sizes = [1, 32], strides = [1, 1]} : vector<9x32xf32> to vector<1x32xf32>
    %22 = vector.shape_cast %21 : vector<1x32xf32> to vector<32xf32>
    %23 = vector.shape_cast %22 : vector<32xf32> to vector<1x1x32xf32>
    %24 = vector.broadcast %23 : vector<1x1x32xf32> to vector<4x4x32xf32>
    %25 = arith.mulf %20, %24 : vector<4x4x32xf32>
    %26 = arith.addf %19, %25 : vector<4x4x32xf32>
    %c0_28 = arith.constant 0 : index
    %c2 = arith.constant 2 : index
    %c0_29 = arith.constant 0 : index
    %27 = vector.load %arg11[%c0_28, %c2, %c0_29] : memref<6x6x32xf32, #tpu.memory_space<vmem>>, vector<4x4x32xf32>
    %28 = vector.extract_strided_slice %11 {offsets = [2, 0], sizes = [1, 32], strides = [1, 1]} : vector<9x32xf32> to vector<1x32xf32>
    %29 = vector.shape_cast %28 : vector<1x32xf32> to vector<32xf32>
    %30 = vector.shape_cast %29 : vector<32xf32> to vector<1x1x32xf32>
    %31 = vector.broadcast %30 : vector<1x1x32xf32> to vector<4x4x32xf32>
    %32 = arith.mulf %27, %31 : vector<4x4x32xf32>
    %33 = arith.addf %26, %32 : vector<4x4x32xf32>
    %c1_30 = arith.constant 1 : index
    %c0_31 = arith.constant 0 : index
    %c0_32 = arith.constant 0 : index
    %34 = vector.load %arg11[%c1_30, %c0_31, %c0_32] : memref<6x6x32xf32, #tpu.memory_space<vmem>>, vector<4x4x32xf32>
    %35 = vector.extract_strided_slice %11 {offsets = [3, 0], sizes = [1, 32], strides = [1, 1]} : vector<9x32xf32> to vector<1x32xf32>
    %36 = vector.shape_cast %35 : vector<1x32xf32> to vector<32xf32>
    %37 = vector.shape_cast %36 : vector<32xf32> to vector<1x1x32xf32>
    %38 = vector.broadcast %37 : vector<1x1x32xf32> to vector<4x4x32xf32>
    %39 = arith.mulf %34, %38 : vector<4x4x32xf32>
    %40 = arith.addf %33, %39 : vector<4x4x32xf32>
    %c1_33 = arith.constant 1 : index
    %c1_34 = arith.constant 1 : index
    %c0_35 = arith.constant 0 : index
    %41 = vector.load %arg11[%c1_33, %c1_34, %c0_35] : memref<6x6x32xf32, #tpu.memory_space<vmem>>, vector<4x4x32xf32>
    %42 = vector.extract_strided_slice %11 {offsets = [4, 0], sizes = [1, 32], strides = [1, 1]} : vector<9x32xf32> to vector<1x32xf32>
    %43 = vector.shape_cast %42 : vector<1x32xf32> to vector<32xf32>
    %44 = vector.shape_cast %43 : vector<32xf32> to vector<1x1x32xf32>
    %45 = vector.broadcast %44 : vector<1x1x32xf32> to vector<4x4x32xf32>
    %46 = arith.mulf %41, %45 : vector<4x4x32xf32>
    %47 = arith.addf %40, %46 : vector<4x4x32xf32>
    %c1_36 = arith.constant 1 : index
    %c2_37 = arith.constant 2 : index
    %c0_38 = arith.constant 0 : index
    %48 = vector.load %arg11[%c1_36, %c2_37, %c0_38] : memref<6x6x32xf32, #tpu.memory_space<vmem>>, vector<4x4x32xf32>
    %49 = vector.extract_strided_slice %11 {offsets = [5, 0], sizes = [1, 32], strides = [1, 1]} : vector<9x32xf32> to vector<1x32xf32>
    %50 = vector.shape_cast %49 : vector<1x32xf32> to vector<32xf32>
    %51 = vector.shape_cast %50 : vector<32xf32> to vector<1x1x32xf32>
    %52 = vector.broadcast %51 : vector<1x1x32xf32> to vector<4x4x32xf32>
    %53 = arith.mulf %48, %52 : vector<4x4x32xf32>
    %54 = arith.addf %47, %53 : vector<4x4x32xf32>
    %c2_39 = arith.constant 2 : index
    %c0_40 = arith.constant 0 : index
    %c0_41 = arith.constant 0 : index
    %55 = vector.load %arg11[%c2_39, %c0_40, %c0_41] : memref<6x6x32xf32, #tpu.memory_space<vmem>>, vector<4x4x32xf32>
    %56 = vector.extract_strided_slice %11 {offsets = [6, 0], sizes = [1, 32], strides = [1, 1]} : vector<9x32xf32> to vector<1x32xf32>
    %57 = vector.shape_cast %56 : vector<1x32xf32> to vector<32xf32>
    %58 = vector.shape_cast %57 : vector<32xf32> to vector<1x1x32xf32>
    %59 = vector.broadcast %58 : vector<1x1x32xf32> to vector<4x4x32xf32>
    %60 = arith.mulf %55, %59 : vector<4x4x32xf32>
    %61 = arith.addf %54, %60 : vector<4x4x32xf32>
    %c2_42 = arith.constant 2 : index
    %c1_43 = arith.constant 1 : index
    %c0_44 = arith.constant 0 : index
    %62 = vector.load %arg11[%c2_42, %c1_43, %c0_44] : memref<6x6x32xf32, #tpu.memory_space<vmem>>, vector<4x4x32xf32>
    %63 = vector.extract_strided_slice %11 {offsets = [7, 0], sizes = [1, 32], strides = [1, 1]} : vector<9x32xf32> to vector<1x32xf32>
    %64 = vector.shape_cast %63 : vector<1x32xf32> to vector<32xf32>
    %65 = vector.shape_cast %64 : vector<32xf32> to vector<1x1x32xf32>
    %66 = vector.broadcast %65 : vector<1x1x32xf32> to vector<4x4x32xf32>
    %67 = arith.mulf %62, %66 : vector<4x4x32xf32>
    %68 = arith.addf %61, %67 : vector<4x4x32xf32>
    %c2_45 = arith.constant 2 : index
    %c2_46 = arith.constant 2 : index
    %c0_47 = arith.constant 0 : index
    %69 = vector.load %arg11[%c2_45, %c2_46, %c0_47] : memref<6x6x32xf32, #tpu.memory_space<vmem>>, vector<4x4x32xf32>
    %70 = vector.extract_strided_slice %11 {offsets = [8, 0], sizes = [1, 32], strides = [1, 1]} : vector<9x32xf32> to vector<1x32xf32>
    %71 = vector.shape_cast %70 : vector<1x32xf32> to vector<32xf32>
    %72 = vector.shape_cast %71 : vector<32xf32> to vector<1x1x32xf32>
    %73 = vector.broadcast %72 : vector<1x1x32xf32> to vector<4x4x32xf32>
    %74 = arith.mulf %69, %73 : vector<4x4x32xf32>
    %75 = arith.addf %68, %74 : vector<4x4x32xf32>
    %c0_48 = arith.constant 0 : index
    %c0_49 = arith.constant 0 : index
    %76 = vector.load %arg3[%c0_48, %c0_49] : memref<1x32xf32, #tpu.memory_space<vmem>>, vector<1x32xf32>
    %77 = vector.shape_cast %76 : vector<1x32xf32> to vector<1x1x32xf32>
    %c0_50 = arith.constant 0 : index
    %c0_51 = arith.constant 0 : index
    %78 = vector.load %arg4[%c0_50, %c0_51] : memref<1x32xf32, #tpu.memory_space<vmem>>, vector<1x32xf32>
    %79 = vector.shape_cast %78 : vector<1x32xf32> to vector<1x1x32xf32>
    %cst_52 = arith.constant dense<0.000000e+00> : vector<4x4xf32>
    %80 = vector.multi_reduction <add>, %75, %cst_52 [2] : vector<4x4x32xf32> to vector<4x4xf32>
    %81 = vector.shape_cast %80 : vector<4x4xf32> to vector<4x4x1xf32>
    %cst_53 = arith.constant 3.200000e+01 : f32
    %82 = vector.broadcast %cst_53 : f32 to vector<4x4x1xf32>
    %83 = arith.divf %81, %82 : vector<4x4x1xf32>
    %84 = vector.broadcast %83 : vector<4x4x1xf32> to vector<4x4x32xf32>
    %85 = arith.subf %75, %84 : vector<4x4x32xf32>
    %86 = arith.mulf %85, %85 : vector<4x4x32xf32>
    %cst_54 = arith.constant dense<0.000000e+00> : vector<4x4xf32>
    %87 = vector.multi_reduction <add>, %86, %cst_54 [2] : vector<4x4x32xf32> to vector<4x4xf32>
    %88 = vector.shape_cast %87 : vector<4x4xf32> to vector<4x4x1xf32>
    %cst_55 = arith.constant 3.200000e+01 : f32
    %89 = vector.broadcast %cst_55 : f32 to vector<4x4x1xf32>
    %90 = arith.divf %88, %89 : vector<4x4x1xf32>
    %91 = vector.broadcast %83 : vector<4x4x1xf32> to vector<4x4x32xf32>
    %92 = arith.subf %75, %91 : vector<4x4x32xf32>
    %cst_56 = arith.constant 9.99999974E-6 : f32
    %93 = vector.broadcast %cst_56 : f32 to vector<4x4x1xf32>
    %94 = arith.addf %90, %93 : vector<4x4x1xf32>
    %95 = math.rsqrt %94 : vector<4x4x1xf32>
    %96 = vector.broadcast %95 : vector<4x4x1xf32> to vector<4x4x32xf32>
    %97 = arith.mulf %92, %96 : vector<4x4x32xf32>
    %98 = vector.broadcast %77 : vector<1x1x32xf32> to vector<4x4x32xf32>
    %99 = arith.mulf %97, %98 : vector<4x4x32xf32>
    %100 = vector.broadcast %79 : vector<1x1x32xf32> to vector<4x4x32xf32>
    %101 = arith.addf %99, %100 : vector<4x4x32xf32>
    %cst_57 = arith.constant 3.000000e+00 : f32
    %102 = vector.broadcast %cst_57 : f32 to vector<4x4x32xf32>
    %103 = arith.addf %101, %102 : vector<4x4x32xf32>
    %cst_58 = arith.constant 0.000000e+00 : f32
    %cst_59 = arith.constant 6.000000e+00 : f32
    %104 = vector.broadcast %cst_58 : f32 to vector<4x4x32xf32>
    %105 = arith.maximumf %104, %103 : vector<4x4x32xf32>
    %106 = vector.broadcast %cst_59 : f32 to vector<4x4x32xf32>
    %107 = arith.minimumf %106, %105 : vector<4x4x32xf32>
    %108 = arith.mulf %101, %107 : vector<4x4x32xf32>
    %cst_60 = arith.constant 0.166666672 : f32
    %109 = vector.broadcast %cst_60 : f32 to vector<4x4x32xf32>
    %110 = arith.mulf %108, %109 : vector<4x4x32xf32>
    %cst_61 = arith.constant dense<0.000000e+00> : vector<4x32xf32>
    %111 = vector.multi_reduction <add>, %110, %cst_61 [0] : vector<4x4x32xf32> to vector<4x32xf32>
    %cst_62 = arith.constant dense<0.000000e+00> : vector<32xf32>
    %112 = vector.multi_reduction <add>, %111, %cst_62 [0] : vector<4x32xf32> to vector<32xf32>
    %113 = vector.shape_cast %112 : vector<32xf32> to vector<1x32xf32>
    %cst_63 = arith.constant 6.250000e-02 : f32
    %114 = vector.broadcast %cst_63 : f32 to vector<1x32xf32>
    %115 = arith.mulf %113, %114 : vector<1x32xf32>
    %c0_64 = arith.constant 0 : index
    %c0_65 = arith.constant 0 : index
    %116 = vector.load %arg5[%c0_64, %c0_65] : memref<32x8xbf16, #tpu.memory_space<vmem>>, vector<32x8xbf16>
    %117 = arith.truncf %115 : vector<1x32xf32> to vector<1x32xbf16>
    %cst_66 = arith.constant dense<0.000000e+00> : vector<1x8xf32>
    %118 = tpu.matmul %117, %116, %cst_66 {dimension_numbers = #tpu.dot_dimension_numbers<[1], [0], [0], [1], [0, 0, 1, 1], [], []>} : vector<1x32xbf16>, vector<32x8xbf16>, vector<1x8xf32> -> vector<1x8xf32>
    %c0_67 = arith.constant 0 : index
    %c0_68 = arith.constant 0 : index
    %119 = vector.load %arg6[%c0_67, %c0_68] : memref<1x8xf32, #tpu.memory_space<vmem>>, vector<1x8xf32>
    %120 = arith.addf %118, %119 : vector<1x8xf32>
    %cst_69 = arith.constant 0.000000e+00 : f32
    %121 = vector.broadcast %cst_69 : f32 to vector<1x8xf32>
    %122 = arith.maximumf %120, %121 : vector<1x8xf32>
    %c0_70 = arith.constant 0 : index
    %c0_71 = arith.constant 0 : index
    %123 = vector.load %arg7[%c0_70, %c0_71] : memref<8x32xbf16, #tpu.memory_space<vmem>>, vector<8x32xbf16>
    %124 = arith.truncf %122 : vector<1x8xf32> to vector<1x8xbf16>
    %cst_72 = arith.constant dense<0.000000e+00> : vector<1x32xf32>
    %125 = tpu.matmul %124, %123, %cst_72 {dimension_numbers = #tpu.dot_dimension_numbers<[1], [0], [0], [1], [0, 0, 1, 1], [], []>} : vector<1x8xbf16>, vector<8x32xbf16>, vector<1x32xf32> -> vector<1x32xf32>
    %c0_73 = arith.constant 0 : index
    %c0_74 = arith.constant 0 : index
    %126 = vector.load %arg8[%c0_73, %c0_74] : memref<1x32xf32, #tpu.memory_space<vmem>>, vector<1x32xf32>
    %127 = arith.addf %125, %126 : vector<1x32xf32>
    %cst_75 = arith.constant 3.000000e+00 : f32
    %128 = vector.broadcast %cst_75 : f32 to vector<1x32xf32>
    %129 = arith.addf %127, %128 : vector<1x32xf32>
    %cst_76 = arith.constant 0.000000e+00 : f32
    %cst_77 = arith.constant 6.000000e+00 : f32
    %130 = vector.broadcast %cst_76 : f32 to vector<1x32xf32>
    %131 = arith.maximumf %130, %129 : vector<1x32xf32>
    %132 = vector.broadcast %cst_77 : f32 to vector<1x32xf32>
    %133 = arith.minimumf %132, %131 : vector<1x32xf32>
    %cst_78 = arith.constant 0.166666672 : f32
    %134 = vector.broadcast %cst_78 : f32 to vector<1x32xf32>
    %135 = arith.mulf %133, %134 : vector<1x32xf32>
    %c0_79 = arith.constant 0 : index
    %c0_80 = arith.constant 0 : index
    %c0_81 = arith.constant 0 : index
    %136 = vector.load %arg10[%c0_79, %c0_80, %c0_81] : memref<1x1x32xf32, #tpu.memory_space<vmem>>, vector<1x1x32xf32>
    %137 = vector.shape_cast %136 : vector<1x1x32xf32> to vector<1x32xf32>
    %138 = vector.shape_cast %135 : vector<1x32xf32> to vector<1x1x32xf32>
    tpu.vector_store %arg10[%c0_79, %c0_80, %c0_81], %138 {strides = array<i32>} : memref<1x1x32xf32, #tpu.memory_space<vmem>>, vector<1x1x32xf32>,
    %c0_82 = arith.constant 0 : index
    %c0_83 = arith.constant 0 : index
    %c0_84 = arith.constant 0 : index
    %c0_85 = arith.constant 0 : index
    %139 = vector.load %arg9[%c0_82, %c0_83, %c0_84, %c0_85] : memref<1x4x4x32xf32, #tpu.memory_space<vmem>>, vector<1x4x4x32xf32>
    %140 = vector.shape_cast %139 : vector<1x4x4x32xf32> to vector<4x4x32xf32>
    %141 = vector.shape_cast %110 : vector<4x4x32xf32> to vector<1x4x4x32xf32>
    tpu.vector_store %arg9[%c0_82, %c0_83, %c0_84, %c0_85], %141 {strides = array<i32>} : memref<1x4x4x32xf32, #tpu.memory_space<vmem>>, vector<1x4x4x32xf32>,
    return
  }
  func.func @transform_0(%arg0: i32) -> (i32, i32, i32, i32) {
    %c0_i32 = arith.constant 0 : i32
    %c0_i32_0 = arith.constant 0 : i32
    %c0_i32_1 = arith.constant 0 : i32
    %c0_i32_2 = arith.constant 0 : i32
    return %arg0, %c0_i32, %c0_i32_0, %c0_i32_1 : i32, i32, i32, i32
  }
  func.func @transform_1(%arg0: i32) -> (i32, i32) {
    %c0_i32 = arith.constant 0 : i32
    %c0_i32_0 = arith.constant 0 : i32
    %c0_i32_1 = arith.constant 0 : i32
    return %c0_i32, %c0_i32_0 : i32, i32
  }
  func.func @transform_2(%arg0: i32) -> (i32, i32) {
    %c0_i32 = arith.constant 0 : i32
    %c0_i32_0 = arith.constant 0 : i32
    %c0_i32_1 = arith.constant 0 : i32
    return %c0_i32, %c0_i32_0 : i32, i32
  }
  func.func @transform_3(%arg0: i32) -> (i32, i32) {
    %c0_i32 = arith.constant 0 : i32
    %c0_i32_0 = arith.constant 0 : i32
    %c0_i32_1 = arith.constant 0 : i32
    return %c0_i32, %c0_i32_0 : i32, i32
  }
  func.func @transform_4(%arg0: i32) -> (i32, i32) {
    %c0_i32 = arith.constant 0 : i32
    %c0_i32_0 = arith.constant 0 : i32
    %c0_i32_1 = arith.constant 0 : i32
    return %c0_i32, %c0_i32_0 : i32, i32
  }
  func.func @transform_5(%arg0: i32) -> (i32, i32) {
    %c0_i32 = arith.constant 0 : i32
    %c0_i32_0 = arith.constant 0 : i32
    %c0_i32_1 = arith.constant 0 : i32
    return %c0_i32, %c0_i32_0 : i32, i32
  }
  func.func @transform_6(%arg0: i32) -> (i32, i32) {
    %c0_i32 = arith.constant 0 : i32
    %c0_i32_0 = arith.constant 0 : i32
    %c0_i32_1 = arith.constant 0 : i32
    return %c0_i32, %c0_i32_0 : i32, i32
  }
  func.func @transform_7(%arg0: i32) -> (i32, i32) {
    %c0_i32 = arith.constant 0 : i32
    %c0_i32_0 = arith.constant 0 : i32
    %c0_i32_1 = arith.constant 0 : i32
    return %c0_i32, %c0_i32_0 : i32, i32
  }
  func.func @transform_8(%arg0: i32) -> (i32, i32, i32, i32) {
    %c0_i32 = arith.constant 0 : i32
    %c0_i32_0 = arith.constant 0 : i32
    %c0_i32_1 = arith.constant 0 : i32
    %c0_i32_2 = arith.constant 0 : i32
    return %arg0, %c0_i32, %c0_i32_0, %c0_i32_1 : i32, i32, i32, i32
  }
  func.func @transform_9(%arg0: i32) -> (i32, i32, i32) {
    %c0_i32 = arith.constant 0 : i32
    %c0_i32_0 = arith.constant 0 : i32
    %c0_i32_1 = arith.constant 0 : i32
    return %arg0, %c0_i32, %c0_i32_0 : i32, i32, i32
  }
}

module attributes {stable_mosaic.version = 11 : i64} {
  func.func @kernel(%arg0: i32, %arg1: i32, %arg2: memref<1x1x32xf32, #tpu.memory_space<vmem>>, %arg3: memref<1x16x32xf32, #tpu.memory_space<vmem>>, %arg4: memref<1x16x32xf32, #tpu.memory_space<vmem>>, %arg5: memref<32x32xbf16, #tpu.memory_space<vmem>>, %arg6: memref<1x32xf32, #tpu.memory_space<vmem>>, %arg7: memref<1x32xf32, #tpu.memory_space<vmem>>, %arg8: memref<1x16x32xf32, #tpu.memory_space<vmem>>) attributes {dimension_semantics = [#tpu.dimension_semantics<parallel>, #tpu.dimension_semantics<parallel>], iteration_bounds = array<i64: 2, 1>, scalar_prefetch = 0 : i64, scratch_operands = 0 : i64, tpu.core_type = #tpu.core_type<tc>, window_params = [{transform_indices = @transform_0, window_bounds = array<i64: 1, 1, 32>}, {transform_indices = @transform_1, window_bounds = array<i64: 1, 16, 32>}, {transform_indices = @transform_2, window_bounds = array<i64: 1, 16, 32>}, {pipeline_mode = #tpu.pipeline_mode<synchronous>, transform_indices = @transform_3, window_bounds = array<i64: 32, 32>}, {pipeline_mode = #tpu.pipeline_mode<synchronous>, transform_indices = @transform_4, window_bounds = array<i64: 1, 32>}, {pipeline_mode = #tpu.pipeline_mode<synchronous>, transform_indices = @transform_5, window_bounds = array<i64: 1, 32>}, {transform_indices = @transform_6, window_bounds = array<i64: 1, 16, 32>}]} {
    %c0 = arith.constant 0 : index
    %c0_0 = arith.constant 0 : index
    %c0_1 = arith.constant 0 : index
    %0 = vector.load %arg2[%c0, %c0_0, %c0_1] : memref<1x1x32xf32, #tpu.memory_space<vmem>>, vector<1x1x32xf32>
    %1 = vector.shape_cast %0 : vector<1x1x32xf32> to vector<1x32xf32>
    %c0_2 = arith.constant 0 : index
    %c0_3 = arith.constant 0 : index
    %c0_4 = arith.constant 0 : index
    %2 = vector.load %arg3[%c0_2, %c0_3, %c0_4] : memref<1x16x32xf32, #tpu.memory_space<vmem>>, vector<1x16x32xf32>
    %3 = vector.shape_cast %2 : vector<1x16x32xf32> to vector<16x32xf32>
    %4 = vector.broadcast %1 : vector<1x32xf32> to vector<16x32xf32>
    %5 = arith.mulf %3, %4 : vector<16x32xf32>
    %c0_5 = arith.constant 0 : index
    %c0_6 = arith.constant 0 : index
    %6 = vector.load %arg5[%c0_5, %c0_6] : memref<32x32xbf16, #tpu.memory_space<vmem>>, vector<32x32xbf16>
    %7 = arith.truncf %5 : vector<16x32xf32> to vector<16x32xbf16>
    %cst = arith.constant dense<0.000000e+00> : vector<16x32xf32>
    %8 = tpu.matmul %7, %6, %cst {dimension_numbers = #tpu.dot_dimension_numbers<[1], [0], [0], [1], [0, 0, 1, 1], [], []>} : vector<16x32xbf16>, vector<32x32xbf16>, vector<16x32xf32> -> vector<16x32xf32>
    %c0_7 = arith.constant 0 : index
    %c0_8 = arith.constant 0 : index
    %9 = vector.load %arg6[%c0_7, %c0_8] : memref<1x32xf32, #tpu.memory_space<vmem>>, vector<1x32xf32>
    %c0_9 = arith.constant 0 : index
    %c0_10 = arith.constant 0 : index
    %10 = vector.load %arg7[%c0_9, %c0_10] : memref<1x32xf32, #tpu.memory_space<vmem>>, vector<1x32xf32>
    %cst_11 = arith.constant dense<0.000000e+00> : vector<16xf32>
    %11 = vector.multi_reduction <add>, %8, %cst_11 [1] : vector<16x32xf32> to vector<16xf32>
    %12 = vector.shape_cast %11 : vector<16xf32> to vector<16x1xf32>
    %cst_12 = arith.constant 3.200000e+01 : f32
    %13 = vector.broadcast %cst_12 : f32 to vector<16x1xf32>
    %14 = arith.divf %12, %13 : vector<16x1xf32>
    %15 = vector.broadcast %14 : vector<16x1xf32> to vector<16x32xf32>
    %16 = arith.subf %8, %15 : vector<16x32xf32>
    %17 = arith.mulf %16, %16 : vector<16x32xf32>
    %cst_13 = arith.constant dense<0.000000e+00> : vector<16xf32>
    %18 = vector.multi_reduction <add>, %17, %cst_13 [1] : vector<16x32xf32> to vector<16xf32>
    %19 = vector.shape_cast %18 : vector<16xf32> to vector<16x1xf32>
    %cst_14 = arith.constant 3.200000e+01 : f32
    %20 = vector.broadcast %cst_14 : f32 to vector<16x1xf32>
    %21 = arith.divf %19, %20 : vector<16x1xf32>
    %22 = vector.broadcast %14 : vector<16x1xf32> to vector<16x32xf32>
    %23 = arith.subf %8, %22 : vector<16x32xf32>
    %cst_15 = arith.constant 9.99999974E-6 : f32
    %24 = vector.broadcast %cst_15 : f32 to vector<16x1xf32>
    %25 = arith.addf %21, %24 : vector<16x1xf32>
    %26 = math.rsqrt %25 : vector<16x1xf32>
    %27 = vector.broadcast %26 : vector<16x1xf32> to vector<16x32xf32>
    %28 = arith.mulf %23, %27 : vector<16x32xf32>
    %29 = vector.broadcast %9 : vector<1x32xf32> to vector<16x32xf32>
    %30 = arith.mulf %28, %29 : vector<16x32xf32>
    %31 = vector.broadcast %10 : vector<1x32xf32> to vector<16x32xf32>
    %32 = arith.addf %30, %31 : vector<16x32xf32>
    %c0_16 = arith.constant 0 : index
    %c0_17 = arith.constant 0 : index
    %c0_18 = arith.constant 0 : index
    %33 = vector.load %arg4[%c0_16, %c0_17, %c0_18] : memref<1x16x32xf32, #tpu.memory_space<vmem>>, vector<1x16x32xf32>
    %34 = vector.shape_cast %33 : vector<1x16x32xf32> to vector<16x32xf32>
    %35 = arith.addf %32, %34 : vector<16x32xf32>
    %c0_19 = arith.constant 0 : index
    %c0_20 = arith.constant 0 : index
    %c0_21 = arith.constant 0 : index
    %36 = vector.load %arg8[%c0_19, %c0_20, %c0_21] : memref<1x16x32xf32, #tpu.memory_space<vmem>>, vector<1x16x32xf32>
    %37 = vector.shape_cast %36 : vector<1x16x32xf32> to vector<16x32xf32>
    %38 = vector.shape_cast %35 : vector<16x32xf32> to vector<1x16x32xf32>
    tpu.vector_store %arg8[%c0_19, %c0_20, %c0_21], %38 {strides = array<i32>} : memref<1x16x32xf32, #tpu.memory_space<vmem>>, vector<1x16x32xf32>,
    return
  }
  func.func @transform_0(%arg0: i32, %arg1: i32) -> (i32, i32, i32) {
    %c0_i32 = arith.constant 0 : i32
    %c0_i32_0 = arith.constant 0 : i32
    %c0_i32_1 = arith.constant 0 : i32
    return %arg0, %c0_i32, %c0_i32_0 : i32, i32, i32
  }
  func.func @transform_1(%arg0: i32, %arg1: i32) -> (i32, i32, i32) {
    %c0_i32 = arith.constant 0 : i32
    %c0_i32_0 = arith.constant 0 : i32
    return %arg0, %arg1, %c0_i32 : i32, i32, i32
  }
  func.func @transform_2(%arg0: i32, %arg1: i32) -> (i32, i32, i32) {
    %c0_i32 = arith.constant 0 : i32
    %c0_i32_0 = arith.constant 0 : i32
    return %arg0, %arg1, %c0_i32 : i32, i32, i32
  }
  func.func @transform_3(%arg0: i32, %arg1: i32) -> (i32, i32) {
    %c0_i32 = arith.constant 0 : i32
    %c0_i32_0 = arith.constant 0 : i32
    %c0_i32_1 = arith.constant 0 : i32
    return %c0_i32, %c0_i32_0 : i32, i32
  }
  func.func @transform_4(%arg0: i32, %arg1: i32) -> (i32, i32) {
    %c0_i32 = arith.constant 0 : i32
    %c0_i32_0 = arith.constant 0 : i32
    %c0_i32_1 = arith.constant 0 : i32
    return %c0_i32, %c0_i32_0 : i32, i32
  }
  func.func @transform_5(%arg0: i32, %arg1: i32) -> (i32, i32) {
    %c0_i32 = arith.constant 0 : i32
    %c0_i32_0 = arith.constant 0 : i32
    %c0_i32_1 = arith.constant 0 : i32
    return %c0_i32, %c0_i32_0 : i32, i32
  }
  func.func @transform_6(%arg0: i32, %arg1: i32) -> (i32, i32, i32) {
    %c0_i32 = arith.constant 0 : i32
    %c0_i32_0 = arith.constant 0 : i32
    return %arg0, %arg1, %c0_i32 : i32, i32, i32
  }
}

module attributes {stable_mosaic.version = 11 : i64} {
  func.func @kernel(%arg0: i32, %arg1: i32, %arg2: memref<1x1x32xf32, #tpu.memory_space<vmem>>, %arg3: memref<1x4x32xf32, #tpu.memory_space<vmem>>, %arg4: memref<32x32xbf16, #tpu.memory_space<vmem>>, %arg5: memref<1x32xf32, #tpu.memory_space<vmem>>, %arg6: memref<1x32xf32, #tpu.memory_space<vmem>>, %arg7: memref<1x4x32xf32, #tpu.memory_space<vmem>>) attributes {dimension_semantics = [#tpu.dimension_semantics<parallel>, #tpu.dimension_semantics<parallel>], iteration_bounds = array<i64: 2, 1>, scalar_prefetch = 0 : i64, scratch_operands = 0 : i64, tpu.core_type = #tpu.core_type<tc>, window_params = [{transform_indices = @transform_0, window_bounds = array<i64: 1, 1, 32>}, {transform_indices = @transform_1, window_bounds = array<i64: 1, 4, 32>}, {pipeline_mode = #tpu.pipeline_mode<synchronous>, transform_indices = @transform_2, window_bounds = array<i64: 32, 32>}, {pipeline_mode = #tpu.pipeline_mode<synchronous>, transform_indices = @transform_3, window_bounds = array<i64: 1, 32>}, {pipeline_mode = #tpu.pipeline_mode<synchronous>, transform_indices = @transform_4, window_bounds = array<i64: 1, 32>}, {transform_indices = @transform_5, window_bounds = array<i64: 1, 4, 32>}]} {
    %c0 = arith.constant 0 : index
    %c0_0 = arith.constant 0 : index
    %c0_1 = arith.constant 0 : index
    %0 = vector.load %arg2[%c0, %c0_0, %c0_1] : memref<1x1x32xf32, #tpu.memory_space<vmem>>, vector<1x1x32xf32>
    %1 = vector.shape_cast %0 : vector<1x1x32xf32> to vector<1x32xf32>
    %c0_2 = arith.constant 0 : index
    %c0_3 = arith.constant 0 : index
    %c0_4 = arith.constant 0 : index
    %2 = vector.load %arg3[%c0_2, %c0_3, %c0_4] : memref<1x4x32xf32, #tpu.memory_space<vmem>>, vector<1x4x32xf32>
    %3 = vector.shape_cast %2 : vector<1x4x32xf32> to vector<4x32xf32>
    %4 = vector.broadcast %1 : vector<1x32xf32> to vector<4x32xf32>
    %5 = arith.mulf %3, %4 : vector<4x32xf32>
    %c0_5 = arith.constant 0 : index
    %c0_6 = arith.constant 0 : index
    %6 = vector.load %arg4[%c0_5, %c0_6] : memref<32x32xbf16, #tpu.memory_space<vmem>>, vector<32x32xbf16>
    %7 = arith.truncf %5 : vector<4x32xf32> to vector<4x32xbf16>
    %cst = arith.constant dense<0.000000e+00> : vector<4x32xf32>
    %8 = tpu.matmul %7, %6, %cst {dimension_numbers = #tpu.dot_dimension_numbers<[1], [0], [0], [1], [0, 0, 1, 1], [], []>} : vector<4x32xbf16>, vector<32x32xbf16>, vector<4x32xf32> -> vector<4x32xf32>
    %c0_7 = arith.constant 0 : index
    %c0_8 = arith.constant 0 : index
    %9 = vector.load %arg5[%c0_7, %c0_8] : memref<1x32xf32, #tpu.memory_space<vmem>>, vector<1x32xf32>
    %c0_9 = arith.constant 0 : index
    %c0_10 = arith.constant 0 : index
    %10 = vector.load %arg6[%c0_9, %c0_10] : memref<1x32xf32, #tpu.memory_space<vmem>>, vector<1x32xf32>
    %cst_11 = arith.constant dense<0.000000e+00> : vector<4xf32>
    %11 = vector.multi_reduction <add>, %8, %cst_11 [1] : vector<4x32xf32> to vector<4xf32>
    %12 = vector.shape_cast %11 : vector<4xf32> to vector<4x1xf32>
    %cst_12 = arith.constant 3.200000e+01 : f32
    %13 = vector.broadcast %cst_12 : f32 to vector<4x1xf32>
    %14 = arith.divf %12, %13 : vector<4x1xf32>
    %15 = vector.broadcast %14 : vector<4x1xf32> to vector<4x32xf32>
    %16 = arith.subf %8, %15 : vector<4x32xf32>
    %17 = arith.mulf %16, %16 : vector<4x32xf32>
    %cst_13 = arith.constant dense<0.000000e+00> : vector<4xf32>
    %18 = vector.multi_reduction <add>, %17, %cst_13 [1] : vector<4x32xf32> to vector<4xf32>
    %19 = vector.shape_cast %18 : vector<4xf32> to vector<4x1xf32>
    %cst_14 = arith.constant 3.200000e+01 : f32
    %20 = vector.broadcast %cst_14 : f32 to vector<4x1xf32>
    %21 = arith.divf %19, %20 : vector<4x1xf32>
    %22 = vector.broadcast %14 : vector<4x1xf32> to vector<4x32xf32>
    %23 = arith.subf %8, %22 : vector<4x32xf32>
    %cst_15 = arith.constant 9.99999974E-6 : f32
    %24 = vector.broadcast %cst_15 : f32 to vector<4x1xf32>
    %25 = arith.addf %21, %24 : vector<4x1xf32>
    %26 = math.rsqrt %25 : vector<4x1xf32>
    %27 = vector.broadcast %26 : vector<4x1xf32> to vector<4x32xf32>
    %28 = arith.mulf %23, %27 : vector<4x32xf32>
    %29 = vector.broadcast %9 : vector<1x32xf32> to vector<4x32xf32>
    %30 = arith.mulf %28, %29 : vector<4x32xf32>
    %31 = vector.broadcast %10 : vector<1x32xf32> to vector<4x32xf32>
    %32 = arith.addf %30, %31 : vector<4x32xf32>
    %c0_16 = arith.constant 0 : index
    %c0_17 = arith.constant 0 : index
    %c0_18 = arith.constant 0 : index
    %33 = vector.load %arg7[%c0_16, %c0_17, %c0_18] : memref<1x4x32xf32, #tpu.memory_space<vmem>>, vector<1x4x32xf32>
    %34 = vector.shape_cast %33 : vector<1x4x32xf32> to vector<4x32xf32>
    %35 = vector.shape_cast %32 : vector<4x32xf32> to vector<1x4x32xf32>
    tpu.vector_store %arg7[%c0_16, %c0_17, %c0_18], %35 {strides = array<i32>} : memref<1x4x32xf32, #tpu.memory_space<vmem>>, vector<1x4x32xf32>,
    return
  }
  func.func @transform_0(%arg0: i32, %arg1: i32) -> (i32, i32, i32) {
    %c0_i32 = arith.constant 0 : i32
    %c0_i32_0 = arith.constant 0 : i32
    %c0_i32_1 = arith.constant 0 : i32
    return %arg0, %c0_i32, %c0_i32_0 : i32, i32, i32
  }
  func.func @transform_1(%arg0: i32, %arg1: i32) -> (i32, i32, i32) {
    %c0_i32 = arith.constant 0 : i32
    %c0_i32_0 = arith.constant 0 : i32
    return %arg0, %arg1, %c0_i32 : i32, i32, i32
  }
  func.func @transform_2(%arg0: i32, %arg1: i32) -> (i32, i32) {
    %c0_i32 = arith.constant 0 : i32
    %c0_i32_0 = arith.constant 0 : i32
    %c0_i32_1 = arith.constant 0 : i32
    return %c0_i32, %c0_i32_0 : i32, i32
  }
  func.func @transform_3(%arg0: i32, %arg1: i32) -> (i32, i32) {
    %c0_i32 = arith.constant 0 : i32
    %c0_i32_0 = arith.constant 0 : i32
    %c0_i32_1 = arith.constant 0 : i32
    return %c0_i32, %c0_i32_0 : i32, i32
  }
  func.func @transform_4(%arg0: i32, %arg1: i32) -> (i32, i32) {
    %c0_i32 = arith.constant 0 : i32
    %c0_i32_0 = arith.constant 0 : i32
    %c0_i32_1 = arith.constant 0 : i32
    return %c0_i32, %c0_i32_0 : i32, i32
  }
  func.func @transform_5(%arg0: i32, %arg1: i32) -> (i32, i32, i32) {
    %c0_i32 = arith.constant 0 : i32
    %c0_i32_0 = arith.constant 0 : i32
    return %arg0, %arg1, %c0_i32 : i32, i32, i32
  }
}

</mosaic_0001>

<llo_original>
// kernel: tpu_custom_call.1
$region0: #{tpu_custom_call.1}
  #allocation0 [shape = 'u32[]', space=smem, size = 0x4, offset = 0x4, fixed_abs, tag = 'smem constant byte address 0x4 - core index']
  #allocation1 [shape = 'u32[144,128]{1,0:T(1,128)}', space=vmem, size = 0x12000, scoped, tag = 'internal scratch']
  %s0 = inlined_call_operand.hbm [shape: f32[8,8,128], index: 0, kind: input, shape index: {}]
  %s1 = inlined_call_operand.hbm [shape: f32[3,3,128], index: 1, kind: output, shape index: {}]
  %s2 = sld [smem:[#allocation0]]
  $region18: #{tpu_custom_call.1} parent=0
    _
  %s4 = ssub.s32 1, %s2
  %s5 = scalar_select 0, %s4, %s2
  $region1: #{tpu_custom_call.1} parent=0
    #allocation2 [shape = 'u8[32768]{0}', space=vmem, size = 0x8000, scoped, tag = 'input window, operand 0, single buffered']
    #allocation3 [shape = 's32[1]{0}', space=sflag, size = 0x4, scoped, tag = 'scoped memory for tpu_custom_call.1']
    #allocation4 [shape = 's32[1]{0}', space=sflag, size = 0x4, scoped, tag = 'scoped memory for tpu_custom_call.1']
    #allocation5 [shape = 'u8[6144]{0}', space=vmem, size = 0x1800, scoped, tag = 'output window, operand 0, single buffered']
    %6 = vsyncpa [#allocation3], 0
    %7 = vsyncpa [#allocation4], 0
    // Predicated region
    $region2: #{tpu_custom_call.1} parent=1 // pred_check
      _
    $region3: #{tpu_custom_call.1} parent=1 // pred_check_branch
      %9 = sbr.rel (0) target = $region5
    $region4: #{tpu_custom_call.1} parent=1 // pred_region
      %s11 = ssub.s32 1024, 1024
      %12 = vsyncadd [#allocation3], %s11
      %s13 = sshll.u32 [#allocation2], 4
      %s14 = int_to_ptr.vmem [resolvable:$true] %s13
      %19 = dma.hbm_to_vmem [thread:$0]  %s0, 1024, %s14, [#allocation3], 128, 128, 8
    $region5: #{tpu_custom_call.1} parent=1 // pred_fallthru
      _
    // Predicated region
    $region6: #{tpu_custom_call.1} parent=1 // pred_check
      _
    $region7: #{tpu_custom_call.1} parent=1 // pred_check_branch
      %21 = sbr.rel (0) target = $region9
    $region8: #{tpu_custom_call.1} parent=1 // pred_region
      %22 = dma.done [#allocation3], 1024
    $region9: #{tpu_custom_call.1} parent=1 // pred_fallthru
      _
    %s23 = scalar_lea.vmem [#allocation2], 1
    %v24 = vld [vmem:[%s23] ss:$2 sm:$0x7]
    %s25 = scalar_lea.vmem [#allocation2], 17
    %v26 = vld [vmem:[%s25] ss:$2 sm:$0x7]
    %s27 = scalar_lea.vmem [#allocation2], 33
    %v28 = vld [vmem:[%s27] ss:$2 sm:$0x7]
    %s29 = scalar_lea.vmem [#allocation2], 16
    %s30 = scalar_lea.vmem %s29, 2 [#allocation2]
    %v31 = vld [vmem:[%s30] ss:$2 sm:$0x7]
    %s32 = scalar_lea.vmem %s29, 18 [#allocation2]
    %v33 = vld [vmem:[%s32] ss:$2 sm:$0x7]
    %s34 = scalar_lea.vmem %s29, 34 [#allocation2]
    %v35 = vld [vmem:[%s34] ss:$2 sm:$0x7]
    %v36 = vadd.f32 %v24, %v31
    %v37 = vadd.f32 %v26, %v33
    %v38 = vadd.f32 %v28, %v35
    %39 = vst [vmem:[#allocation5] sm:$0x7] %v36
    %40 = vst [vmem:[#allocation5 + $0x4] sm:$0x7] %v37
    %41 = vst [vmem:[#allocation5 + $0x8] sm:$0x7] %v38
    // Predicated region
    $region10: #{tpu_custom_call.1} parent=1 // pred_check
      _
    $region11: #{tpu_custom_call.1} parent=1 // pred_check_branch
      %43 = sbr.rel (0) target = $region13
    $region12: #{tpu_custom_call.1} parent=1 // pred_region
      %s45 = ssub.s32 192, 192
      %46 = vsyncadd [#allocation4], %s45
      %s47 = sshll.u32 [#allocation5], 4
      %s48 = int_to_ptr.vmem [resolvable:$true] %s47
      %53 = dma.vmem_to_hbm [thread:$0]  %s48, 192, %s1, [#allocation4], 64, 64, 4
    $region13: #{tpu_custom_call.1} parent=1 // pred_fallthru
      _
    // Predicated region
    $region14: #{tpu_custom_call.1} parent=1 // pred_check
      _
    $region15: #{tpu_custom_call.1} parent=1 // pred_check_branch
      %55 = sbr.rel (0) target = $region17
    $region16: #{tpu_custom_call.1} parent=1 // pred_region
      %56 = dma.done [#allocation4], 192
    $region17: #{tpu_custom_call.1} parent=1 // pred_fallthru
      _
    %57 = vsyncpa [#allocation3], 1
    %58 = vsyncpa [#allocation4], 1

// kernel: tpu_custom_call.1
$region0: #{tpu_custom_call.1}
  #allocation0 [shape = 'u32[]', space=smem, size = 0x4, offset = 0x4, fixed_abs, tag = 'smem constant byte address 0x4 - core index']
  #allocation1 [shape = 'u32[144,128]{1,0:T(1,128)}', space=vmem, size = 0x12000, scoped, tag = 'internal scratch']
  %s0 = inlined_call_operand.hbm [shape: f32[16,128], index: 0, kind: input, shape index: {}]
  %s1 = inlined_call_operand.hbm [shape: f32[8,128], index: 1, kind: input, shape index: {}]
  %s2 = inlined_call_operand.hbm [shape: f32[16,128], index: 2, kind: output, shape index: {}]
  %s3 = sld [smem:[#allocation0]]
  $region49: #{tpu_custom_call.1} parent=0
    _
  %s5 = ssub.s32 1, %s3
  %s6 = scalar_select 0, %s5, %s3
  $region1: #{tpu_custom_call.1} parent=0
    #allocation2 [shape = 'u8[8192]{0}', space=vmem, size = 0x2000, scoped, tag = 'input window, operand 0']
    #allocation3 [shape = 's32[2]{0}', space=sflag, size = 0x8, scoped, tag = 'scoped memory for tpu_custom_call.1']
    #allocation4 [shape = 's32[2]{0}', space=sflag, size = 0x8, scoped, tag = 'scoped memory for tpu_custom_call.1']
    #allocation5 [shape = 'u8[4096]{0}', space=vmem, size = 0x1000, scoped, tag = 'input window, operand 1, single buffered']
    #allocation6 [shape = 's32[1]{0}', space=sflag, size = 0x4, scoped, tag = 'scoped memory for tpu_custom_call.1']
    #allocation7 [shape = 'u8[8192]{0}', space=vmem, size = 0x2000, scoped, tag = 'output window, operand 0']
    %7 = vsyncpa [#allocation3], 0
    %s8 = scalar_lea.sflag [#allocation3], 1
    %9 = vsyncpa %s8, 0
    %10 = vsyncpa [#allocation6], 0
    %11 = vsyncpa [#allocation4], 0
    %s12 = scalar_lea.sflag [#allocation4], 1
    %13 = vsyncpa %s12, 0
    loop: start=0, step=1, limit=4
    $region2: #{tpu_custom_call.1} parent=1 // loop_pre_header
      _
    $region3: #{tpu_custom_call.1} parent=1 // loop_header
      %s15 = sphi 0, %s19
      %p16 = scmp.ge.s32.totalorder %s15, 4
      %s25 = sphi 0, %s27
      %s28 = sphi 0, %s25
      %s29 = sphi 0, %s28
      %s45 = sphi 0, %s29
      %s49 = sphi 0, %s49
      %s51 = sphi 0, %s49
      %s52 = sphi 0, %s51
      %s66 = sphi 0, %s52
      %s72 = sphi 0, %s74
      %s75 = sphi 0, %s72
      %s76 = sphi 0, %s75
      %s92 = sphi 0, %s76
    $region4: #{tpu_custom_call.1} parent=1 // loop_header_branch
      %18 = sbr.rel (%p16) target = $region8
    $region5: #{tpu_custom_call.1} parent=1 // loop_body
      %s20 = ssub.s32 %s15, 1
      %s21 = ssub.s32 %s15, 2
      %s22 = sadd.s32 %s15, 1
      %s23 = ssub.s32 %s15, %s22
      %p24 = scmp.eq.s32.totalorder %s23, 0
      %s26 = sadd.s32 %s25, 1
      %s27 = scalar_select %p24, %s25, %s26
      %p30 = pneg %p24
      %p31 = scmp.eq.s32.totalorder %s15, 1
      %p32 = por %p30, %p31
      %p33 = scmp.ne.s32.totalorder %s25, %s28
      %p34 = scmp.eq.s32.totalorder %s15, 0
      %p35 = por %p33, %p34
      %p36 = scmp.ne.s32.totalorder %s25, %s28
      %p37 = scmp.eq.s32.totalorder %s20, 1
      %p38 = por %p36, %p37
      %p39 = scmp.ne.s32.totalorder %s28, %s29
      %p40 = scmp.eq.s32.totalorder %s20, 0
      %p41 = por %p39, %p40
      %p42 = scmp.ne.s32.totalorder %s28, %s29
      %p43 = scmp.eq.s32.totalorder %s21, 1
      %p44 = por %p42, %p43
      %p46 = scmp.ne.s32.totalorder %s29, %s45
      %p47 = scmp.eq.s32.totalorder %s21, 0
      %p48 = por %p46, %p47
      %s50 = sadd.s32 %s49, 1
      %p53 = scmp.eq.s32.totalorder %s15, 1
      %p54 = scmp.ne.s32.totalorder %s49, %s51
      %p55 = scmp.eq.s32.totalorder %s15, 0
      %p56 = por %p54, %p55
      %p57 = scmp.ne.s32.totalorder %s49, %s51
      %p58 = scmp.eq.s32.totalorder %s20, 1
      %p59 = por %p57, %p58
      %p60 = scmp.ne.s32.totalorder %s51, %s52
      %p61 = scmp.eq.s32.totalorder %s20, 0
      %p62 = por %p60, %p61
      %p63 = scmp.ne.s32.totalorder %s51, %s52
      %p64 = scmp.eq.s32.totalorder %s21, 1
      %p65 = por %p63, %p64
      %p67 = scmp.ne.s32.totalorder %s52, %s66
      %p68 = scmp.eq.s32.totalorder %s21, 0
      %p69 = por %p67, %p68
      %s70 = ssub.s32 %s15, %s22
      %p71 = scmp.eq.s32.totalorder %s70, 0
      %s73 = sadd.s32 %s72, 1
      %s74 = scalar_select %p71, %s72, %s73
      %p77 = pneg %p71
      %p78 = scmp.eq.s32.totalorder %s15, 1
      %p79 = por %p77, %p78
      %p80 = scmp.ne.s32.totalorder %s72, %s75
      %p81 = scmp.eq.s32.totalorder %s15, 0
      %p82 = por %p80, %p81
      %p83 = scmp.ne.s32.totalorder %s72, %s75
      %p84 = scmp.eq.s32.totalorder %s20, 1
      %p85 = por %p83, %p84
      %p86 = scmp.ne.s32.totalorder %s75, %s76
      %p87 = scmp.eq.s32.totalorder %s20, 0
      %p88 = por %p86, %p87
      %p89 = scmp.ne.s32.totalorder %s75, %s76
      %p90 = scmp.eq.s32.totalorder %s21, 1
      %p91 = por %p89, %p90
      %p93 = scmp.ne.s32.totalorder %s76, %s92
      %p94 = scmp.eq.s32.totalorder %s21, 0
      %p95 = por %p93, %p94
      %p96 = scmp.le.s32.totalorder 1, %s15
      %p97 = scmp.lt.s32.totalorder %s15, 3
      %p98 = pnand %p96, %p97
      %p99 = pneg %p98
      // Predicated region
      $region9: #{tpu_custom_call.1} parent=5 // pred_check
        _
      $region10: #{tpu_custom_call.1} parent=5 // pred_check_branch
        %101 = sbr.rel (%p98) target = $region12
      $region11: #{tpu_custom_call.1} parent=5 // pred_region
        %s102 = ssub.s32 %s15, 1
        // Predicated region
        $region13: #{tpu_custom_call.1} parent=11 // pred_check
          %p103 = pneg %p62
        $region14: #{tpu_custom_call.1} parent=11 // pred_check_branch
          %105 = sbr.rel (%p103) target = $region16
        $region15: #{tpu_custom_call.1} parent=11 // pred_region
          %s107 = ssub.s32 128, 128
          %108 = vsyncadd [#allocation6], %s107
          %s110 = sshll.u32 [#allocation5], 4
          %s111 = int_to_ptr.vmem [resolvable:$true] %s110
          %113 = dma.hbm_to_vmem [thread:$0]  %s1, 128, %s111, [#allocation6]
        $region16: #{tpu_custom_call.1} parent=11 // pred_fallthru
          _
      $region12: #{tpu_custom_call.1} parent=5 // pred_fallthru
        _
      %p114 = scmp.lt.s32.totalorder %s15, 2
      // Predicated region
      $region17: #{tpu_custom_call.1} parent=5 // pred_check
        %p115 = pneg %p114
      $region18: #{tpu_custom_call.1} parent=5 // pred_check_branch
        %117 = sbr.rel (%p115) target = $region20
      $region19: #{tpu_custom_call.1} parent=5 // pred_region
        // Predicated region
        $region21: #{tpu_custom_call.1} parent=19 // pred_check
          %p118 = pneg %p35
        $region22: #{tpu_custom_call.1} parent=19 // pred_check_branch
          %120 = sbr.rel (%p118) target = $region24
        $region23: #{tpu_custom_call.1} parent=19 // pred_region
          %s121 = sand.u32 %s25, 1
          %s122 = scalar_lea.sflag [#allocation3], %s121
          %s123 = sand.u32 %s25, 1
          %s124 = smul.addr %s123, 8
          %s125 = scalar_lea.vmem [#allocation2], %s124
          %s127 = ssub.s32 128, 128
          %128 = vsyncadd %s122, %s127
          %s129 = smul.addr %s15, 128
          %s130 = scalar_lea.hbm %s0, %s129
          %s132 = sshll.u32 %s125, 4
          %s133 = int_to_ptr.vmem [resolvable:$true] %s132
          %135 = dma.hbm_to_vmem [thread:$0]  %s130, 128, %s133, %s122
        $region24: #{tpu_custom_call.1} parent=19 // pred_fallthru
          _
      $region20: #{tpu_custom_call.1} parent=5 // pred_fallthru
        _
      %p136 = scmp.le.s32.totalorder 1, %s15
      %p137 = scmp.lt.s32.totalorder %s15, 3
      %p138 = pnand %p136, %p137
      %p139 = pneg %p138
      // Predicated region
      $region25: #{tpu_custom_call.1} parent=5 // pred_check
        _
      $region26: #{tpu_custom_call.1} parent=5 // pred_check_branch
        %141 = sbr.rel (%p138) target = $region28
      $region27: #{tpu_custom_call.1} parent=5 // pred_region
        %s142 = ssub.s32 %s15, 1
        %s143 = sand.u32 %s28, 1
        %s144 = scalar_lea.sflag [#allocation3], %s143
        %s145 = sand.u32 %s28, 1
        %s146 = smul.addr %s145, 8
        %s147 = scalar_lea.vmem [#allocation2], %s146
        // Predicated region
        $region29: #{tpu_custom_call.1} parent=27 // pred_check
          %p148 = pneg %p41
        $region30: #{tpu_custom_call.1} parent=27 // pred_check_branch
          %150 = sbr.rel (%p148) target = $region32
        $region31: #{tpu_custom_call.1} parent=27 // pred_region
          %151 = dma.done %s144, 128
        $region32: #{tpu_custom_call.1} parent=27 // pred_fallthru
          _
        // Predicated region
        $region33: #{tpu_custom_call.1} parent=27 // pred_check
          %p152 = pneg %p62
        $region34: #{tpu_custom_call.1} parent=27 // pred_check_branch
          %154 = sbr.rel (%p152) target = $region36
        $region35: #{tpu_custom_call.1} parent=27 // pred_region
          %155 = dma.done [#allocation6], 128
        $region36: #{tpu_custom_call.1} parent=27 // pred_fallthru
          _
        %s156 = sand.u32 %s28, 1
        %s157 = scalar_lea.sflag [#allocation3], %s156
        %s158 = sand.u32 %s28, 1
        %s159 = smul.addr %s158, 8
        %s160 = scalar_lea.vmem [#allocation2], %s159
        %p161 = pneg %p41
        %p162 = pneg %p38
        %p163 = pneg %p62
        %p164 = pneg %p59
        %p165 = pneg %p88
        %p166 = pneg %p85
        %s167 = sand.u32 %s75, 1
        %s168 = scalar_lea.sflag [#allocation4], %s167
        %s169 = sand.u32 %s75, 1
        %s170 = smul.addr %s169, 8
        %s171 = scalar_lea.vmem [#allocation7], %s170
        %v172 = vld [vmem:[%s147] sm:$0xff]
        %v173 = vld [vmem:[#allocation5] sm:$0xff]
        %v174 = vadd.f32 %v172, %v173
        %175 = vst [vmem:[%s171] sm:$0xff] %v174
        %s176 = sand.u32 %s75, 1
        %s177 = scalar_lea.sflag [#allocation4], %s176
        %s178 = sand.u32 %s75, 1
        %s179 = smul.addr %s178, 8
        %s180 = scalar_lea.vmem [#allocation7], %s179
        // Predicated region
        $region37: #{tpu_custom_call.1} parent=27 // pred_check
          %p181 = pneg %p85
        $region38: #{tpu_custom_call.1} parent=27 // pred_check_branch
          %183 = sbr.rel (%p181) target = $region40
        $region39: #{tpu_custom_call.1} parent=27 // pred_region
          %s185 = ssub.s32 128, 128
          %186 = vsyncadd %s177, %s185
          %s187 = smul.addr %s20, 128
          %s188 = scalar_lea.hbm %s2, %s187
          %s190 = sshll.u32 %s180, 4
          %s191 = int_to_ptr.vmem [resolvable:$true] %s190
          %193 = dma.vmem_to_hbm [thread:$0]  %s191, 128, %s188, %s177
        $region40: #{tpu_custom_call.1} parent=27 // pred_fallthru
          _
      $region28: #{tpu_custom_call.1} parent=5 // pred_fallthru
        _
      %p194 = scmp.le.s32.totalorder 2, %s15
      // Predicated region
      $region41: #{tpu_custom_call.1} parent=5 // pred_check
        %p195 = pneg %p194
      $region42: #{tpu_custom_call.1} parent=5 // pred_check_branch
        %197 = sbr.rel (%p195) target = $region44
      $region43: #{tpu_custom_call.1} parent=5 // pred_region
        %s198 = ssub.s32 %s15, 2
        // Predicated region
        $region45: #{tpu_custom_call.1} parent=43 // pred_check
          %p199 = pneg %p91
        $region46: #{tpu_custom_call.1} parent=43 // pred_check_branch
          %201 = sbr.rel (%p199) target = $region48
        $region47: #{tpu_custom_call.1} parent=43 // pred_region
          %s202 = sand.u32 %s76, 1
          %s203 = scalar_lea.sflag [#allocation4], %s202
          %s204 = sand.u32 %s76, 1
          %s205 = smul.addr %s204, 8
          %s206 = scalar_lea.vmem [#allocation7], %s205
          %207 = dma.done %s203, 128
        $region48: #{tpu_custom_call.1} parent=43 // pred_fallthru
          _
      $region44: #{tpu_custom_call.1} parent=5 // pred_fallthru
        _
    $region6: #{tpu_custom_call.1} parent=1 // loop_footer
      %s19 = sadd.s32 1, %s15
    $region7: #{tpu_custom_call.1} parent=1 // loop_footer_branch
      %14 = sbr.rel target = $region3
    $region8: #{tpu_custom_call.1} parent=1 // loop_exit
      _
    %208 = vsyncpa [#allocation3], 1
    %s209 = scalar_lea.sflag [#allocation3], 1
    %210 = vsyncpa %s209, 1
    %211 = vsyncpa [#allocation6], 1
    %212 = vsyncpa [#allocation4], 1
    %s213 = scalar_lea.sflag [#allocation4], 1
    %214 = vsyncpa %s213, 1

// kernel: ldp_projector_forward.5
$region0: #{ldp_projector_forward.5}
  #allocation0 [shape = 'u32[]', space=smem, size = 0x4, offset = 0x4, fixed_abs, tag = 'smem constant byte address 0x4 - core index']
  #allocation1 [shape = 'u32[144,128]{1,0:T(1,128)}', space=vmem, size = 0x12000, scoped, tag = 'internal scratch']
  %s0 = inlined_call_operand.vmem [shape: f32[32,16], index: 0, kind: input, shape index: {}]
  %s1 = inlined_call_operand.vmem [shape: bf16[16,32], index: 1, kind: input, shape index: {}]
  %s2 = inlined_call_operand.vmem [shape: f32[1,32], index: 2, kind: input, shape index: {}]
  %s3 = inlined_call_operand.vmem [shape: bf16[32,32], index: 3, kind: input, shape index: {}]
  %s4 = inlined_call_operand.vmem [shape: f32[1,32], index: 4, kind: input, shape index: {}]
  %s5 = inlined_call_operand.vmem [shape: f32[32,32], index: 5, kind: output, shape index: {}]
  %s6 = sld [smem:[#allocation0]]
  $region30: #{ldp_projector_forward.5} parent=0
    _
  %s8 = ssub.s32 1, %s6
  %s9 = scalar_select 0, %s8, %s6
  // Predicated region
  $region2: #{ldp_projector_forward.5} parent=0 // pred_check
    _
  $region3: #{ldp_projector_forward.5} parent=0 // pred_check_branch
    %11 = sbr.rel (0) target = $region5
  $region4: #{ldp_projector_forward.5} parent=0 // pred_region
    _
  $region5: #{ldp_projector_forward.5} parent=0 // pred_fallthru
    _
  // Predicated region
  $region6: #{ldp_projector_forward.5} parent=0 // pred_check
    _
  $region7: #{ldp_projector_forward.5} parent=0 // pred_check_branch
    %13 = sbr.rel (0) target = $region9
  $region8: #{ldp_projector_forward.5} parent=0 // pred_region
    _
  $region9: #{ldp_projector_forward.5} parent=0 // pred_fallthru
    _
  // Predicated region
  $region10: #{ldp_projector_forward.5} parent=0 // pred_check
    _
  $region11: #{ldp_projector_forward.5} parent=0 // pred_check_branch
    %15 = sbr.rel (0) target = $region13
  $region12: #{ldp_projector_forward.5} parent=0 // pred_region
    _
  $region13: #{ldp_projector_forward.5} parent=0 // pred_fallthru
    _
  // Predicated region
  $region14: #{ldp_projector_forward.5} parent=0 // pred_check
    _
  $region15: #{ldp_projector_forward.5} parent=0 // pred_check_branch
    %17 = sbr.rel (0) target = $region17
  $region16: #{ldp_projector_forward.5} parent=0 // pred_region
    _
  $region17: #{ldp_projector_forward.5} parent=0 // pred_fallthru
    _
  // Predicated region
  $region18: #{ldp_projector_forward.5} parent=0 // pred_check
    _
  $region19: #{ldp_projector_forward.5} parent=0 // pred_check_branch
    %19 = sbr.rel (0) target = $region21
  $region20: #{ldp_projector_forward.5} parent=0 // pred_region
    _
  $region21: #{ldp_projector_forward.5} parent=0 // pred_fallthru
    _
  %v21 = vld [vmem:[%s1] sm:$0xf]
  %v22 = vld [vmem:[%s1 + $0x4] sm:$0xf]
  %v23 = vld [vmem:[%s3] sm:$0xf]
  %v24 = vld [vmem:[%s3 + $0x4] sm:$0xf]
  %v25 = vld [vmem:[%s3 + $0x8] sm:$0xf]
  %v26 = vld [vmem:[%s3 + $0xc] sm:$0xf]
  %v27 = vld [vmem:[%s0] sm:$0xff]
  %v28 = vld [vmem:[%s0 + $0x8] sm:$0xff]
  %v29 = vld [vmem:[%s0 + $0x10] sm:$0xff]
  %v30 = vld [vmem:[%s0 + $0x18] sm:$0xff]
  %v31 = vpack.c.bf16 %v28, %v27
  %v32 = vpack.c.bf16 %v30, %v29
  %v33 = vld [vmem:[%s2] sm:$0x1]
  %v35 = vlaneseq
  %v36 = vshrl.u32 %v35, 7
  %v37 = vsub.s32 0, %v36
  %v38 = vrot.slane %v33, %v37
  %v42 = vunpack.c.l.b16 %v21
  %v43 = vunpack.c.l.b16 %v22
  %v44 = vpack.c.b16 %v43, %v42
  %vm46 = vcmask 130048
  %v48 = vsel %vm46, %v31, 0
  %v51 = vsel %vm46, %v32, 0
  %53 = vmatprep.subr.bf16.mxu0 0
  %54 = vmatpush1.bf16.msra.mxu0 %v44
  %55 = vmatprep.subr.bf16.mxu0 0
  %56 = vmatpush1.bf16.msra.mxu0 0
  %57 = vmatprep.subr.bf16.mxu0 0
  %58 = vmatpush1.bf16.msra.mxu0 0
  %59 = vmatprep.subr.bf16.mxu0 0
  %60 = vmatpush1.bf16.msra.mxu0 0
  %61 = vmatprep.subr.bf16.mxu0 0
  %62 = vmatpush1.bf16.msra.mxu0 0
  %63 = vmatprep.subr.bf16.mxu0 0
  %64 = vmatpush1.bf16.msra.mxu0 0
  %65 = vmatprep.subr.bf16.mxu0 0
  %66 = vmatpush1.bf16.msra.mxu0 0
  %67 = vmatprep.subr.bf16.mxu0 0
  %68 = vmatpush1.bf16.msra.mxu0 0
  %69 = vmatprep.subr.bf16.mxu0 0
  %70 = vmatpush1.bf16.msra.mxu0 0
  %71 = vmatprep.subr.bf16.mxu0 0
  %72 = vmatpush1.bf16.msra.mxu0 0
  %73 = vmatprep.subr.bf16.mxu0 0
  %74 = vmatpush1.bf16.msra.mxu0 0
  %75 = vmatprep.subr.bf16.mxu0 0
  %76 = vmatpush1.bf16.msra.mxu0 0
  %77 = vmatprep.subr.bf16.mxu0 0
  %78 = vmatpush1.bf16.msra.mxu0 0
  %79 = vmatprep.subr.bf16.mxu0 0
  %80 = vmatpush1.bf16.msra.mxu0 0
  %81 = vmatprep.subr.bf16.mxu0 0
  %82 = vmatpush1.bf16.msra.mxu0 0
  %83 = vmatprep.subr.bf16.mxu0 0
  %84 = vmatpush1.bf16.msra.mxu0 0
  %85 = vmatprep.mubr.bf16.mxu0 0
  %86 = vmatmul.mubr.bf16.gmra.mrb[0].mxu0 %v48
  %v87 = vpop.f32.mrb[0].mxu0
  %v88 = vadd.f32 %v38, %v87
  %v89 = vpop.f32.mrb[0].mxu0
  %v90 = vpop.f32.mrb[0].mxu0
  %v91 = vadd.f32 %v38, %v90
  %v92 = vpop.f32.mrb[0].mxu0
  %93 = vmatprep.mubr.bf16.mxu0 0
  %94 = vmatmul.mubr.bf16.gmra.mrb[0].mxu0 %v51
  %v95 = vpop.f32.mrb[0].mxu0
  %v96 = vadd.f32 %v38, %v95
  %v97 = vpop.f32.mrb[0].mxu0
  %v98 = vpop.f32.mrb[0].mxu0
  %v99 = vadd.f32 %v38, %v98
  %v100 = vpop.f32.mrb[0].mxu0
  %101 = vdwg.mxu0
  %v102 = vmul.f32 %v88, 0.5
  %v103 = vmul.f32 %v91, 0.5
  %v104 = vmul.f32 %v96, 0.5
  %v105 = vmul.f32 %v99, 0.5
  %v106 = vmul.f32 %v88, 0.70710677
  %v107 = vmul.f32 %v91, 0.70710677
  %v108 = vmul.f32 %v96, 0.70710677
  %v109 = vmul.f32 %v99, 0.70710677
  %v110 = vand.u32 2147483647, %v106
  %v111 = vand.u32 2147483647, %v107
  %v112 = vand.u32 2147483647, %v108
  %v113 = vand.u32 2147483647, %v109
  %v114 = vmul.f32 %v110, 0.3275911
  %v115 = vmul.f32 %v111, 0.3275911
  %v116 = vmul.f32 %v112, 0.3275911
  %v117 = vmul.f32 %v113, 0.3275911
  %v118 = vadd.f32 %v114, 1.0
  %v119 = vadd.f32 %v115, 1.0
  %v120 = vadd.f32 %v116, 1.0
  %v121 = vadd.f32 %v117, 1.0
  %v122 = vrcp.pop %v118
  %v123 = vmul.f32 1.0, %v122
  %v124 = vrcp.pop %v119
  %v125 = vmul.f32 1.0, %v124
  %v126 = vrcp.pop %v120
  %v127 = vmul.f32 1.0, %v126
  %v128 = vrcp.pop %v121
  %v129 = vmul.f32 1.0, %v128
  %v130 = vmul.f32 %v123, 1.0614054
  %v131 = vmul.f32 %v125, 1.0614054
  %v132 = vmul.f32 %v127, 1.0614054
  %v133 = vmul.f32 %v129, 1.0614054
  %v134 = vadd.f32 %v130, -1.4531521
  %v135 = vadd.f32 %v131, -1.4531521
  %v136 = vadd.f32 %v132, -1.4531521
  %v137 = vadd.f32 %v133, -1.4531521
  %v138 = vmul.f32 %v123, %v134
  %v139 = vmul.f32 %v125, %v135
  %v140 = vmul.f32 %v127, %v136
  %v141 = vmul.f32 %v129, %v137
  %v142 = vadd.f32 %v138, 1.4214138
  %v143 = vadd.f32 %v139, 1.4214138
  %v144 = vadd.f32 %v140, 1.4214138
  %v145 = vadd.f32 %v141, 1.4214138
  %v146 = vmul.f32 %v123, %v142
  %v147 = vmul.f32 %v125, %v143
  %v148 = vmul.f32 %v127, %v144
  %v149 = vmul.f32 %v129, %v145
  %v150 = vadd.f32 %v146, -0.28449672
  %v151 = vadd.f32 %v147, -0.28449672
  %v152 = vadd.f32 %v148, -0.28449672
  %v153 = vadd.f32 %v149, -0.28449672
  %v154 = vmul.f32 %v123, %v150
  %v155 = vmul.f32 %v125, %v151
  %v156 = vmul.f32 %v127, %v152
  %v157 = vmul.f32 %v129, %v153
  %v158 = vadd.f32 %v154, 0.2548296
  %v159 = vadd.f32 %v155, 0.2548296
  %v160 = vadd.f32 %v156, 0.2548296
  %v161 = vadd.f32 %v157, 0.2548296
  %v162 = vmul.f32 %v123, %v158
  %v163 = vmul.f32 %v125, %v159
  %v164 = vmul.f32 %v127, %v160
  %v165 = vmul.f32 %v129, %v161
  %v166 = vsub.f32 0.0, %v110
  %v167 = vsub.f32 0.0, %v111
  %v168 = vsub.f32 0.0, %v112
  %v169 = vsub.f32 0.0, %v113
  %v170 = vmul.f32 %v166, %v110
  %v171 = vmul.f32 %v167, %v111
  %v172 = vmul.f32 %v168, %v112
  %v173 = vmul.f32 %v169, %v113
  %v174 = vmul.f32 %v170, 1.442695
  %v175 = vpow.pop %v174
  %v176 = vmul.f32 %v171, 1.442695
  %v177 = vpow.pop %v176
  %v178 = vmul.f32 %v172, 1.442695
  %v179 = vpow.pop %v178
  %v180 = vmul.f32 %v173, 1.442695
  %v181 = vpow.pop %v180
  %v182 = vmul.f32 %v162, %v175
  %v183 = vmul.f32 %v163, %v177
  %v184 = vmul.f32 %v164, %v179
  %v185 = vmul.f32 %v165, %v181
  %v186 = vsub.f32 1.0, %v182
  %v187 = vsub.f32 1.0, %v183
  %v188 = vsub.f32 1.0, %v184
  %v189 = vsub.f32 1.0, %v185
  %vm190 = vcmp.ge.f32.partialorder %v106, 0.0
  %vm191 = vcmp.ge.f32.partialorder %v107, 0.0
  %vm192 = vcmp.ge.f32.partialorder %v108, 0.0
  %vm193 = vcmp.ge.f32.partialorder %v109, 0.0
  %v194 = vsub.f32 0.0, %v186
  %v195 = vsub.f32 0.0, %v187
  %v196 = vsub.f32 0.0, %v188
  %v197 = vsub.f32 0.0, %v189
  %v198 = vsel %vm190, %v186, %v194
  %v199 = vsel %vm191, %v187, %v195
  %v200 = vsel %vm192, %v188, %v196
  %v201 = vsel %vm193, %v189, %v197
  %v202 = vadd.f32 %v198, 1.0
  %v203 = vadd.f32 %v199, 1.0
  %v204 = vadd.f32 %v200, 1.0
  %v205 = vadd.f32 %v201, 1.0
  %v206 = vmul.f32 %v102, %v202
  %v207 = vmul.f32 %v103, %v203
  %v208 = vmul.f32 %v104, %v204
  %v209 = vmul.f32 %v105, %v205
  %v210 = vpack.c.bf16 %v207, %v206
  %v211 = vpack.c.bf16 %v209, %v208
  %v212 = vld [vmem:[%s4] sm:$0x1]
  %v214 = vlaneseq
  %v215 = vshrl.u32 %v214, 7
  %v216 = vsub.s32 0, %v215
  %v217 = vrot.slane %v212, %v216
  %v223 = vunpack.c.l.b16 %v23
  %v224 = vunpack.c.l.b16 %v24
  %v225 = vunpack.c.l.b16 %v25
  %v226 = vunpack.c.l.b16 %v26
  %v227 = vpack.c.b16 %v224, %v223
  %v228 = vpack.c.b16 %v226, %v225
  %vm231 = vcmask 261120
  %v233 = vsel %vm231, %v210, 0
  %v236 = vsel %vm231, %v211, 0
  %238 = vmatprep.subr.bf16.mxu0 0
  %239 = vmatpush1.bf16.msra.mxu0 %v227
  %240 = vmatprep.subr.bf16.mxu0 0
  %241 = vmatpush1.bf16.msra.mxu0 %v228
  %242 = vmatprep.subr.bf16.mxu0 0
  %243 = vmatpush1.bf16.msra.mxu0 0
  %244 = vmatprep.subr.bf16.mxu0 0
  %245 = vmatpush1.bf16.msra.mxu0 0
  %246 = vmatprep.subr.bf16.mxu0 0
  %247 = vmatpush1.bf16.msra.mxu0 0
  %248 = vmatprep.subr.bf16.mxu0 0
  %249 = vmatpush1.bf16.msra.mxu0 0
  %250 = vmatprep.subr.bf16.mxu0 0
  %251 = vmatpush1.bf16.msra.mxu0 0
  %252 = vmatprep.subr.bf16.mxu0 0
  %253 = vmatpush1.bf16.msra.mxu0 0
  %254 = vmatprep.subr.bf16.mxu0 0
  %255 = vmatpush1.bf16.msra.mxu0 0
  %256 = vmatprep.subr.bf16.mxu0 0
  %257 = vmatpush1.bf16.msra.mxu0 0
  %258 = vmatprep.subr.bf16.mxu0 0
  %259 = vmatpush1.bf16.msra.mxu0 0
  %260 = vmatprep.subr.bf16.mxu0 0
  %261 = vmatpush1.bf16.msra.mxu0 0
  %262 = vmatprep.subr.bf16.mxu0 0
  %263 = vmatpush1.bf16.msra.mxu0 0
  %264 = vmatprep.subr.bf16.mxu0 0
  %265 = vmatpush1.bf16.msra.mxu0 0
  %266 = vmatprep.subr.bf16.mxu0 0
  %267 = vmatpush1.bf16.msra.mxu0 0
  %268 = vmatprep.subr.bf16.mxu0 0
  %269 = vmatpush1.bf16.msra.mxu0 0
  %270 = vmatprep.mubr.bf16.mxu0 0
  %271 = vmatmul.mubr.bf16.gmra.mrb[0].mxu0 %v233
  %v272 = vpop.f32.mrb[0].mxu0
  %v273 = vadd.f32 %v217, %v272
  %v274 = vpop.f32.mrb[0].mxu0
  %v275 = vpop.f32.mrb[0].mxu0
  %v276 = vadd.f32 %v217, %v275
  %v277 = vpop.f32.mrb[0].mxu0
  %278 = vmatprep.mubr.bf16.mxu0 0
  %279 = vmatmul.mubr.bf16.gmra.mrb[0].mxu0 %v236
  %v280 = vpop.f32.mrb[0].mxu0
  %v281 = vadd.f32 %v217, %v280
  %v282 = vpop.f32.mrb[0].mxu0
  %v283 = vpop.f32.mrb[0].mxu0
  %v284 = vadd.f32 %v217, %v283
  %v285 = vpop.f32.mrb[0].mxu0
  %286 = vdwg.mxu0
  %287 = vst.msk [vmem:[%s5] sm:$0xff] %vm231, %v273
  %288 = vst.msk [vmem:[%s5 + $0x8] sm:$0xff] %vm231, %v276
  %289 = vst.msk [vmem:[%s5 + $0x10] sm:$0xff] %vm231, %v281
  %290 = vst.msk [vmem:[%s5 + $0x18] sm:$0xff] %vm231, %v284
  // Predicated region
  $region22: #{ldp_projector_forward.5} parent=0 // pred_check
    _
  $region23: #{ldp_projector_forward.5} parent=0 // pred_check_branch
    %292 = sbr.rel (0) target = $region25
  $region24: #{ldp_projector_forward.5} parent=0 // pred_region
    _
  $region25: #{ldp_projector_forward.5} parent=0 // pred_fallthru
    _
  // Predicated region
  $region26: #{ldp_projector_forward.5} parent=0 // pred_check
    _
  $region27: #{ldp_projector_forward.5} parent=0 // pred_check_branch
    %294 = sbr.rel (0) target = $region29
  $region28: #{ldp_projector_forward.5} parent=0 // pred_region
    _
  $region29: #{ldp_projector_forward.5} parent=0 // pred_fallthru
    _

// kernel: ldp_projector_forward.7
$region0: #{ldp_projector_forward.7}
  #allocation0 [shape = 'u32[]', space=smem, size = 0x4, offset = 0x4, fixed_abs, tag = 'smem constant byte address 0x4 - core index']
  #allocation1 [shape = 'u32[144,128]{1,0:T(1,128)}', space=vmem, size = 0x12000, scoped, tag = 'internal scratch']
  %s0 = inlined_call_operand.vmem [shape: f32[2,1,32], index: 0, kind: input, shape index: {}]
  %s1 = inlined_call_operand.vmem [shape: f32[2,16,32], index: 1, kind: input, shape index: {}]
  %s2 = inlined_call_operand.vmem [shape: f32[2,16,32], index: 2, kind: input, shape index: {}]
  %s3 = inlined_call_operand.vmem [shape: bf16[32,32], index: 3, kind: input, shape index: {}]
  %s4 = inlined_call_operand.vmem [shape: f32[1,32], index: 4, kind: input, shape index: {}]
  %s5 = inlined_call_operand.vmem [shape: f32[1,32], index: 5, kind: input, shape index: {}]
  %s6 = inlined_call_operand.vmem [shape: f32[2,16,32], index: 6, kind: output, shape index: {}]
  %s7 = sld [smem:[#allocation0]]
  $region57: #{ldp_projector_forward.7} parent=0
    _
  %s9 = ssub.s32 1, %s7
  %s10 = scalar_select 0, %s9, %s7
  loop: start=0, step=1, limit=4
  $region2: #{ldp_projector_forward.7} parent=0 // loop_pre_header
    _
  $region3: #{ldp_projector_forward.7} parent=0 // loop_header
    %s12 = sphi 0, %s16
    %p13 = scmp.ge.s32.totalorder %s12, 4
    %s19 = sphi 0, %s31
    %s20 = sphi 0, %s27
    %s21 = sphi 0, %s19
    %s22 = sphi 0, %s20
    %s23 = sphi 0, %s21
    %s24 = sphi 0, %s22
    %s34 = sphi 0, %s36
    %s37 = sphi 0, %s34
    %s38 = sphi 0, %s37
    %s54 = sphi 0, %s38
    %s62 = sphi 0, %s64
    %s65 = sphi 0, %s62
    %s66 = sphi 0, %s65
    %s82 = sphi 0, %s66
    %s90 = sphi 0, %s92
    %s93 = sphi 0, %s90
    %s94 = sphi 0, %s93
    %s110 = sphi 0, %s94
    %s114 = sphi 0, %s114
    %s116 = sphi 0, %s114
    %s117 = sphi 0, %s116
    %s131 = sphi 0, %s117
    %s135 = sphi 0, %s135
    %s137 = sphi 0, %s135
    %s138 = sphi 0, %s137
    %s152 = sphi 0, %s138
    %s156 = sphi 0, %s156
    %s158 = sphi 0, %s156
    %s159 = sphi 0, %s158
    %s173 = sphi 0, %s159
    %s181 = sphi 0, %s183
    %s184 = sphi 0, %s181
    %s185 = sphi 0, %s184
    %s201 = sphi 0, %s185
  $region4: #{ldp_projector_forward.7} parent=0 // loop_header_branch
    %15 = sbr.rel (%p13) target = $region8
  $region5: #{ldp_projector_forward.7} parent=0 // loop_body
    %s17 = ssub.s32 %s12, 1
    %s18 = ssub.s32 %s12, 2
    %s25 = sadd.s32 1, %s20
    %p26 = scmp.ge.s32.totalorder %s25, 1
    %s27 = scalar_select %p26, 0, %s25
    %s28 = sadd.s32 1, %s19
    %s29 = scalar_select %p26, %s28, %s19
    %p30 = scmp.ge.s32.totalorder %s29, 2
    %s31 = scalar_select %p30, 0, %s29
    %s32 = ssub.s32 %s19, %s31
    %p33 = scmp.eq.s32.totalorder %s32, 0
    %s35 = sadd.s32 %s34, 1
    %s36 = scalar_select %p33, %s34, %s35
    %p39 = pneg %p33
    %p40 = scmp.eq.s32.totalorder %s12, 1
    %p41 = por %p39, %p40
    %p42 = scmp.ne.s32.totalorder %s34, %s37
    %p43 = scmp.eq.s32.totalorder %s12, 0
    %p44 = por %p42, %p43
    %p45 = scmp.ne.s32.totalorder %s34, %s37
    %p46 = scmp.eq.s32.totalorder %s17, 1
    %p47 = por %p45, %p46
    %p48 = scmp.ne.s32.totalorder %s37, %s38
    %p49 = scmp.eq.s32.totalorder %s17, 0
    %p50 = por %p48, %p49
    %p51 = scmp.ne.s32.totalorder %s37, %s38
    %p52 = scmp.eq.s32.totalorder %s18, 1
    %p53 = por %p51, %p52
    %p55 = scmp.ne.s32.totalorder %s38, %s54
    %p56 = scmp.eq.s32.totalorder %s18, 0
    %p57 = por %p55, %p56
    %s58 = ssub.s32 %s19, %s31
    %s59 = ssub.s32 %s20, %s27
    %s60 = sor.u32 %s58, %s59
    %p61 = scmp.eq.s32.totalorder %s60, 0
    %s63 = sadd.s32 %s62, 1
    %s64 = scalar_select %p61, %s62, %s63
    %p67 = pneg %p61
    %p68 = scmp.eq.s32.totalorder %s12, 1
    %p69 = por %p67, %p68
    %p70 = scmp.ne.s32.totalorder %s62, %s65
    %p71 = scmp.eq.s32.totalorder %s12, 0
    %p72 = por %p70, %p71
    %p73 = scmp.ne.s32.totalorder %s62, %s65
    %p74 = scmp.eq.s32.totalorder %s17, 1
    %p75 = por %p73, %p74
    %p76 = scmp.ne.s32.totalorder %s65, %s66
    %p77 = scmp.eq.s32.totalorder %s17, 0
    %p78 = por %p76, %p77
    %p79 = scmp.ne.s32.totalorder %s65, %s66
    %p80 = scmp.eq.s32.totalorder %s18, 1
    %p81 = por %p79, %p80
    %p83 = scmp.ne.s32.totalorder %s66, %s82
    %p84 = scmp.eq.s32.totalorder %s18, 0
    %p85 = por %p83, %p84
    %s86 = ssub.s32 %s19, %s31
    %s87 = ssub.s32 %s20, %s27
    %s88 = sor.u32 %s86, %s87
    %p89 = scmp.eq.s32.totalorder %s88, 0
    %s91 = sadd.s32 %s90, 1
    %s92 = scalar_select %p89, %s90, %s91
    %p95 = pneg %p89
    %p96 = scmp.eq.s32.totalorder %s12, 1
    %p97 = por %p95, %p96
    %p98 = scmp.ne.s32.totalorder %s90, %s93
    %p99 = scmp.eq.s32.totalorder %s12, 0
    %p100 = por %p98, %p99
    %p101 = scmp.ne.s32.totalorder %s90, %s93
    %p102 = scmp.eq.s32.totalorder %s17, 1
    %p103 = por %p101, %p102
    %p104 = scmp.ne.s32.totalorder %s93, %s94
    %p105 = scmp.eq.s32.totalorder %s17, 0
    %p106 = por %p104, %p105
    %p107 = scmp.ne.s32.totalorder %s93, %s94
    %p108 = scmp.eq.s32.totalorder %s18, 1
    %p109 = por %p107, %p108
    %p111 = scmp.ne.s32.totalorder %s94, %s110
    %p112 = scmp.eq.s32.totalorder %s18, 0
    %p113 = por %p111, %p112
    %s115 = sadd.s32 %s114, 1
    %p118 = scmp.eq.s32.totalorder %s12, 1
    %p119 = scmp.ne.s32.totalorder %s114, %s116
    %p120 = scmp.eq.s32.totalorder %s12, 0
    %p121 = por %p119, %p120
    %p122 = scmp.ne.s32.totalorder %s114, %s116
    %p123 = scmp.eq.s32.totalorder %s17, 1
    %p124 = por %p122, %p123
    %p125 = scmp.ne.s32.totalorder %s116, %s117
    %p126 = scmp.eq.s32.totalorder %s17, 0
    %p127 = por %p125, %p126
    %p128 = scmp.ne.s32.totalorder %s116, %s117
    %p129 = scmp.eq.s32.totalorder %s18, 1
    %p130 = por %p128, %p129
    %p132 = scmp.ne.s32.totalorder %s117, %s131
    %p133 = scmp.eq.s32.totalorder %s18, 0
    %p134 = por %p132, %p133
    %s136 = sadd.s32 %s135, 1
    %p139 = scmp.eq.s32.totalorder %s12, 1
    %p140 = scmp.ne.s32.totalorder %s135, %s137
    %p141 = scmp.eq.s32.totalorder %s12, 0
    %p142 = por %p140, %p141
    %p143 = scmp.ne.s32.totalorder %s135, %s137
    %p144 = scmp.eq.s32.totalorder %s17, 1
    %p145 = por %p143, %p144
    %p146 = scmp.ne.s32.totalorder %s137, %s138
    %p147 = scmp.eq.s32.totalorder %s17, 0
    %p148 = por %p146, %p147
    %p149 = scmp.ne.s32.totalorder %s137, %s138
    %p150 = scmp.eq.s32.totalorder %s18, 1
    %p151 = por %p149, %p150
    %p153 = scmp.ne.s32.totalorder %s138, %s152
    %p154 = scmp.eq.s32.totalorder %s18, 0
    %p155 = por %p153, %p154
    %s157 = sadd.s32 %s156, 1
    %p160 = scmp.eq.s32.totalorder %s12, 1
    %p161 = scmp.ne.s32.totalorder %s156, %s158
    %p162 = scmp.eq.s32.totalorder %s12, 0
    %p163 = por %p161, %p162
    %p164 = scmp.ne.s32.totalorder %s156, %s158
    %p165 = scmp.eq.s32.totalorder %s17, 1
    %p166 = por %p164, %p165
    %p167 = scmp.ne.s32.totalorder %s158, %s159
    %p168 = scmp.eq.s32.totalorder %s17, 0
    %p169 = por %p167, %p168
    %p170 = scmp.ne.s32.totalorder %s158, %s159
    %p171 = scmp.eq.s32.totalorder %s18, 1
    %p172 = por %p170, %p171
    %p174 = scmp.ne.s32.totalorder %s159, %s173
    %p175 = scmp.eq.s32.totalorder %s18, 0
    %p176 = por %p174, %p175
    %s177 = ssub.s32 %s19, %s31
    %s178 = ssub.s32 %s20, %s27
    %s179 = sor.u32 %s177, %s178
    %p180 = scmp.eq.s32.totalorder %s179, 0
    %s182 = sadd.s32 %s181, 1
    %s183 = scalar_select %p180, %s181, %s182
    %p186 = pneg %p180
    %p187 = scmp.eq.s32.totalorder %s12, 1
    %p188 = por %p186, %p187
    %p189 = scmp.ne.s32.totalorder %s181, %s184
    %p190 = scmp.eq.s32.totalorder %s12, 0
    %p191 = por %p189, %p190
    %p192 = scmp.ne.s32.totalorder %s181, %s184
    %p193 = scmp.eq.s32.totalorder %s17, 1
    %p194 = por %p192, %p193
    %p195 = scmp.ne.s32.totalorder %s184, %s185
    %p196 = scmp.eq.s32.totalorder %s17, 0
    %p197 = por %p195, %p196
    %p198 = scmp.ne.s32.totalorder %s184, %s185
    %p199 = scmp.eq.s32.totalorder %s18, 1
    %p200 = por %p198, %p199
    %p202 = scmp.ne.s32.totalorder %s185, %s201
    %p203 = scmp.eq.s32.totalorder %s18, 0
    %p204 = por %p202, %p203
    %p205 = scmp.le.s32.totalorder 1, %s12
    %p206 = scmp.lt.s32.totalorder %s12, 3
    %p207 = pnand %p205, %p206
    %p208 = pneg %p207
    // Predicated region
    $region9: #{ldp_projector_forward.7} parent=5 // pred_check
      _
    $region10: #{ldp_projector_forward.7} parent=5 // pred_check_branch
      %210 = sbr.rel (%p207) target = $region12
    $region11: #{ldp_projector_forward.7} parent=5 // pred_region
      %s211 = ssub.s32 %s12, 1
      // Predicated region
      $region13: #{ldp_projector_forward.7} parent=11 // pred_check
        %p212 = pneg %p127
      $region14: #{ldp_projector_forward.7} parent=11 // pred_check_branch
        %214 = sbr.rel (%p212) target = $region16
      $region15: #{ldp_projector_forward.7} parent=11 // pred_region
        _
      $region16: #{ldp_projector_forward.7} parent=11 // pred_fallthru
        _
      // Predicated region
      $region17: #{ldp_projector_forward.7} parent=11 // pred_check
        %p215 = pneg %p148
      $region18: #{ldp_projector_forward.7} parent=11 // pred_check_branch
        %217 = sbr.rel (%p215) target = $region20
      $region19: #{ldp_projector_forward.7} parent=11 // pred_region
        _
      $region20: #{ldp_projector_forward.7} parent=11 // pred_fallthru
        _
      // Predicated region
      $region21: #{ldp_projector_forward.7} parent=11 // pred_check
        %p218 = pneg %p169
      $region22: #{ldp_projector_forward.7} parent=11 // pred_check_branch
        %220 = sbr.rel (%p218) target = $region24
      $region23: #{ldp_projector_forward.7} parent=11 // pred_region
        _
      $region24: #{ldp_projector_forward.7} parent=11 // pred_fallthru
        _
    $region12: #{ldp_projector_forward.7} parent=5 // pred_fallthru
      _
    %p221 = scmp.lt.s32.totalorder %s12, 2
    // Predicated region
    $region25: #{ldp_projector_forward.7} parent=5 // pred_check
      %p222 = pneg %p221
    $region26: #{ldp_projector_forward.7} parent=5 // pred_check_branch
      %224 = sbr.rel (%p222) target = $region28
    $region27: #{ldp_projector_forward.7} parent=5 // pred_region
      // Predicated region
      $region29: #{ldp_projector_forward.7} parent=27 // pred_check
        %p225 = pneg %p44
      $region30: #{ldp_projector_forward.7} parent=27 // pred_check_branch
        %227 = sbr.rel (%p225) target = $region32
      $region31: #{ldp_projector_forward.7} parent=27 // pred_region
        %p228 = scmp.lt.s32.totalorder %s19, 1
        %s229 = scalar_select %p228, %s19, 1
        %s230 = scalar_lea.vmem %s0, %s229
      $region32: #{ldp_projector_forward.7} parent=27 // pred_fallthru
        _
      // Predicated region
      $region33: #{ldp_projector_forward.7} parent=27 // pred_check
        %p231 = pneg %p72
      $region34: #{ldp_projector_forward.7} parent=27 // pred_check_branch
        %233 = sbr.rel (%p231) target = $region36
      $region35: #{ldp_projector_forward.7} parent=27 // pred_region
        %s234 = smul.u32 2, %s20
        %p235 = scmp.lt.s32.totalorder %s19, 1
        %s236 = scalar_select %p235, %s19, 1
        %p237 = scmp.lt.s32.totalorder %s234, 1
        %s238 = scalar_select %p237, %s234, 1
        %s239 = smul.addr %s236, 2
        %s240 = sadd.s32 %s238, %s239
        %s241 = smul.addr %s240, 8
        %s242 = scalar_lea.vmem %s1, %s241
        %s243 = smul.u32 2, %s20
      $region36: #{ldp_projector_forward.7} parent=27 // pred_fallthru
        _
      // Predicated region
      $region37: #{ldp_projector_forward.7} parent=27 // pred_check
        %p244 = pneg %p100
      $region38: #{ldp_projector_forward.7} parent=27 // pred_check_branch
        %246 = sbr.rel (%p244) target = $region40
      $region39: #{ldp_projector_forward.7} parent=27 // pred_region
        %s247 = smul.u32 2, %s20
        %p248 = scmp.lt.s32.totalorder %s19, 1
        %s249 = scalar_select %p248, %s19, 1
        %p250 = scmp.lt.s32.totalorder %s247, 1
        %s251 = scalar_select %p250, %s247, 1
        %s252 = smul.addr %s249, 2
        %s253 = sadd.s32 %s251, %s252
        %s254 = smul.addr %s253, 8
        %s255 = scalar_lea.vmem %s2, %s254
        %s256 = smul.u32 2, %s20
      $region40: #{ldp_projector_forward.7} parent=27 // pred_fallthru
        _
    $region28: #{ldp_projector_forward.7} parent=5 // pred_fallthru
      _
    %p257 = scmp.le.s32.totalorder 1, %s12
    %p258 = scmp.lt.s32.totalorder %s12, 3
    %p259 = pnand %p257, %p258
    %p260 = pneg %p259
    // Predicated region
    $region41: #{ldp_projector_forward.7} parent=5 // pred_check
      _
    $region42: #{ldp_projector_forward.7} parent=5 // pred_check_branch
      %262 = sbr.rel (%p259) target = $region44
    $region43: #{ldp_projector_forward.7} parent=5 // pred_region
      %s263 = ssub.s32 %s12, 1
      %p264 = scmp.lt.s32.totalorder %s21, 1
      %s265 = scalar_select %p264, %s21, 1
      %s266 = scalar_lea.vmem %s0, %s265
      %p267 = pneg %p50
      %p268 = pneg %p47
      %s269 = smul.u32 2, %s22
      %p270 = scmp.lt.s32.totalorder %s21, 1
      %s271 = scalar_select %p270, %s21, 1
      %p272 = scmp.lt.s32.totalorder %s269, 1
      %s273 = scalar_select %p272, %s269, 1
      %s274 = smul.addr %s271, 2
      %s275 = sadd.s32 %s273, %s274
      %s276 = smul.addr %s275, 8
      %s277 = scalar_lea.vmem %s1, %s276
      %p278 = pneg %p78
      %p279 = pneg %p75
      %s280 = smul.u32 2, %s22
      %p281 = scmp.lt.s32.totalorder %s21, 1
      %s282 = scalar_select %p281, %s21, 1
      %p283 = scmp.lt.s32.totalorder %s280, 1
      %s284 = scalar_select %p283, %s280, 1
      %s285 = smul.addr %s282, 2
      %s286 = sadd.s32 %s284, %s285
      %s287 = smul.addr %s286, 8
      %s288 = scalar_lea.vmem %s2, %s287
      %p289 = pneg %p106
      %p290 = pneg %p103
      %p291 = pneg %p127
      %p292 = pneg %p124
      %p293 = pneg %p148
      %p294 = pneg %p145
      %p295 = pneg %p169
      %p296 = pneg %p166
      %p297 = pneg %p197
      %p298 = pneg %p194
      %s299 = smul.u32 2, %s22
      %p300 = scmp.lt.s32.totalorder %s21, 1
      %s301 = scalar_select %p300, %s21, 1
      %p302 = scmp.lt.s32.totalorder %s299, 1
      %s303 = scalar_select %p302, %s299, 1
      %s304 = smul.addr %s301, 2
      %s305 = sadd.s32 %s303, %s304
      %s306 = smul.addr %s305, 8
      %s307 = scalar_lea.vmem %s6, %s306
      %p308 = scmp.lt.s32.totalorder %s21, 1
      %s309 = scalar_select %p308, %s21, 1
      %s310 = scalar_lea.vmem %s0, %s309
      %s311 = smul.u32 2, %s22
      %p312 = scmp.lt.s32.totalorder %s21, 1
      %s313 = scalar_select %p312, %s21, 1
      %p314 = scmp.lt.s32.totalorder %s311, 1
      %s315 = scalar_select %p314, %s311, 1
      %s316 = smul.addr %s313, 2
      %s317 = sadd.s32 %s315, %s316
      %s318 = smul.addr %s317, 8
      %s319 = scalar_lea.vmem %s1, %s318
      %s320 = smul.u32 2, %s22
      %s321 = smul.u32 2, %s22
      %p322 = scmp.lt.s32.totalorder %s21, 1
      %s323 = scalar_select %p322, %s21, 1
      %p324 = scmp.lt.s32.totalorder %s321, 1
      %s325 = scalar_select %p324, %s321, 1
      %s326 = smul.addr %s323, 2
      %s327 = sadd.s32 %s325, %s326
      %s328 = smul.addr %s327, 8
      %s329 = scalar_lea.vmem %s2, %s328
      %s330 = smul.u32 2, %s22
      %s331 = smul.u32 2, %s22
      %p332 = scmp.lt.s32.totalorder %s21, 1
      %s333 = scalar_select %p332, %s21, 1
      %p334 = scmp.lt.s32.totalorder %s331, 1
      %s335 = scalar_select %p334, %s331, 1
      %s336 = smul.addr %s333, 2
      %s337 = sadd.s32 %s335, %s336
      %s338 = smul.addr %s337, 8
      %s339 = scalar_lea.vmem %s6, %s338
      %s340 = smul.u32 2, %s22
      %v342 = vld [vmem:[%s310] sm:$0x1]
      %v343 = vld [vmem:[%s319] sm:$0xff]
      %v344 = vld [vmem:[%s319 + $0x8] sm:$0xff]
      %v346 = vlaneseq
      %v347 = vshrl.u32 %v346, 7
      %v348 = vsub.s32 0, %v347
      %v349 = vrot.slane %v342, %v348
      %v351 = vmul.f32 %v343, %v349
      %v352 = vmul.f32 %v344, %v349
      %v353 = vld [vmem:[%s3] sm:$0xf]
      %v354 = vld [vmem:[%s3 + $0x4] sm:$0xf]
      %v355 = vld [vmem:[%s3 + $0x8] sm:$0xf]
      %v356 = vld [vmem:[%s3 + $0xc] sm:$0xf]
      %v357 = vpack.c.bf16 %v352, %v351
      %v362 = vunpack.c.l.b16 %v353
      %v363 = vunpack.c.l.b16 %v354
      %v364 = vunpack.c.l.b16 %v355
      %v365 = vunpack.c.l.b16 %v356
      %v366 = vpack.c.b16 %v363, %v362
      %v367 = vpack.c.b16 %v365, %v364
      %vm370 = vcmask 261120
      %v372 = vsel %vm370, %v357, 0
      %374 = vmatprep.subr.bf16.mxu0 0
      %375 = vmatpush1.bf16.msra.mxu0 %v366
      %376 = vmatprep.subr.bf16.mxu0 0
      %377 = vmatpush1.bf16.msra.mxu0 %v367
      %378 = vmatprep.subr.bf16.mxu0 0
      %379 = vmatpush1.bf16.msra.mxu0 0
      %380 = vmatprep.subr.bf16.mxu0 0
      %381 = vmatpush1.bf16.msra.mxu0 0
      %382 = vmatprep.subr.bf16.mxu0 0
      %383 = vmatpush1.bf16.msra.mxu0 0
      %384 = vmatprep.subr.bf16.mxu0 0
      %385 = vmatpush1.bf16.msra.mxu0 0
      %386 = vmatprep.subr.bf16.mxu0 0
      %387 = vmatpush1.bf16.msra.mxu0 0
      %388 = vmatprep.subr.bf16.mxu0 0
      %389 = vmatpush1.bf16.msra.mxu0 0
      %390 = vmatprep.subr.bf16.mxu0 0
      %391 = vmatpush1.bf16.msra.mxu0 0
      %392 = vmatprep.subr.bf16.mxu0 0
      %393 = vmatpush1.bf16.msra.mxu0 0
      %394 = vmatprep.subr.bf16.mxu0 0
      %395 = vmatpush1.bf16.msra.mxu0 0
      %396 = vmatprep.subr.bf16.mxu0 0
      %397 = vmatpush1.bf16.msra.mxu0 0
      %398 = vmatprep.subr.bf16.mxu0 0
      %399 = vmatpush1.bf16.msra.mxu0 0
      %400 = vmatprep.subr.bf16.mxu0 0
      %401 = vmatpush1.bf16.msra.mxu0 0
      %402 = vmatprep.subr.bf16.mxu0 0
      %403 = vmatpush1.bf16.msra.mxu0 0
      %404 = vmatprep.subr.bf16.mxu0 0
      %405 = vmatpush1.bf16.msra.mxu0 0
      %406 = vmatprep.mubr.bf16.mxu0 0
      %407 = vmatmul.mubr.bf16.gmra.mrb[0].mxu0 %v372
      %v408 = vpop.f32.mrb[0].mxu0
      %v409 = vadd.f32 0.0, %v408
      %v410 = vpop.f32.mrb[0].mxu0
      %v411 = vpop.f32.mrb[0].mxu0
      %v412 = vadd.f32 0.0, %v411
      %v413 = vpop.f32.mrb[0].mxu0
      %414 = vdwg.mxu0
      %v415 = vld [vmem:[%s4] sm:$0x1]
      %v416 = vld [vmem:[%s5] sm:$0x1]
      %v417 = vsel %vm370, %v409, 0.0
      %418 = vadd.xlane.f32.xlu0 %v417
      %v419 = vpop.xlane.xlu0 %418
      %v420 = vsel %vm370, %v412, 0.0
      %421 = vadd.xlane.f32.xlu0 %v420
      %v422 = vpop.xlane.xlu0 %421
      %v423 = vrcp.pop 32.0
      %v424 = vmul.f32 %v419, %v423
      %v425 = vmul.f32 %v422, %v423
      %v426 = vsub.f32 %v409, %v424
      %v427 = vsub.f32 %v412, %v425
      %v428 = vmul.f32 %v426, %v426
      %v429 = vmul.f32 %v427, %v427
      %v430 = vsel %vm370, %v428, 0.0
      %431 = vadd.xlane.f32.xlu0 %v430
      %v432 = vpop.xlane.xlu0 %431
      %v433 = vsel %vm370, %v429, 0.0
      %434 = vadd.xlane.f32.xlu0 %v433
      %v435 = vpop.xlane.xlu0 %434
      %v436 = vmul.f32 %v432, %v423
      %v437 = vmul.f32 %v435, %v423
      %v438 = vadd.f32 %v436, 1e-05
      %v439 = vadd.f32 %v437, 1e-05
      %v440 = vrsqrt.pop %v438
      %v441 = vrsqrt.pop %v439
      %v442 = vmul.f32 %v426, %v440
      %v443 = vmul.f32 %v427, %v441
      %v445 = vlaneseq
      %v446 = vshrl.u32 %v445, 7
      %v447 = vsub.s32 0, %v446
      %v448 = vrot.slane %v415, %v447
      %v450 = vmul.f32 %v442, %v448
      %v451 = vmul.f32 %v443, %v448
      %v453 = vlaneseq
      %v454 = vshrl.u32 %v453, 7
      %v455 = vsub.s32 0, %v454
      %v456 = vrot.slane %v416, %v455
      %v458 = vadd.f32 %v450, %v456
      %v459 = vadd.f32 %v451, %v456
      %v460 = vld [vmem:[%s329] sm:$0xff]
      %v461 = vld [vmem:[%s329 + $0x8] sm:$0xff]
      %v462 = vadd.f32 %v458, %v460
      %v463 = vadd.f32 %v459, %v461
      %464 = vst.msk [vmem:[%s339] sm:$0xff] %vm370, %v462
      %465 = vst.msk [vmem:[%s339 + $0x8] sm:$0xff] %vm370, %v463
      %s466 = smul.u32 2, %s22
      %p467 = scmp.lt.s32.totalorder %s21, 1
      %s468 = scalar_select %p467, %s21, 1
      %p469 = scmp.lt.s32.totalorder %s466, 1
      %s470 = scalar_select %p469, %s466, 1
      %s471 = smul.addr %s468, 2
      %s472 = sadd.s32 %s470, %s471
      %s473 = smul.addr %s472, 8
      %s474 = scalar_lea.vmem %s6, %s473
      // Predicated region
      $region45: #{ldp_projector_forward.7} parent=43 // pred_check
        %p475 = pneg %p194
      $region46: #{ldp_projector_forward.7} parent=43 // pred_check_branch
        %477 = sbr.rel (%p475) target = $region48
      $region47: #{ldp_projector_forward.7} parent=43 // pred_region
        %s478 = smul.u32 2, %s22
      $region48: #{ldp_projector_forward.7} parent=43 // pred_fallthru
        _
    $region44: #{ldp_projector_forward.7} parent=5 // pred_fallthru
      _
    %p479 = scmp.le.s32.totalorder 2, %s12
    // Predicated region
    $region49: #{ldp_projector_forward.7} parent=5 // pred_check
      %p480 = pneg %p479
    $region50: #{ldp_projector_forward.7} parent=5 // pred_check_branch
      %482 = sbr.rel (%p480) target = $region52
    $region51: #{ldp_projector_forward.7} parent=5 // pred_region
      %s483 = ssub.s32 %s12, 2
      // Predicated region
      $region53: #{ldp_projector_forward.7} parent=51 // pred_check
        %p484 = pneg %p200
      $region54: #{ldp_projector_forward.7} parent=51 // pred_check_branch
        %486 = sbr.rel (%p484) target = $region56
      $region55: #{ldp_projector_forward.7} parent=51 // pred_region
        %s487 = smul.u32 2, %s24
        %p488 = scmp.lt.s32.totalorder %s23, 1
        %s489 = scalar_select %p488, %s23, 1
        %p490 = scmp.lt.s32.totalorder %s487, 1
        %s491 = scalar_select %p490, %s487, 1
        %s492 = smul.addr %s489, 2
        %s493 = sadd.s32 %s491, %s492
        %s494 = smul.addr %s493, 8
        %s495 = scalar_lea.vmem %s6, %s494
      $region56: #{ldp_projector_forward.7} parent=51 // pred_fallthru
        _
    $region52: #{ldp_projector_forward.7} parent=5 // pred_fallthru
      _
  $region6: #{ldp_projector_forward.7} parent=0 // loop_footer
    %s16 = sadd.s32 1, %s12
  $region7: #{ldp_projector_forward.7} parent=0 // loop_footer_branch
    %11 = sbr.rel target = $region3
  $region8: #{ldp_projector_forward.7} parent=0 // loop_exit
    _

// kernel: ldp_projector_forward.8
$region0: #{ldp_projector_forward.8}
  #allocation0 [shape = 'u32[]', space=smem, size = 0x4, offset = 0x4, fixed_abs, tag = 'smem constant byte address 0x4 - core index']
  #allocation1 [shape = 'u32[144,128]{1,0:T(1,128)}', space=vmem, size = 0x12000, scoped, tag = 'internal scratch']
  #allocation2 [shape = 'f32[6,6,32]{2,1,0:T(8,128)}', space=vmem, size = 0x6000, scoped, tag = 'scratch operand']
  %s0 = inlined_call_operand.vmem [shape: f32[2,4,4,32], index: 0, kind: input, shape index: {}]
  %s1 = inlined_call_operand.vmem [shape: f32[9,32], index: 1, kind: input, shape index: {}]
  %s2 = inlined_call_operand.vmem [shape: f32[1,32], index: 2, kind: input, shape index: {}]
  %s3 = inlined_call_operand.vmem [shape: f32[1,32], index: 3, kind: input, shape index: {}]
  %s4 = inlined_call_operand.vmem [shape: bf16[32,8], index: 4, kind: input, shape index: {}]
  %s5 = inlined_call_operand.vmem [shape: f32[1,8], index: 5, kind: input, shape index: {}]
  %s6 = inlined_call_operand.vmem [shape: bf16[8,32], index: 6, kind: input, shape index: {}]
  %s7 = inlined_call_operand.vmem [shape: f32[1,32], index: 7, kind: input, shape index: {}]
  %s8 = inlined_call_operand.vmem [shape: f32[2,4,4,32], index: 8, kind: output, shape index: {0}]
  %s9 = inlined_call_operand.hbm [shape: f32[2,1,32], index: 9, kind: output, shape index: {1}]
  %10 = xla_tuple %s8, %s9
  %s11 = sld [smem:[#allocation0]]
  $region73: #{ldp_projector_forward.8} parent=0
    _
  %s13 = ssub.s32 1, %s11
  %s14 = scalar_select 0, %s13, %s11
  $region1: #{ldp_projector_forward.8} parent=0
    #allocation3 [shape = 'u8[1024]{0}', space=vmem, size = 0x400, scoped, tag = 'output window, operand 1']
    #allocation4 [shape = 's32[2]{0}', space=sflag, size = 0x8, scoped, tag = 'scoped memory for ldp_projector_forward.8']
    %15 = vsyncpa [#allocation4], 0
    %s16 = scalar_lea.sflag [#allocation4], 1
    %17 = vsyncpa %s16, 0
    loop: start=0, step=1, limit=4
    $region2: #{ldp_projector_forward.8} parent=1 // loop_pre_header
      _
    $region3: #{ldp_projector_forward.8} parent=1 // loop_header
      %s19 = sphi 0, %s23
      %p20 = scmp.ge.s32.totalorder %s19, 4
      %s29 = sphi 0, %s31
      %s32 = sphi 0, %s29
      %s33 = sphi 0, %s32
      %s49 = sphi 0, %s33
      %s53 = sphi 0, %s53
      %s55 = sphi 0, %s53
      %s56 = sphi 0, %s55
      %s70 = sphi 0, %s56
      %s74 = sphi 0, %s74
      %s76 = sphi 0, %s74
      %s77 = sphi 0, %s76
      %s91 = sphi 0, %s77
      %s95 = sphi 0, %s95
      %s97 = sphi 0, %s95
      %s98 = sphi 0, %s97
      %s112 = sphi 0, %s98
      %s116 = sphi 0, %s116
      %s118 = sphi 0, %s116
      %s119 = sphi 0, %s118
      %s133 = sphi 0, %s119
      %s137 = sphi 0, %s137
      %s139 = sphi 0, %s137
      %s140 = sphi 0, %s139
      %s154 = sphi 0, %s140
      %s158 = sphi 0, %s158
      %s160 = sphi 0, %s158
      %s161 = sphi 0, %s160
      %s175 = sphi 0, %s161
      %s179 = sphi 0, %s179
      %s181 = sphi 0, %s179
      %s182 = sphi 0, %s181
      %s196 = sphi 0, %s182
      %s202 = sphi 0, %s204
      %s205 = sphi 0, %s202
      %s206 = sphi 0, %s205
      %s222 = sphi 0, %s206
      %s228 = sphi 0, %s230
      %s231 = sphi 0, %s228
      %s232 = sphi 0, %s231
      %s248 = sphi 0, %s232
    $region4: #{ldp_projector_forward.8} parent=1 // loop_header_branch
      %22 = sbr.rel (%p20) target = $region8
    $region5: #{ldp_projector_forward.8} parent=1 // loop_body
      %s24 = ssub.s32 %s19, 1
      %s25 = ssub.s32 %s19, 2
      %s26 = sadd.s32 %s19, 1
      %s27 = ssub.s32 %s19, %s26
      %p28 = scmp.eq.s32.totalorder %s27, 0
      %s30 = sadd.s32 %s29, 1
      %s31 = scalar_select %p28, %s29, %s30
      %p34 = pneg %p28
      %p35 = scmp.eq.s32.totalorder %s19, 1
      %p36 = por %p34, %p35
      %p37 = scmp.ne.s32.totalorder %s29, %s32
      %p38 = scmp.eq.s32.totalorder %s19, 0
      %p39 = por %p37, %p38
      %p40 = scmp.ne.s32.totalorder %s29, %s32
      %p41 = scmp.eq.s32.totalorder %s24, 1
      %p42 = por %p40, %p41
      %p43 = scmp.ne.s32.totalorder %s32, %s33
      %p44 = scmp.eq.s32.totalorder %s24, 0
      %p45 = por %p43, %p44
      %p46 = scmp.ne.s32.totalorder %s32, %s33
      %p47 = scmp.eq.s32.totalorder %s25, 1
      %p48 = por %p46, %p47
      %p50 = scmp.ne.s32.totalorder %s33, %s49
      %p51 = scmp.eq.s32.totalorder %s25, 0
      %p52 = por %p50, %p51
      %s54 = sadd.s32 %s53, 1
      %p57 = scmp.eq.s32.totalorder %s19, 1
      %p58 = scmp.ne.s32.totalorder %s53, %s55
      %p59 = scmp.eq.s32.totalorder %s19, 0
      %p60 = por %p58, %p59
      %p61 = scmp.ne.s32.totalorder %s53, %s55
      %p62 = scmp.eq.s32.totalorder %s24, 1
      %p63 = por %p61, %p62
      %p64 = scmp.ne.s32.totalorder %s55, %s56
      %p65 = scmp.eq.s32.totalorder %s24, 0
      %p66 = por %p64, %p65
      %p67 = scmp.ne.s32.totalorder %s55, %s56
      %p68 = scmp.eq.s32.totalorder %s25, 1
      %p69 = por %p67, %p68
      %p71 = scmp.ne.s32.totalorder %s56, %s70
      %p72 = scmp.eq.s32.totalorder %s25, 0
      %p73 = por %p71, %p72
      %s75 = sadd.s32 %s74, 1
      %p78 = scmp.eq.s32.totalorder %s19, 1
      %p79 = scmp.ne.s32.totalorder %s74, %s76
      %p80 = scmp.eq.s32.totalorder %s19, 0
      %p81 = por %p79, %p80
      %p82 = scmp.ne.s32.totalorder %s74, %s76
      %p83 = scmp.eq.s32.totalorder %s24, 1
      %p84 = por %p82, %p83
      %p85 = scmp.ne.s32.totalorder %s76, %s77
      %p86 = scmp.eq.s32.totalorder %s24, 0
      %p87 = por %p85, %p86
      %p88 = scmp.ne.s32.totalorder %s76, %s77
      %p89 = scmp.eq.s32.totalorder %s25, 1
      %p90 = por %p88, %p89
      %p92 = scmp.ne.s32.totalorder %s77, %s91
      %p93 = scmp.eq.s32.totalorder %s25, 0
      %p94 = por %p92, %p93
      %s96 = sadd.s32 %s95, 1
      %p99 = scmp.eq.s32.totalorder %s19, 1
      %p100 = scmp.ne.s32.totalorder %s95, %s97
      %p101 = scmp.eq.s32.totalorder %s19, 0
      %p102 = por %p100, %p101
      %p103 = scmp.ne.s32.totalorder %s95, %s97
      %p104 = scmp.eq.s32.totalorder %s24, 1
      %p105 = por %p103, %p104
      %p106 = scmp.ne.s32.totalorder %s97, %s98
      %p107 = scmp.eq.s32.totalorder %s24, 0
      %p108 = por %p106, %p107
      %p109 = scmp.ne.s32.totalorder %s97, %s98
      %p110 = scmp.eq.s32.totalorder %s25, 1
      %p111 = por %p109, %p110
      %p113 = scmp.ne.s32.totalorder %s98, %s112
      %p114 = scmp.eq.s32.totalorder %s25, 0
      %p115 = por %p113, %p114
      %s117 = sadd.s32 %s116, 1
      %p120 = scmp.eq.s32.totalorder %s19, 1
      %p121 = scmp.ne.s32.totalorder %s116, %s118
      %p122 = scmp.eq.s32.totalorder %s19, 0
      %p123 = por %p121, %p122
      %p124 = scmp.ne.s32.totalorder %s116, %s118
      %p125 = scmp.eq.s32.totalorder %s24, 1
      %p126 = por %p124, %p125
      %p127 = scmp.ne.s32.totalorder %s118, %s119
      %p128 = scmp.eq.s32.totalorder %s24, 0
      %p129 = por %p127, %p128
      %p130 = scmp.ne.s32.totalorder %s118, %s119
      %p131 = scmp.eq.s32.totalorder %s25, 1
      %p132 = por %p130, %p131
      %p134 = scmp.ne.s32.totalorder %s119, %s133
      %p135 = scmp.eq.s32.totalorder %s25, 0
      %p136 = por %p134, %p135
      %s138 = sadd.s32 %s137, 1
      %p141 = scmp.eq.s32.totalorder %s19, 1
      %p142 = scmp.ne.s32.totalorder %s137, %s139
      %p143 = scmp.eq.s32.totalorder %s19, 0
      %p144 = por %p142, %p143
      %p145 = scmp.ne.s32.totalorder %s137, %s139
      %p146 = scmp.eq.s32.totalorder %s24, 1
      %p147 = por %p145, %p146
      %p148 = scmp.ne.s32.totalorder %s139, %s140
      %p149 = scmp.eq.s32.totalorder %s24, 0
      %p150 = por %p148, %p149
      %p151 = scmp.ne.s32.totalorder %s139, %s140
      %p152 = scmp.eq.s32.totalorder %s25, 1
      %p153 = por %p151, %p152
      %p155 = scmp.ne.s32.totalorder %s140, %s154
      %p156 = scmp.eq.s32.totalorder %s25, 0
      %p157 = por %p155, %p156
      %s159 = sadd.s32 %s158, 1
      %p162 = scmp.eq.s32.totalorder %s19, 1
      %p163 = scmp.ne.s32.totalorder %s158, %s160
      %p164 = scmp.eq.s32.totalorder %s19, 0
      %p165 = por %p163, %p164
      %p166 = scmp.ne.s32.totalorder %s158, %s160
      %p167 = scmp.eq.s32.totalorder %s24, 1
      %p168 = por %p166, %p167
      %p169 = scmp.ne.s32.totalorder %s160, %s161
      %p170 = scmp.eq.s32.totalorder %s24, 0
      %p171 = por %p169, %p170
      %p172 = scmp.ne.s32.totalorder %s160, %s161
      %p173 = scmp.eq.s32.totalorder %s25, 1
      %p174 = por %p172, %p173
      %p176 = scmp.ne.s32.totalorder %s161, %s175
      %p177 = scmp.eq.s32.totalorder %s25, 0
      %p178 = por %p176, %p177
      %s180 = sadd.s32 %s179, 1
      %p183 = scmp.eq.s32.totalorder %s19, 1
      %p184 = scmp.ne.s32.totalorder %s179, %s181
      %p185 = scmp.eq.s32.totalorder %s19, 0
      %p186 = por %p184, %p185
      %p187 = scmp.ne.s32.totalorder %s179, %s181
      %p188 = scmp.eq.s32.totalorder %s24, 1
      %p189 = por %p187, %p188
      %p190 = scmp.ne.s32.totalorder %s181, %s182
      %p191 = scmp.eq.s32.totalorder %s24, 0
      %p192 = por %p190, %p191
      %p193 = scmp.ne.s32.totalorder %s181, %s182
      %p194 = scmp.eq.s32.totalorder %s25, 1
      %p195 = por %p193, %p194
      %p197 = scmp.ne.s32.totalorder %s182, %s196
      %p198 = scmp.eq.s32.totalorder %s25, 0
      %p199 = por %p197, %p198
      %s200 = ssub.s32 %s19, %s26
      %p201 = scmp.eq.s32.totalorder %s200, 0
      %s203 = sadd.s32 %s202, 1
      %s204 = scalar_select %p201, %s202, %s203
      %p207 = pneg %p201
      %p208 = scmp.eq.s32.totalorder %s19, 1
      %p209 = por %p207, %p208
      %p210 = scmp.ne.s32.totalorder %s202, %s205
      %p211 = scmp.eq.s32.totalorder %s19, 0
      %p212 = por %p210, %p211
      %p213 = scmp.ne.s32.totalorder %s202, %s205
      %p214 = scmp.eq.s32.totalorder %s24, 1
      %p215 = por %p213, %p214
      %p216 = scmp.ne.s32.totalorder %s205, %s206
      %p217 = scmp.eq.s32.totalorder %s24, 0
      %p218 = por %p216, %p217
      %p219 = scmp.ne.s32.totalorder %s205, %s206
      %p220 = scmp.eq.s32.totalorder %s25, 1
      %p221 = por %p219, %p220
      %p223 = scmp.ne.s32.totalorder %s206, %s222
      %p224 = scmp.eq.s32.totalorder %s25, 0
      %p225 = por %p223, %p224
      %s226 = ssub.s32 %s19, %s26
      %p227 = scmp.eq.s32.totalorder %s226, 0
      %s229 = sadd.s32 %s228, 1
      %s230 = scalar_select %p227, %s228, %s229
      %p233 = pneg %p227
      %p234 = scmp.eq.s32.totalorder %s19, 1
      %p235 = por %p233, %p234
      %p236 = scmp.ne.s32.totalorder %s228, %s231
      %p237 = scmp.eq.s32.totalorder %s19, 0
      %p238 = por %p236, %p237
      %p239 = scmp.ne.s32.totalorder %s228, %s231
      %p240 = scmp.eq.s32.totalorder %s24, 1
      %p241 = por %p239, %p240
      %p242 = scmp.ne.s32.totalorder %s231, %s232
      %p243 = scmp.eq.s32.totalorder %s24, 0
      %p244 = por %p242, %p243
      %p245 = scmp.ne.s32.totalorder %s231, %s232
      %p246 = scmp.eq.s32.totalorder %s25, 1
      %p247 = por %p245, %p246
      %p249 = scmp.ne.s32.totalorder %s232, %s248
      %p250 = scmp.eq.s32.totalorder %s25, 0
      %p251 = por %p249, %p250
      %p252 = scmp.le.s32.totalorder 1, %s19
      %p253 = scmp.lt.s32.totalorder %s19, 3
      %p254 = pnand %p252, %p253
      %p255 = pneg %p254
      // Predicated region
      $region9: #{ldp_projector_forward.8} parent=5 // pred_check
        _
      $region10: #{ldp_projector_forward.8} parent=5 // pred_check_branch
        %257 = sbr.rel (%p254) target = $region12
      $region11: #{ldp_projector_forward.8} parent=5 // pred_region
        %s258 = ssub.s32 %s19, 1
        // Predicated region
        $region13: #{ldp_projector_forward.8} parent=11 // pred_check
          %p259 = pneg %p66
        $region14: #{ldp_projector_forward.8} parent=11 // pred_check_branch
          %261 = sbr.rel (%p259) target = $region16
        $region15: #{ldp_projector_forward.8} parent=11 // pred_region
          _
        $region16: #{ldp_projector_forward.8} parent=11 // pred_fallthru
          _
        // Predicated region
        $region17: #{ldp_projector_forward.8} parent=11 // pred_check
          %p262 = pneg %p87
        $region18: #{ldp_projector_forward.8} parent=11 // pred_check_branch
          %264 = sbr.rel (%p262) target = $region20
        $region19: #{ldp_projector_forward.8} parent=11 // pred_region
          _
        $region20: #{ldp_projector_forward.8} parent=11 // pred_fallthru
          _
        // Predicated region
        $region21: #{ldp_projector_forward.8} parent=11 // pred_check
          %p265 = pneg %p108
        $region22: #{ldp_projector_forward.8} parent=11 // pred_check_branch
          %267 = sbr.rel (%p265) target = $region24
        $region23: #{ldp_projector_forward.8} parent=11 // pred_region
          _
        $region24: #{ldp_projector_forward.8} parent=11 // pred_fallthru
          _
        // Predicated region
        $region25: #{ldp_projector_forward.8} parent=11 // pred_check
          %p268 = pneg %p129
        $region26: #{ldp_projector_forward.8} parent=11 // pred_check_branch
          %270 = sbr.rel (%p268) target = $region28
        $region27: #{ldp_projector_forward.8} parent=11 // pred_region
          _
        $region28: #{ldp_projector_forward.8} parent=11 // pred_fallthru
          _
        // Predicated region
        $region29: #{ldp_projector_forward.8} parent=11 // pred_check
          %p271 = pneg %p150
        $region30: #{ldp_projector_forward.8} parent=11 // pred_check_branch
          %273 = sbr.rel (%p271) target = $region32
        $region31: #{ldp_projector_forward.8} parent=11 // pred_region
          _
        $region32: #{ldp_projector_forward.8} parent=11 // pred_fallthru
          _
        // Predicated region
        $region33: #{ldp_projector_forward.8} parent=11 // pred_check
          %p274 = pneg %p171
        $region34: #{ldp_projector_forward.8} parent=11 // pred_check_branch
          %276 = sbr.rel (%p274) target = $region36
        $region35: #{ldp_projector_forward.8} parent=11 // pred_region
          _
        $region36: #{ldp_projector_forward.8} parent=11 // pred_fallthru
          _
        // Predicated region
        $region37: #{ldp_projector_forward.8} parent=11 // pred_check
          %p277 = pneg %p192
        $region38: #{ldp_projector_forward.8} parent=11 // pred_check_branch
          %279 = sbr.rel (%p277) target = $region40
        $region39: #{ldp_projector_forward.8} parent=11 // pred_region
          _
        $region40: #{ldp_projector_forward.8} parent=11 // pred_fallthru
          _
      $region12: #{ldp_projector_forward.8} parent=5 // pred_fallthru
        _
      %p280 = scmp.lt.s32.totalorder %s19, 2
      // Predicated region
      $region41: #{ldp_projector_forward.8} parent=5 // pred_check
        %p281 = pneg %p280
      $region42: #{ldp_projector_forward.8} parent=5 // pred_check_branch
        %283 = sbr.rel (%p281) target = $region44
      $region43: #{ldp_projector_forward.8} parent=5 // pred_region
        // Predicated region
        $region45: #{ldp_projector_forward.8} parent=43 // pred_check
          %p284 = pneg %p39
        $region46: #{ldp_projector_forward.8} parent=43 // pred_check_branch
          %286 = sbr.rel (%p284) target = $region48
        $region47: #{ldp_projector_forward.8} parent=43 // pred_region
          %p287 = scmp.lt.s32.totalorder %s19, 1
          %s288 = scalar_select %p287, %s19, 1
          %s289 = smul.addr %s288, 4
          %s290 = smul.addr %s289, 4
          %s291 = scalar_lea.vmem %s0, %s290
        $region48: #{ldp_projector_forward.8} parent=43 // pred_fallthru
          _
      $region44: #{ldp_projector_forward.8} parent=5 // pred_fallthru
        _
      %p292 = scmp.le.s32.totalorder 1, %s19
      %p293 = scmp.lt.s32.totalorder %s19, 3
      %p294 = pnand %p292, %p293
      %p295 = pneg %p294
      // Predicated region
      $region49: #{ldp_projector_forward.8} parent=5 // pred_check
        _
      $region50: #{ldp_projector_forward.8} parent=5 // pred_check_branch
        %297 = sbr.rel (%p294) target = $region52
      $region51: #{ldp_projector_forward.8} parent=5 // pred_region
        %s298 = ssub.s32 %s19, 1
        %p299 = scmp.lt.s32.totalorder %s24, 1
        %s300 = scalar_select %p299, %s24, 1
        %s301 = smul.addr %s300, 4
        %s302 = smul.addr %s301, 4
        %s303 = scalar_lea.vmem %s0, %s302
        %p304 = pneg %p45
        %p305 = pneg %p42
        %p306 = pneg %p66
        %p307 = pneg %p63
        %p308 = pneg %p87
        %p309 = pneg %p84
        %p310 = pneg %p108
        %p311 = pneg %p105
        %p312 = pneg %p129
        %p313 = pneg %p126
        %p314 = pneg %p150
        %p315 = pneg %p147
        %p316 = pneg %p171
        %p317 = pneg %p168
        %p318 = pneg %p192
        %p319 = pneg %p189
        %p320 = pneg %p218
        %p321 = pneg %p215
        %p322 = scmp.lt.s32.totalorder %s24, 1
        %s323 = scalar_select %p322, %s24, 1
        %s324 = smul.addr %s323, 4
        %s325 = smul.addr %s324, 4
        %s326 = scalar_lea.vmem %s8, %s325
        %p327 = pneg %p244
        %p328 = pneg %p241
        %s329 = sand.u32 %s231, 1
        %s330 = scalar_lea.sflag [#allocation4], %s329
        %s331 = sand.u32 %s231, 1
        %s332 = scalar_lea.vmem [#allocation3], %s331
        %p333 = scmp.lt.s32.totalorder %s24, 1
        %s334 = scalar_select %p333, %s24, 1
        %s335 = smul.addr %s334, 4
        %s336 = smul.addr %s335, 4
        %s337 = scalar_lea.vmem %s0, %s336
        %p338 = scmp.lt.s32.totalorder %s24, 1
        %s339 = scalar_select %p338, %s24, 1
        %s340 = smul.addr %s339, 4
        %s341 = smul.addr %s340, 4
        %s342 = scalar_lea.vmem %s8, %s341
        %vm344 = vcmask 259072
        %345 = vst.msk [vmem:[#allocation2] sm:$0x3f] %vm344, 0.0
        %s346 = scalar_lea.vmem [#allocation2], 40
        %347 = vst.msk [vmem:[%s346] sm:$0x3f] %vm344, 0.0
        %s348 = scalar_lea.vmem [#allocation2], 8
        %vm349 = vcmask 253952
        %350 = vst.msk [vmem:[%s348] sm:$0x1] %vm349, 0.0
        %351 = vst.msk [vmem:[%s348 + $0x8] sm:$0x1] %vm349, 0.0
        %352 = vst.msk [vmem:[%s348 + $0x10] sm:$0x1] %vm349, 0.0
        %353 = vst.msk [vmem:[%s348 + $0x18] sm:$0x1] %vm349, 0.0
        %354 = vst.msk [vmem:[%s348 + $0x5] sm:$0x1] %vm349, 0.0
        %355 = vst.msk [vmem:[%s348 + $0xd] sm:$0x1] %vm349, 0.0
        %356 = vst.msk [vmem:[%s348 + $0x15] sm:$0x1] %vm349, 0.0
        %357 = vst.msk [vmem:[%s348 + $0x1d] sm:$0x1] %vm349, 0.0
        %v358 = vld [vmem:[%s337] sm:$0xf]
        %v359 = vld [vmem:[%s337 + $0x4] sm:$0xf]
        %v360 = vld [vmem:[%s337 + $0x8] sm:$0xf]
        %v361 = vld [vmem:[%s337 + $0xc] sm:$0xf]
        %vm362 = vcmask 257024
        %363 = vst.msk [vmem:[%s348 + $0x1] sm:$0xf] %vm362, %v358
        %364 = vst.msk [vmem:[%s348 + $0x9] sm:$0xf] %vm362, %v359
        %365 = vst.msk [vmem:[%s348 + $0x11] sm:$0xf] %vm362, %v360
        %366 = vst.msk [vmem:[%s348 + $0x19] sm:$0xf] %vm362, %v361
        %v367 = vld [vmem:[%s1] sm:$0xff]
        %v368 = vld [vmem:[%s1 + $0x8] sm:$0x1]
        %v369 = vld [vmem:[#allocation2] sm:$0xf]
        %v370 = vld [vmem:[#allocation2 + $0x8] sm:$0xf]
        %v371 = vld [vmem:[#allocation2 + $0x10] sm:$0xf]
        %v372 = vld [vmem:[#allocation2 + $0x18] sm:$0xf]
        %v373 = vlaneseq
        %v374 = vshrl.u32 %v373, 7
        %v375 = vsub.s32 0, %v374
        %v376 = vrot.slane %v367, %v375
        %v377 = vmul.f32 %v369, %v376
        %v378 = vmul.f32 %v370, %v376
        %v379 = vmul.f32 %v371, %v376
        %v380 = vmul.f32 %v372, %v376
        %v381 = vadd.f32 %v377, 0.0
        %v382 = vadd.f32 %v378, 0.0
        %v383 = vadd.f32 %v379, 0.0
        %v384 = vadd.f32 %v380, 0.0
        %v385 = vld [vmem:[#allocation2 + $0x1] sm:$0xf]
        %v386 = vld [vmem:[#allocation2 + $0x9] sm:$0xf]
        %v387 = vld [vmem:[#allocation2 + $0x11] sm:$0xf]
        %v388 = vld [vmem:[#allocation2 + $0x19] sm:$0xf]
        %v389 = vlaneseq
        %v390 = vshrl.u32 %v389, 7
        %v391 = vsub.s32 1, %v390
        %v392 = vrot.slane %v367, %v391
        %v393 = vmul.f32 %v385, %v392
        %v394 = vmul.f32 %v386, %v392
        %v395 = vmul.f32 %v387, %v392
        %v396 = vmul.f32 %v388, %v392
        %v397 = vadd.f32 %v381, %v393
        %v398 = vadd.f32 %v382, %v394
        %v399 = vadd.f32 %v383, %v395
        %v400 = vadd.f32 %v384, %v396
        %v401 = vld [vmem:[#allocation2 + $0x2] sm:$0xf]
        %v402 = vld [vmem:[#allocation2 + $0xa] sm:$0xf]
        %v403 = vld [vmem:[#allocation2 + $0x12] sm:$0xf]
        %v404 = vld [vmem:[#allocation2 + $0x1a] sm:$0xf]
        %v405 = vlaneseq
        %v406 = vshrl.u32 %v405, 7
        %v407 = vsub.s32 2, %v406
        %v408 = vrot.slane %v367, %v407
        %v409 = vmul.f32 %v401, %v408
        %v410 = vmul.f32 %v402, %v408
        %v411 = vmul.f32 %v403, %v408
        %v412 = vmul.f32 %v404, %v408
        %v413 = vadd.f32 %v397, %v409
        %v414 = vadd.f32 %v398, %v410
        %v415 = vadd.f32 %v399, %v411
        %v416 = vadd.f32 %v400, %v412
        %v417 = vld [vmem:[%s348] sm:$0xf]
        %v418 = vld [vmem:[%s348 + $0x8] sm:$0xf]
        %v419 = vld [vmem:[%s348 + $0x10] sm:$0xf]
        %v420 = vld [vmem:[%s348 + $0x18] sm:$0xf]
        %v421 = vlaneseq
        %v422 = vshrl.u32 %v421, 7
        %v423 = vsub.s32 3, %v422
        %v424 = vrot.slane %v367, %v423
        %v425 = vmul.f32 %v417, %v424
        %v426 = vmul.f32 %v418, %v424
        %v427 = vmul.f32 %v419, %v424
        %v428 = vmul.f32 %v420, %v424
        %v429 = vadd.f32 %v413, %v425
        %v430 = vadd.f32 %v414, %v426
        %v431 = vadd.f32 %v415, %v427
        %v432 = vadd.f32 %v416, %v428
        %v433 = vld [vmem:[%s348 + $0x1] sm:$0xf]
        %v434 = vld [vmem:[%s348 + $0x9] sm:$0xf]
        %v435 = vld [vmem:[%s348 + $0x11] sm:$0xf]
        %v436 = vld [vmem:[%s348 + $0x19] sm:$0xf]
        %v437 = vlaneseq
        %v438 = vshrl.u32 %v437, 7
        %v439 = vsub.s32 4, %v438
        %v440 = vrot.slane %v367, %v439
        %v441 = vmul.f32 %v433, %v440
        %v442 = vmul.f32 %v434, %v440
        %v443 = vmul.f32 %v435, %v440
        %v444 = vmul.f32 %v436, %v440
        %v445 = vadd.f32 %v429, %v441
        %v446 = vadd.f32 %v430, %v442
        %v447 = vadd.f32 %v431, %v443
        %v448 = vadd.f32 %v432, %v444
        %v449 = vld [vmem:[%s348 + $0x2] sm:$0xf]
        %v450 = vld [vmem:[%s348 + $0xa] sm:$0xf]
        %v451 = vld [vmem:[%s348 + $0x12] sm:$0xf]
        %v452 = vld [vmem:[%s348 + $0x1a] sm:$0xf]
        %v453 = vlaneseq
        %v454 = vshrl.u32 %v453, 7
        %v455 = vsub.s32 5, %v454
        %v456 = vrot.slane %v367, %v455
        %v457 = vmul.f32 %v449, %v456
        %v458 = vmul.f32 %v450, %v456
        %v459 = vmul.f32 %v451, %v456
        %v460 = vmul.f32 %v452, %v456
        %v461 = vadd.f32 %v445, %v457
        %v462 = vadd.f32 %v446, %v458
        %v463 = vadd.f32 %v447, %v459
        %v464 = vadd.f32 %v448, %v460
        %s465 = scalar_lea.vmem [#allocation2], 16
        %v466 = vld [vmem:[%s465] sm:$0xf]
        %v467 = vld [vmem:[%s465 + $0x8] sm:$0xf]
        %v468 = vld [vmem:[%s465 + $0x10] sm:$0xf]
        %v469 = vld [vmem:[%s465 + $0x18] sm:$0xf]
        %v470 = vlaneseq
        %v471 = vshrl.u32 %v470, 7
        %v472 = vsub.s32 6, %v471
        %v473 = vrot.slane %v367, %v472
        %v474 = vmul.f32 %v466, %v473
        %v475 = vmul.f32 %v467, %v473
        %v476 = vmul.f32 %v468, %v473
        %v477 = vmul.f32 %v469, %v473
        %v478 = vadd.f32 %v461, %v474
        %v479 = vadd.f32 %v462, %v475
        %v480 = vadd.f32 %v463, %v476
        %v481 = vadd.f32 %v464, %v477
        %v482 = vld [vmem:[%s465 + $0x1] sm:$0xf]
        %v483 = vld [vmem:[%s465 + $0x9] sm:$0xf]
        %v484 = vld [vmem:[%s465 + $0x11] sm:$0xf]
        %v485 = vld [vmem:[%s465 + $0x19] sm:$0xf]
        %v486 = vlaneseq
        %v487 = vshrl.u32 %v486, 7
        %v488 = vsub.s32 7, %v487
        %v489 = vrot.slane %v367, %v488
        %v490 = vmul.f32 %v482, %v489
        %v491 = vmul.f32 %v483, %v489
        %v492 = vmul.f32 %v484, %v489
        %v493 = vmul.f32 %v485, %v489
        %v494 = vadd.f32 %v478, %v490
        %v495 = vadd.f32 %v479, %v491
        %v496 = vadd.f32 %v480, %v492
        %v497 = vadd.f32 %v481, %v493
        %v498 = vld [vmem:[%s465 + $0x2] sm:$0xf]
        %v499 = vld [vmem:[%s465 + $0xa] sm:$0xf]
        %v500 = vld [vmem:[%s465 + $0x12] sm:$0xf]
        %v501 = vld [vmem:[%s465 + $0x1a] sm:$0xf]
        %v502 = vlaneseq
        %v503 = vshrl.u32 %v502, 7
        %v504 = vsub.s32 0, %v503
        %v505 = vrot.slane %v368, %v504
        %v506 = vmul.f32 %v498, %v505
        %v507 = vmul.f32 %v499, %v505
        %v508 = vmul.f32 %v500, %v505
        %v509 = vmul.f32 %v501, %v505
        %v510 = vadd.f32 %v494, %v506
        %v511 = vadd.f32 %v495, %v507
        %v512 = vadd.f32 %v496, %v508
        %v513 = vadd.f32 %v497, %v509
        %v514 = vld [vmem:[%s2] sm:$0x1]
        %v515 = vld [vmem:[%s3] sm:$0x1]
        %v516 = vsel %vm362, %v510, 0.0
        %517 = vadd.xlane.f32.xlu0 %v516
        %v518 = vpop.xlane.xlu0 %517
        %v519 = vsel %vm362, %v511, 0.0
        %520 = vadd.xlane.f32.xlu0 %v519
        %v521 = vpop.xlane.xlu0 %520
        %v522 = vsel %vm362, %v512, 0.0
        %523 = vadd.xlane.f32.xlu0 %v522
        %v524 = vpop.xlane.xlu0 %523
        %v525 = vsel %vm362, %v513, 0.0
        %526 = vadd.xlane.f32.xlu0 %v525
        %v527 = vpop.xlane.xlu0 %526
        %v528 = vrcp.pop 32.0
        %v529 = vmul.f32 %v518, %v528
        %v530 = vmul.f32 %v521, %v528
        %v531 = vmul.f32 %v524, %v528
        %v532 = vmul.f32 %v527, %v528
        %v533 = vsub.f32 %v510, %v529
        %v534 = vsub.f32 %v511, %v530
        %v535 = vsub.f32 %v512, %v531
        %v536 = vsub.f32 %v513, %v532
        %v537 = vmul.f32 %v533, %v533
        %v538 = vmul.f32 %v534, %v534
        %v539 = vmul.f32 %v535, %v535
        %v540 = vmul.f32 %v536, %v536
        %v541 = vsel %vm362, %v537, 0.0
        %542 = vadd.xlane.f32.xlu0 %v541
        %v543 = vpop.xlane.xlu0 %542
        %v544 = vsel %vm362, %v538, 0.0
        %545 = vadd.xlane.f32.xlu0 %v544
        %v546 = vpop.xlane.xlu0 %545
        %v547 = vsel %vm362, %v539, 0.0
        %548 = vadd.xlane.f32.xlu0 %v547
        %v549 = vpop.xlane.xlu0 %548
        %v550 = vsel %vm362, %v540, 0.0
        %551 = vadd.xlane.f32.xlu0 %v550
        %v552 = vpop.xlane.xlu0 %551
        %v553 = vmul.f32 %v543, %v528
        %v554 = vmul.f32 %v546, %v528
        %v555 = vmul.f32 %v549, %v528
        %v556 = vmul.f32 %v552, %v528
        %v557 = vadd.f32 %v553, 1e-05
        %v558 = vadd.f32 %v554, 1e-05
        %v559 = vadd.f32 %v555, 1e-05
        %v560 = vadd.f32 %v556, 1e-05
        %v561 = vrsqrt.pop %v557
        %v562 = vrsqrt.pop %v558
        %v563 = vrsqrt.pop %v559
        %v564 = vrsqrt.pop %v560
        %v565 = vmul.f32 %v533, %v561
        %v566 = vmul.f32 %v534, %v562
        %v567 = vmul.f32 %v535, %v563
        %v568 = vmul.f32 %v536, %v564
        %v570 = vlaneseq
        %v571 = vshrl.u32 %v570, 7
        %v572 = vsub.s32 0, %v571
        %v573 = vrot.slane %v514, %v572
        %v575 = vmul.f32 %v565, %v573
        %v576 = vmul.f32 %v566, %v573
        %v577 = vmul.f32 %v567, %v573
        %v578 = vmul.f32 %v568, %v573
        %v580 = vlaneseq
        %v581 = vshrl.u32 %v580, 7
        %v582 = vsub.s32 0, %v581
        %v583 = vrot.slane %v515, %v582
        %v585 = vadd.f32 %v575, %v583
        %v586 = vadd.f32 %v576, %v583
        %v587 = vadd.f32 %v577, %v583
        %v588 = vadd.f32 %v578, %v583
        %v589 = vadd.f32 %v585, 3.0
        %v590 = vadd.f32 %v586, 3.0
        %v591 = vadd.f32 %v587, 3.0
        %v592 = vadd.f32 %v588, 3.0
        %v593 = vmax.f32 %v589, 0.0
        %v594 = vmax.f32 %v590, 0.0
        %v595 = vmax.f32 %v591, 0.0
        %v596 = vmax.f32 %v592, 0.0
        %v597 = vmin.f32 %v593, 6.0
        %v598 = vmin.f32 %v594, 6.0
        %v599 = vmin.f32 %v595, 6.0
        %v600 = vmin.f32 %v596, 6.0
        %v601 = vmul.f32 %v585, %v597
        %v602 = vmul.f32 %v586, %v598
        %v603 = vmul.f32 %v587, %v599
        %v604 = vmul.f32 %v588, %v600
        %v605 = vmul.f32 %v601, 0.16666667
        %v606 = vmul.f32 %v602, 0.16666667
        %v607 = vmul.f32 %v603, 0.16666667
        %v608 = vmul.f32 %v604, 0.16666667
        %v609 = vsel %vm362, %v605, 0.0
        %v610 = vsel %vm362, %v606, 0.0
        %v611 = vadd.f32 %v609, %v610
        %v612 = vsel %vm362, %v607, 0.0
        %v613 = vadd.f32 %v611, %v612
        %v614 = vsel %vm362, %v608, 0.0
        %v615 = vadd.f32 %v613, %v614
        %v616 = vsel %vm362, %v615, 0.0
        %v617 = vrot.slane %v616, 4
        %v618 = vadd.f32 %v616, %v617
        %v619 = vrot.slane %v618, 2
        %v620 = vadd.f32 %v618, %v619
        %v621 = vrot.slane %v620, 1
        %v622 = vadd.f32 %v620, %v621
        %v623 = vmul.f32 %v622, 0.0625
        %v624 = vld [vmem:[%s4] sm:$0xf]
        %v625 = vld [vmem:[%s4 + $0x4] sm:$0xf]
        %v626 = vld [vmem:[%s4 + $0x8] sm:$0xf]
        %v627 = vld [vmem:[%s4 + $0xc] sm:$0xf]
        %v628 = vpack.c.bf16 %v623, %v623
        %v629 = vld [vmem:[%s5] sm:$0x1]
        %v634 = vunpack.c.l.b16 %v624
        %v635 = vunpack.c.l.b16 %v625
        %v636 = vunpack.c.l.b16 %v626
        %v637 = vunpack.c.l.b16 %v627
        %v638 = vpack.c.b16 %v635, %v634
        %v639 = vpack.c.b16 %v637, %v636
        %vm642 = vcmask 261120
        %v644 = vsel %vm642, %v628, 0
        %646 = vmatprep.subr.bf16.mxu0 0
        %647 = vmatpush1.bf16.msra.mxu0 %v638
        %648 = vmatprep.subr.bf16.mxu0 0
        %649 = vmatpush1.bf16.msra.mxu0 %v639
        %650 = vmatprep.subr.bf16.mxu0 0
        %651 = vmatpush1.bf16.msra.mxu0 0
        %652 = vmatprep.subr.bf16.mxu0 0
        %653 = vmatpush1.bf16.msra.mxu0 0
        %654 = vmatprep.subr.bf16.mxu0 0
        %655 = vmatpush1.bf16.msra.mxu0 0
        %656 = vmatprep.subr.bf16.mxu0 0
        %657 = vmatpush1.bf16.msra.mxu0 0
        %658 = vmatprep.subr.bf16.mxu0 0
        %659 = vmatpush1.bf16.msra.mxu0 0
        %660 = vmatprep.subr.bf16.mxu0 0
        %661 = vmatpush1.bf16.msra.mxu0 0
        %662 = vmatprep.subr.bf16.mxu0 0
        %663 = vmatpush1.bf16.msra.mxu0 0
        %664 = vmatprep.subr.bf16.mxu0 0
        %665 = vmatpush1.bf16.msra.mxu0 0
        %666 = vmatprep.subr.bf16.mxu0 0
        %667 = vmatpush1.bf16.msra.mxu0 0
        %668 = vmatprep.subr.bf16.mxu0 0
        %669 = vmatpush1.bf16.msra.mxu0 0
        %670 = vmatprep.subr.bf16.mxu0 0
        %671 = vmatpush1.bf16.msra.mxu0 0
        %672 = vmatprep.subr.bf16.mxu0 0
        %673 = vmatpush1.bf16.msra.mxu0 0
        %674 = vmatprep.subr.bf16.mxu0 0
        %675 = vmatpush1.bf16.msra.mxu0 0
        %676 = vmatprep.subr.bf16.mxu0 0
        %677 = vmatpush1.bf16.msra.mxu0 0
        %678 = vmatprep.mubr.bf16.mxu0 0
        %679 = vmatmul.mubr.bf16.gmra.mrb[0].mxu0 %v644
        %v680 = vpop.f32.mrb[0].mxu0
        %v681 = vadd.f32 %v629, %v680
        %v682 = vpop.f32.mrb[0].mxu0
        %v683 = vpop.f32.mrb[0].mxu0
        %v684 = vpop.f32.mrb[0].mxu0
        %685 = vdwg.mxu0
        %v686 = vmax.f32 %v681, 0.0
        %v687 = vld [vmem:[%s6] sm:$0xf]
        %v688 = vpack.c.bf16 %v686, %v686
        %v689 = vld [vmem:[%s7] sm:$0x1]
        %vm690 = vcmask 64512
        %v692 = vsel %vm690, %v688, 0
        %vm694 = vcmask 1043456
        %v696 = vsel %vm694, %v687, 0
        %698 = vmatprep.subr.bf16.mxu0 0
        %699 = vmatpush1.bf16.msra.mxu0 %v696
        %700 = vmatprep.subr.bf16.mxu0 0
        %701 = vmatpush1.bf16.msra.mxu0 0
        %702 = vmatprep.subr.bf16.mxu0 0
        %703 = vmatpush1.bf16.msra.mxu0 0
        %704 = vmatprep.subr.bf16.mxu0 0
        %705 = vmatpush1.bf16.msra.mxu0 0
        %706 = vmatprep.subr.bf16.mxu0 0
        %707 = vmatpush1.bf16.msra.mxu0 0
        %708 = vmatprep.subr.bf16.mxu0 0
        %709 = vmatpush1.bf16.msra.mxu0 0
        %710 = vmatprep.subr.bf16.mxu0 0
        %711 = vmatpush1.bf16.msra.mxu0 0
        %712 = vmatprep.subr.bf16.mxu0 0
        %713 = vmatpush1.bf16.msra.mxu0 0
        %714 = vmatprep.subr.bf16.mxu0 0
        %715 = vmatpush1.bf16.msra.mxu0 0
        %716 = vmatprep.subr.bf16.mxu0 0
        %717 = vmatpush1.bf16.msra.mxu0 0
        %718 = vmatprep.subr.bf16.mxu0 0
        %719 = vmatpush1.bf16.msra.mxu0 0
        %720 = vmatprep.subr.bf16.mxu0 0
        %721 = vmatpush1.bf16.msra.mxu0 0
        %722 = vmatprep.subr.bf16.mxu0 0
        %723 = vmatpush1.bf16.msra.mxu0 0
        %724 = vmatprep.subr.bf16.mxu0 0
        %725 = vmatpush1.bf16.msra.mxu0 0
        %726 = vmatprep.subr.bf16.mxu0 0
        %727 = vmatpush1.bf16.msra.mxu0 0
        %728 = vmatprep.subr.bf16.mxu0 0
        %729 = vmatpush1.bf16.msra.mxu0 0
        %730 = vmatprep.mubr.bf16.mxu0 0
        %731 = vmatmul.mubr.bf16.gmra.mrb[0].mxu0 %v692
        %v732 = vpop.f32.mrb[0].mxu0
        %v733 = vadd.f32 %v689, %v732
        %v734 = vpop.f32.mrb[0].mxu0
        %v735 = vpop.f32.mrb[0].mxu0
        %v736 = vpop.f32.mrb[0].mxu0
        %737 = vdwg.mxu0
        %v738 = vadd.f32 %v733, 3.0
        %v739 = vmax.f32 %v738, 0.0
        %v740 = vmin.f32 %v739, 6.0
        %v741 = vmul.f32 %v740, 0.16666667
        %742 = vst.msk [vmem:[%s332] sm:$0x1] %vm349, %v741
        %743 = vst.msk [vmem:[%s342] sm:$0xf] %vm362, %v605
        %744 = vst.msk [vmem:[%s342 + $0x4] sm:$0xf] %vm362, %v606
        %745 = vst.msk [vmem:[%s342 + $0x8] sm:$0xf] %vm362, %v607
        %746 = vst.msk [vmem:[%s342 + $0xc] sm:$0xf] %vm362, %v608
        %p747 = scmp.lt.s32.totalorder %s24, 1
        %s748 = scalar_select %p747, %s24, 1
        %s749 = smul.addr %s748, 4
        %s750 = smul.addr %s749, 4
        %s751 = scalar_lea.vmem %s8, %s750
        %s752 = sand.u32 %s231, 1
        %s753 = scalar_lea.sflag [#allocation4], %s752
        %s754 = sand.u32 %s231, 1
        %s755 = scalar_lea.vmem [#allocation3], %s754
        // Predicated region
        $region53: #{ldp_projector_forward.8} parent=51 // pred_check
          %p756 = pneg %p215
        $region54: #{ldp_projector_forward.8} parent=51 // pred_check_branch
          %758 = sbr.rel (%p756) target = $region56
        $region55: #{ldp_projector_forward.8} parent=51 // pred_region
          _
        $region56: #{ldp_projector_forward.8} parent=51 // pred_fallthru
          _
        // Predicated region
        $region57: #{ldp_projector_forward.8} parent=51 // pred_check
          %p759 = pneg %p241
        $region58: #{ldp_projector_forward.8} parent=51 // pred_check_branch
          %761 = sbr.rel (%p759) target = $region60
        $region59: #{ldp_projector_forward.8} parent=51 // pred_region
          %s763 = ssub.s32 16, 16
          %764 = vsyncadd %s753, %s763
          %s765 = smul.addr %s24, 16
          %s766 = scalar_lea.hbm %s9, %s765
          %s768 = sshll.u32 %s755, 4
          %s769 = int_to_ptr.vmem [resolvable:$true] %s768
          %771 = dma.vmem_to_hbm [thread:$0]  %s769, 16, %s766, %s753
        $region60: #{ldp_projector_forward.8} parent=51 // pred_fallthru
          _
      $region52: #{ldp_projector_forward.8} parent=5 // pred_fallthru
        _
      %p772 = scmp.le.s32.totalorder 2, %s19
      // Predicated region
      $region61: #{ldp_projector_forward.8} parent=5 // pred_check
        %p773 = pneg %p772
      $region62: #{ldp_projector_forward.8} parent=5 // pred_check_branch
        %775 = sbr.rel (%p773) target = $region64
      $region63: #{ldp_projector_forward.8} parent=5 // pred_region
        %s776 = ssub.s32 %s19, 2
        // Predicated region
        $region65: #{ldp_projector_forward.8} parent=63 // pred_check
          %p777 = pneg %p221
        $region66: #{ldp_projector_forward.8} parent=63 // pred_check_branch
          %779 = sbr.rel (%p777) target = $region68
        $region67: #{ldp_projector_forward.8} parent=63 // pred_region
          %p780 = scmp.lt.s32.totalorder %s25, 1
          %s781 = scalar_select %p780, %s25, 1
          %s782 = smul.addr %s781, 4
          %s783 = smul.addr %s782, 4
          %s784 = scalar_lea.vmem %s8, %s783
        $region68: #{ldp_projector_forward.8} parent=63 // pred_fallthru
          _
        // Predicated region
        $region69: #{ldp_projector_forward.8} parent=63 // pred_check
          %p785 = pneg %p247
        $region70: #{ldp_projector_forward.8} parent=63 // pred_check_branch
          %787 = sbr.rel (%p785) target = $region72
        $region71: #{ldp_projector_forward.8} parent=63 // pred_region
          %s788 = sand.u32 %s232, 1
          %s789 = scalar_lea.sflag [#allocation4], %s788
          %s790 = sand.u32 %s232, 1
          %s791 = scalar_lea.vmem [#allocation3], %s790
          %792 = dma.done %s789, 16
        $region72: #{ldp_projector_forward.8} parent=63 // pred_fallthru
          _
      $region64: #{ldp_projector_forward.8} parent=5 // pred_fallthru
        _
    $region6: #{ldp_projector_forward.8} parent=1 // loop_footer
      %s23 = sadd.s32 1, %s19
    $region7: #{ldp_projector_forward.8} parent=1 // loop_footer_branch
      %18 = sbr.rel target = $region3
    $region8: #{ldp_projector_forward.8} parent=1 // loop_exit
      _
    %793 = vsyncpa [#allocation4], 1
    %s794 = scalar_lea.sflag [#allocation4], 1
    %795 = vsyncpa %s794, 1

// kernel: ldp_projector_forward.6
$region0: #{ldp_projector_forward.6}
  #allocation0 [shape = 'u32[]', space=smem, size = 0x4, offset = 0x4, fixed_abs, tag = 'smem constant byte address 0x4 - core index']
  #allocation1 [shape = 'u32[144,128]{1,0:T(1,128)}', space=vmem, size = 0x12000, scoped, tag = 'internal scratch']
  #allocation2 [shape = 'f32[6,6,32]{2,1,0:T(8,128)}', space=vmem, size = 0x6000, scoped, tag = 'scratch operand']
  %s0 = inlined_call_operand.vmem [shape: f32[2,4,4,32], index: 0, kind: input, shape index: {}]
  %s1 = inlined_call_operand.vmem [shape: f32[9,32], index: 1, kind: input, shape index: {}]
  %s2 = inlined_call_operand.vmem [shape: f32[1,32], index: 2, kind: input, shape index: {}]
  %s3 = inlined_call_operand.vmem [shape: f32[1,32], index: 3, kind: input, shape index: {}]
  %s4 = inlined_call_operand.vmem [shape: bf16[32,8], index: 4, kind: input, shape index: {}]
  %s5 = inlined_call_operand.vmem [shape: f32[1,8], index: 5, kind: input, shape index: {}]
  %s6 = inlined_call_operand.vmem [shape: bf16[8,32], index: 6, kind: input, shape index: {}]
  %s7 = inlined_call_operand.vmem [shape: f32[1,32], index: 7, kind: input, shape index: {}]
  %s8 = inlined_call_operand.vmem [shape: f32[2,4,4,32], index: 8, kind: output, shape index: {0}]
  %s9 = inlined_call_operand.vmem [shape: f32[2,1,32], index: 9, kind: output, shape index: {1}]
  %10 = xla_tuple %s8, %s9
  %s11 = sld [smem:[#allocation0]]
  $region73: #{ldp_projector_forward.6} parent=0
    _
  %s13 = ssub.s32 1, %s11
  %s14 = scalar_select 0, %s13, %s11
  loop: start=0, step=1, limit=4
  $region2: #{ldp_projector_forward.6} parent=0 // loop_pre_header
    _
  $region3: #{ldp_projector_forward.6} parent=0 // loop_header
    %s16 = sphi 0, %s20
    %p17 = scmp.ge.s32.totalorder %s16, 4
    %s26 = sphi 0, %s28
    %s29 = sphi 0, %s26
    %s30 = sphi 0, %s29
    %s46 = sphi 0, %s30
    %s50 = sphi 0, %s50
    %s52 = sphi 0, %s50
    %s53 = sphi 0, %s52
    %s67 = sphi 0, %s53
    %s71 = sphi 0, %s71
    %s73 = sphi 0, %s71
    %s74 = sphi 0, %s73
    %s88 = sphi 0, %s74
    %s92 = sphi 0, %s92
    %s94 = sphi 0, %s92
    %s95 = sphi 0, %s94
    %s109 = sphi 0, %s95
    %s113 = sphi 0, %s113
    %s115 = sphi 0, %s113
    %s116 = sphi 0, %s115
    %s130 = sphi 0, %s116
    %s134 = sphi 0, %s134
    %s136 = sphi 0, %s134
    %s137 = sphi 0, %s136
    %s151 = sphi 0, %s137
    %s155 = sphi 0, %s155
    %s157 = sphi 0, %s155
    %s158 = sphi 0, %s157
    %s172 = sphi 0, %s158
    %s176 = sphi 0, %s176
    %s178 = sphi 0, %s176
    %s179 = sphi 0, %s178
    %s193 = sphi 0, %s179
    %s199 = sphi 0, %s201
    %s202 = sphi 0, %s199
    %s203 = sphi 0, %s202
    %s219 = sphi 0, %s203
    %s225 = sphi 0, %s227
    %s228 = sphi 0, %s225
    %s229 = sphi 0, %s228
    %s245 = sphi 0, %s229
  $region4: #{ldp_projector_forward.6} parent=0 // loop_header_branch
    %19 = sbr.rel (%p17) target = $region8
  $region5: #{ldp_projector_forward.6} parent=0 // loop_body
    %s21 = ssub.s32 %s16, 1
    %s22 = ssub.s32 %s16, 2
    %s23 = sadd.s32 %s16, 1
    %s24 = ssub.s32 %s16, %s23
    %p25 = scmp.eq.s32.totalorder %s24, 0
    %s27 = sadd.s32 %s26, 1
    %s28 = scalar_select %p25, %s26, %s27
    %p31 = pneg %p25
    %p32 = scmp.eq.s32.totalorder %s16, 1
    %p33 = por %p31, %p32
    %p34 = scmp.ne.s32.totalorder %s26, %s29
    %p35 = scmp.eq.s32.totalorder %s16, 0
    %p36 = por %p34, %p35
    %p37 = scmp.ne.s32.totalorder %s26, %s29
    %p38 = scmp.eq.s32.totalorder %s21, 1
    %p39 = por %p37, %p38
    %p40 = scmp.ne.s32.totalorder %s29, %s30
    %p41 = scmp.eq.s32.totalorder %s21, 0
    %p42 = por %p40, %p41
    %p43 = scmp.ne.s32.totalorder %s29, %s30
    %p44 = scmp.eq.s32.totalorder %s22, 1
    %p45 = por %p43, %p44
    %p47 = scmp.ne.s32.totalorder %s30, %s46
    %p48 = scmp.eq.s32.totalorder %s22, 0
    %p49 = por %p47, %p48
    %s51 = sadd.s32 %s50, 1
    %p54 = scmp.eq.s32.totalorder %s16, 1
    %p55 = scmp.ne.s32.totalorder %s50, %s52
    %p56 = scmp.eq.s32.totalorder %s16, 0
    %p57 = por %p55, %p56
    %p58 = scmp.ne.s32.totalorder %s50, %s52
    %p59 = scmp.eq.s32.totalorder %s21, 1
    %p60 = por %p58, %p59
    %p61 = scmp.ne.s32.totalorder %s52, %s53
    %p62 = scmp.eq.s32.totalorder %s21, 0
    %p63 = por %p61, %p62
    %p64 = scmp.ne.s32.totalorder %s52, %s53
    %p65 = scmp.eq.s32.totalorder %s22, 1
    %p66 = por %p64, %p65
    %p68 = scmp.ne.s32.totalorder %s53, %s67
    %p69 = scmp.eq.s32.totalorder %s22, 0
    %p70 = por %p68, %p69
    %s72 = sadd.s32 %s71, 1
    %p75 = scmp.eq.s32.totalorder %s16, 1
    %p76 = scmp.ne.s32.totalorder %s71, %s73
    %p77 = scmp.eq.s32.totalorder %s16, 0
    %p78 = por %p76, %p77
    %p79 = scmp.ne.s32.totalorder %s71, %s73
    %p80 = scmp.eq.s32.totalorder %s21, 1
    %p81 = por %p79, %p80
    %p82 = scmp.ne.s32.totalorder %s73, %s74
    %p83 = scmp.eq.s32.totalorder %s21, 0
    %p84 = por %p82, %p83
    %p85 = scmp.ne.s32.totalorder %s73, %s74
    %p86 = scmp.eq.s32.totalorder %s22, 1
    %p87 = por %p85, %p86
    %p89 = scmp.ne.s32.totalorder %s74, %s88
    %p90 = scmp.eq.s32.totalorder %s22, 0
    %p91 = por %p89, %p90
    %s93 = sadd.s32 %s92, 1
    %p96 = scmp.eq.s32.totalorder %s16, 1
    %p97 = scmp.ne.s32.totalorder %s92, %s94
    %p98 = scmp.eq.s32.totalorder %s16, 0
    %p99 = por %p97, %p98
    %p100 = scmp.ne.s32.totalorder %s92, %s94
    %p101 = scmp.eq.s32.totalorder %s21, 1
    %p102 = por %p100, %p101
    %p103 = scmp.ne.s32.totalorder %s94, %s95
    %p104 = scmp.eq.s32.totalorder %s21, 0
    %p105 = por %p103, %p104
    %p106 = scmp.ne.s32.totalorder %s94, %s95
    %p107 = scmp.eq.s32.totalorder %s22, 1
    %p108 = por %p106, %p107
    %p110 = scmp.ne.s32.totalorder %s95, %s109
    %p111 = scmp.eq.s32.totalorder %s22, 0
    %p112 = por %p110, %p111
    %s114 = sadd.s32 %s113, 1
    %p117 = scmp.eq.s32.totalorder %s16, 1
    %p118 = scmp.ne.s32.totalorder %s113, %s115
    %p119 = scmp.eq.s32.totalorder %s16, 0
    %p120 = por %p118, %p119
    %p121 = scmp.ne.s32.totalorder %s113, %s115
    %p122 = scmp.eq.s32.totalorder %s21, 1
    %p123 = por %p121, %p122
    %p124 = scmp.ne.s32.totalorder %s115, %s116
    %p125 = scmp.eq.s32.totalorder %s21, 0
    %p126 = por %p124, %p125
    %p127 = scmp.ne.s32.totalorder %s115, %s116
    %p128 = scmp.eq.s32.totalorder %s22, 1
    %p129 = por %p127, %p128
    %p131 = scmp.ne.s32.totalorder %s116, %s130
    %p132 = scmp.eq.s32.totalorder %s22, 0
    %p133 = por %p131, %p132
    %s135 = sadd.s32 %s134, 1
    %p138 = scmp.eq.s32.totalorder %s16, 1
    %p139 = scmp.ne.s32.totalorder %s134, %s136
    %p140 = scmp.eq.s32.totalorder %s16, 0
    %p141 = por %p139, %p140
    %p142 = scmp.ne.s32.totalorder %s134, %s136
    %p143 = scmp.eq.s32.totalorder %s21, 1
    %p144 = por %p142, %p143
    %p145 = scmp.ne.s32.totalorder %s136, %s137
    %p146 = scmp.eq.s32.totalorder %s21, 0
    %p147 = por %p145, %p146
    %p148 = scmp.ne.s32.totalorder %s136, %s137
    %p149 = scmp.eq.s32.totalorder %s22, 1
    %p150 = por %p148, %p149
    %p152 = scmp.ne.s32.totalorder %s137, %s151
    %p153 = scmp.eq.s32.totalorder %s22, 0
    %p154 = por %p152, %p153
    %s156 = sadd.s32 %s155, 1
    %p159 = scmp.eq.s32.totalorder %s16, 1
    %p160 = scmp.ne.s32.totalorder %s155, %s157
    %p161 = scmp.eq.s32.totalorder %s16, 0
    %p162 = por %p160, %p161
    %p163 = scmp.ne.s32.totalorder %s155, %s157
    %p164 = scmp.eq.s32.totalorder %s21, 1
    %p165 = por %p163, %p164
    %p166 = scmp.ne.s32.totalorder %s157, %s158
    %p167 = scmp.eq.s32.totalorder %s21, 0
    %p168 = por %p166, %p167
    %p169 = scmp.ne.s32.totalorder %s157, %s158
    %p170 = scmp.eq.s32.totalorder %s22, 1
    %p171 = por %p169, %p170
    %p173 = scmp.ne.s32.totalorder %s158, %s172
    %p174 = scmp.eq.s32.totalorder %s22, 0
    %p175 = por %p173, %p174
    %s177 = sadd.s32 %s176, 1
    %p180 = scmp.eq.s32.totalorder %s16, 1
    %p181 = scmp.ne.s32.totalorder %s176, %s178
    %p182 = scmp.eq.s32.totalorder %s16, 0
    %p183 = por %p181, %p182
    %p184 = scmp.ne.s32.totalorder %s176, %s178
    %p185 = scmp.eq.s32.totalorder %s21, 1
    %p186 = por %p184, %p185
    %p187 = scmp.ne.s32.totalorder %s178, %s179
    %p188 = scmp.eq.s32.totalorder %s21, 0
    %p189 = por %p187, %p188
    %p190 = scmp.ne.s32.totalorder %s178, %s179
    %p191 = scmp.eq.s32.totalorder %s22, 1
    %p192 = por %p190, %p191
    %p194 = scmp.ne.s32.totalorder %s179, %s193
    %p195 = scmp.eq.s32.totalorder %s22, 0
    %p196 = por %p194, %p195
    %s197 = ssub.s32 %s16, %s23
    %p198 = scmp.eq.s32.totalorder %s197, 0
    %s200 = sadd.s32 %s199, 1
    %s201 = scalar_select %p198, %s199, %s200
    %p204 = pneg %p198
    %p205 = scmp.eq.s32.totalorder %s16, 1
    %p206 = por %p204, %p205
    %p207 = scmp.ne.s32.totalorder %s199, %s202
    %p208 = scmp.eq.s32.totalorder %s16, 0
    %p209 = por %p207, %p208
    %p210 = scmp.ne.s32.totalorder %s199, %s202
    %p211 = scmp.eq.s32.totalorder %s21, 1
    %p212 = por %p210, %p211
    %p213 = scmp.ne.s32.totalorder %s202, %s203
    %p214 = scmp.eq.s32.totalorder %s21, 0
    %p215 = por %p213, %p214
    %p216 = scmp.ne.s32.totalorder %s202, %s203
    %p217 = scmp.eq.s32.totalorder %s22, 1
    %p218 = por %p216, %p217
    %p220 = scmp.ne.s32.totalorder %s203, %s219
    %p221 = scmp.eq.s32.totalorder %s22, 0
    %p222 = por %p220, %p221
    %s223 = ssub.s32 %s16, %s23
    %p224 = scmp.eq.s32.totalorder %s223, 0
    %s226 = sadd.s32 %s225, 1
    %s227 = scalar_select %p224, %s225, %s226
    %p230 = pneg %p224
    %p231 = scmp.eq.s32.totalorder %s16, 1
    %p232 = por %p230, %p231
    %p233 = scmp.ne.s32.totalorder %s225, %s228
    %p234 = scmp.eq.s32.totalorder %s16, 0
    %p235 = por %p233, %p234
    %p236 = scmp.ne.s32.totalorder %s225, %s228
    %p237 = scmp.eq.s32.totalorder %s21, 1
    %p238 = por %p236, %p237
    %p239 = scmp.ne.s32.totalorder %s228, %s229
    %p240 = scmp.eq.s32.totalorder %s21, 0
    %p241 = por %p239, %p240
    %p242 = scmp.ne.s32.totalorder %s228, %s229
    %p243 = scmp.eq.s32.totalorder %s22, 1
    %p244 = por %p242, %p243
    %p246 = scmp.ne.s32.totalorder %s229, %s245
    %p247 = scmp.eq.s32.totalorder %s22, 0
    %p248 = por %p246, %p247
    %p249 = scmp.le.s32.totalorder 1, %s16
    %p250 = scmp.lt.s32.totalorder %s16, 3
    %p251 = pnand %p249, %p250
    %p252 = pneg %p251
    // Predicated region
    $region9: #{ldp_projector_forward.6} parent=5 // pred_check
      _
    $region10: #{ldp_projector_forward.6} parent=5 // pred_check_branch
      %254 = sbr.rel (%p251) target = $region12
    $region11: #{ldp_projector_forward.6} parent=5 // pred_region
      %s255 = ssub.s32 %s16, 1
      // Predicated region
      $region13: #{ldp_projector_forward.6} parent=11 // pred_check
        %p256 = pneg %p63
      $region14: #{ldp_projector_forward.6} parent=11 // pred_check_branch
        %258 = sbr.rel (%p256) target = $region16
      $region15: #{ldp_projector_forward.6} parent=11 // pred_region
        _
      $region16: #{ldp_projector_forward.6} parent=11 // pred_fallthru
        _
      // Predicated region
      $region17: #{ldp_projector_forward.6} parent=11 // pred_check
        %p259 = pneg %p84
      $region18: #{ldp_projector_forward.6} parent=11 // pred_check_branch
        %261 = sbr.rel (%p259) target = $region20
      $region19: #{ldp_projector_forward.6} parent=11 // pred_region
        _
      $region20: #{ldp_projector_forward.6} parent=11 // pred_fallthru
        _
      // Predicated region
      $region21: #{ldp_projector_forward.6} parent=11 // pred_check
        %p262 = pneg %p105
      $region22: #{ldp_projector_forward.6} parent=11 // pred_check_branch
        %264 = sbr.rel (%p262) target = $region24
      $region23: #{ldp_projector_forward.6} parent=11 // pred_region
        _
      $region24: #{ldp_projector_forward.6} parent=11 // pred_fallthru
        _
      // Predicated region
      $region25: #{ldp_projector_forward.6} parent=11 // pred_check
        %p265 = pneg %p126
      $region26: #{ldp_projector_forward.6} parent=11 // pred_check_branch
        %267 = sbr.rel (%p265) target = $region28
      $region27: #{ldp_projector_forward.6} parent=11 // pred_region
        _
      $region28: #{ldp_projector_forward.6} parent=11 // pred_fallthru
        _
      // Predicated region
      $region29: #{ldp_projector_forward.6} parent=11 // pred_check
        %p268 = pneg %p147
      $region30: #{ldp_projector_forward.6} parent=11 // pred_check_branch
        %270 = sbr.rel (%p268) target = $region32
      $region31: #{ldp_projector_forward.6} parent=11 // pred_region
        _
      $region32: #{ldp_projector_forward.6} parent=11 // pred_fallthru
        _
      // Predicated region
      $region33: #{ldp_projector_forward.6} parent=11 // pred_check
        %p271 = pneg %p168
      $region34: #{ldp_projector_forward.6} parent=11 // pred_check_branch
        %273 = sbr.rel (%p271) target = $region36
      $region35: #{ldp_projector_forward.6} parent=11 // pred_region
        _
      $region36: #{ldp_projector_forward.6} parent=11 // pred_fallthru
        _
      // Predicated region
      $region37: #{ldp_projector_forward.6} parent=11 // pred_check
        %p274 = pneg %p189
      $region38: #{ldp_projector_forward.6} parent=11 // pred_check_branch
        %276 = sbr.rel (%p274) target = $region40
      $region39: #{ldp_projector_forward.6} parent=11 // pred_region
        _
      $region40: #{ldp_projector_forward.6} parent=11 // pred_fallthru
        _
    $region12: #{ldp_projector_forward.6} parent=5 // pred_fallthru
      _
    %p277 = scmp.lt.s32.totalorder %s16, 2
    // Predicated region
    $region41: #{ldp_projector_forward.6} parent=5 // pred_check
      %p278 = pneg %p277
    $region42: #{ldp_projector_forward.6} parent=5 // pred_check_branch
      %280 = sbr.rel (%p278) target = $region44
    $region43: #{ldp_projector_forward.6} parent=5 // pred_region
      // Predicated region
      $region45: #{ldp_projector_forward.6} parent=43 // pred_check
        %p281 = pneg %p36
      $region46: #{ldp_projector_forward.6} parent=43 // pred_check_branch
        %283 = sbr.rel (%p281) target = $region48
      $region47: #{ldp_projector_forward.6} parent=43 // pred_region
        %p284 = scmp.lt.s32.totalorder %s16, 1
        %s285 = scalar_select %p284, %s16, 1
        %s286 = smul.addr %s285, 4
        %s287 = smul.addr %s286, 4
        %s288 = scalar_lea.vmem %s0, %s287
      $region48: #{ldp_projector_forward.6} parent=43 // pred_fallthru
        _
    $region44: #{ldp_projector_forward.6} parent=5 // pred_fallthru
      _
    %p289 = scmp.le.s32.totalorder 1, %s16
    %p290 = scmp.lt.s32.totalorder %s16, 3
    %p291 = pnand %p289, %p290
    %p292 = pneg %p291
    // Predicated region
    $region49: #{ldp_projector_forward.6} parent=5 // pred_check
      _
    $region50: #{ldp_projector_forward.6} parent=5 // pred_check_branch
      %294 = sbr.rel (%p291) target = $region52
    $region51: #{ldp_projector_forward.6} parent=5 // pred_region
      %s295 = ssub.s32 %s16, 1
      %p296 = scmp.lt.s32.totalorder %s21, 1
      %s297 = scalar_select %p296, %s21, 1
      %s298 = smul.addr %s297, 4
      %s299 = smul.addr %s298, 4
      %s300 = scalar_lea.vmem %s0, %s299
      %p301 = pneg %p42
      %p302 = pneg %p39
      %p303 = pneg %p63
      %p304 = pneg %p60
      %p305 = pneg %p84
      %p306 = pneg %p81
      %p307 = pneg %p105
      %p308 = pneg %p102
      %p309 = pneg %p126
      %p310 = pneg %p123
      %p311 = pneg %p147
      %p312 = pneg %p144
      %p313 = pneg %p168
      %p314 = pneg %p165
      %p315 = pneg %p189
      %p316 = pneg %p186
      %p317 = pneg %p215
      %p318 = pneg %p212
      %p319 = scmp.lt.s32.totalorder %s21, 1
      %s320 = scalar_select %p319, %s21, 1
      %s321 = smul.addr %s320, 4
      %s322 = smul.addr %s321, 4
      %s323 = scalar_lea.vmem %s8, %s322
      %p324 = pneg %p241
      %p325 = pneg %p238
      %p326 = scmp.lt.s32.totalorder %s21, 1
      %s327 = scalar_select %p326, %s21, 1
      %s328 = scalar_lea.vmem %s9, %s327
      %p329 = scmp.lt.s32.totalorder %s21, 1
      %s330 = scalar_select %p329, %s21, 1
      %s331 = smul.addr %s330, 4
      %s332 = smul.addr %s331, 4
      %s333 = scalar_lea.vmem %s0, %s332
      %p334 = scmp.lt.s32.totalorder %s21, 1
      %s335 = scalar_select %p334, %s21, 1
      %s336 = smul.addr %s335, 4
      %s337 = smul.addr %s336, 4
      %s338 = scalar_lea.vmem %s8, %s337
      %p339 = scmp.lt.s32.totalorder %s21, 1
      %s340 = scalar_select %p339, %s21, 1
      %s341 = scalar_lea.vmem %s9, %s340
      %vm343 = vcmask 259072
      %344 = vst.msk [vmem:[#allocation2] sm:$0x3f] %vm343, 0.0
      %s345 = scalar_lea.vmem [#allocation2], 40
      %346 = vst.msk [vmem:[%s345] sm:$0x3f] %vm343, 0.0
      %s347 = scalar_lea.vmem [#allocation2], 8
      %vm348 = vcmask 253952
      %349 = vst.msk [vmem:[%s347] sm:$0x1] %vm348, 0.0
      %350 = vst.msk [vmem:[%s347 + $0x8] sm:$0x1] %vm348, 0.0
      %351 = vst.msk [vmem:[%s347 + $0x10] sm:$0x1] %vm348, 0.0
      %352 = vst.msk [vmem:[%s347 + $0x18] sm:$0x1] %vm348, 0.0
      %353 = vst.msk [vmem:[%s347 + $0x5] sm:$0x1] %vm348, 0.0
      %354 = vst.msk [vmem:[%s347 + $0xd] sm:$0x1] %vm348, 0.0
      %355 = vst.msk [vmem:[%s347 + $0x15] sm:$0x1] %vm348, 0.0
      %356 = vst.msk [vmem:[%s347 + $0x1d] sm:$0x1] %vm348, 0.0
      %v357 = vld [vmem:[%s333] sm:$0xf]
      %v358 = vld [vmem:[%s333 + $0x4] sm:$0xf]
      %v359 = vld [vmem:[%s333 + $0x8] sm:$0xf]
      %v360 = vld [vmem:[%s333 + $0xc] sm:$0xf]
      %vm361 = vcmask 257024
      %362 = vst.msk [vmem:[%s347 + $0x1] sm:$0xf] %vm361, %v357
      %363 = vst.msk [vmem:[%s347 + $0x9] sm:$0xf] %vm361, %v358
      %364 = vst.msk [vmem:[%s347 + $0x11] sm:$0xf] %vm361, %v359
      %365 = vst.msk [vmem:[%s347 + $0x19] sm:$0xf] %vm361, %v360
      %v366 = vld [vmem:[%s1] sm:$0xff]
      %v367 = vld [vmem:[%s1 + $0x8] sm:$0x1]
      %v368 = vld [vmem:[#allocation2] sm:$0xf]
      %v369 = vld [vmem:[#allocation2 + $0x8] sm:$0xf]
      %v370 = vld [vmem:[#allocation2 + $0x10] sm:$0xf]
      %v371 = vld [vmem:[#allocation2 + $0x18] sm:$0xf]
      %v372 = vlaneseq
      %v373 = vshrl.u32 %v372, 7
      %v374 = vsub.s32 0, %v373
      %v375 = vrot.slane %v366, %v374
      %v376 = vmul.f32 %v368, %v375
      %v377 = vmul.f32 %v369, %v375
      %v378 = vmul.f32 %v370, %v375
      %v379 = vmul.f32 %v371, %v375
      %v380 = vadd.f32 %v376, 0.0
      %v381 = vadd.f32 %v377, 0.0
      %v382 = vadd.f32 %v378, 0.0
      %v383 = vadd.f32 %v379, 0.0
      %v384 = vld [vmem:[#allocation2 + $0x1] sm:$0xf]
      %v385 = vld [vmem:[#allocation2 + $0x9] sm:$0xf]
      %v386 = vld [vmem:[#allocation2 + $0x11] sm:$0xf]
      %v387 = vld [vmem:[#allocation2 + $0x19] sm:$0xf]
      %v388 = vlaneseq
      %v389 = vshrl.u32 %v388, 7
      %v390 = vsub.s32 1, %v389
      %v391 = vrot.slane %v366, %v390
      %v392 = vmul.f32 %v384, %v391
      %v393 = vmul.f32 %v385, %v391
      %v394 = vmul.f32 %v386, %v391
      %v395 = vmul.f32 %v387, %v391
      %v396 = vadd.f32 %v380, %v392
      %v397 = vadd.f32 %v381, %v393
      %v398 = vadd.f32 %v382, %v394
      %v399 = vadd.f32 %v383, %v395
      %v400 = vld [vmem:[#allocation2 + $0x2] sm:$0xf]
      %v401 = vld [vmem:[#allocation2 + $0xa] sm:$0xf]
      %v402 = vld [vmem:[#allocation2 + $0x12] sm:$0xf]
      %v403 = vld [vmem:[#allocation2 + $0x1a] sm:$0xf]
      %v404 = vlaneseq
      %v405 = vshrl.u32 %v404, 7
      %v406 = vsub.s32 2, %v405
      %v407 = vrot.slane %v366, %v406
      %v408 = vmul.f32 %v400, %v407
      %v409 = vmul.f32 %v401, %v407
      %v410 = vmul.f32 %v402, %v407
      %v411 = vmul.f32 %v403, %v407
      %v412 = vadd.f32 %v396, %v408
      %v413 = vadd.f32 %v397, %v409
      %v414 = vadd.f32 %v398, %v410
      %v415 = vadd.f32 %v399, %v411
      %v416 = vld [vmem:[%s347] sm:$0xf]
      %v417 = vld [vmem:[%s347 + $0x8] sm:$0xf]
      %v418 = vld [vmem:[%s347 + $0x10] sm:$0xf]
      %v419 = vld [vmem:[%s347 + $0x18] sm:$0xf]
      %v420 = vlaneseq
      %v421 = vshrl.u32 %v420, 7
      %v422 = vsub.s32 3, %v421
      %v423 = vrot.slane %v366, %v422
      %v424 = vmul.f32 %v416, %v423
      %v425 = vmul.f32 %v417, %v423
      %v426 = vmul.f32 %v418, %v423
      %v427 = vmul.f32 %v419, %v423
      %v428 = vadd.f32 %v412, %v424
      %v429 = vadd.f32 %v413, %v425
      %v430 = vadd.f32 %v414, %v426
      %v431 = vadd.f32 %v415, %v427
      %v432 = vld [vmem:[%s347 + $0x1] sm:$0xf]
      %v433 = vld [vmem:[%s347 + $0x9] sm:$0xf]
      %v434 = vld [vmem:[%s347 + $0x11] sm:$0xf]
      %v435 = vld [vmem:[%s347 + $0x19] sm:$0xf]
      %v436 = vlaneseq
      %v437 = vshrl.u32 %v436, 7
      %v438 = vsub.s32 4, %v437
      %v439 = vrot.slane %v366, %v438
      %v440 = vmul.f32 %v432, %v439
      %v441 = vmul.f32 %v433, %v439
      %v442 = vmul.f32 %v434, %v439
      %v443 = vmul.f32 %v435, %v439
      %v444 = vadd.f32 %v428, %v440
      %v445 = vadd.f32 %v429, %v441
      %v446 = vadd.f32 %v430, %v442
      %v447 = vadd.f32 %v431, %v443
      %v448 = vld [vmem:[%s347 + $0x2] sm:$0xf]
      %v449 = vld [vmem:[%s347 + $0xa] sm:$0xf]
      %v450 = vld [vmem:[%s347 + $0x12] sm:$0xf]
      %v451 = vld [vmem:[%s347 + $0x1a] sm:$0xf]
      %v452 = vlaneseq
      %v453 = vshrl.u32 %v452, 7
      %v454 = vsub.s32 5, %v453
      %v455 = vrot.slane %v366, %v454
      %v456 = vmul.f32 %v448, %v455
      %v457 = vmul.f32 %v449, %v455
      %v458 = vmul.f32 %v450, %v455
      %v459 = vmul.f32 %v451, %v455
      %v460 = vadd.f32 %v444, %v456
      %v461 = vadd.f32 %v445, %v457
      %v462 = vadd.f32 %v446, %v458
      %v463 = vadd.f32 %v447, %v459
      %s464 = scalar_lea.vmem [#allocation2], 16
      %v465 = vld [vmem:[%s464] sm:$0xf]
      %v466 = vld [vmem:[%s464 + $0x8] sm:$0xf]
      %v467 = vld [vmem:[%s464 + $0x10] sm:$0xf]
      %v468 = vld [vmem:[%s464 + $0x18] sm:$0xf]
      %v469 = vlaneseq
      %v470 = vshrl.u32 %v469, 7
      %v471 = vsub.s32 6, %v470
      %v472 = vrot.slane %v366, %v471
      %v473 = vmul.f32 %v465, %v472
      %v474 = vmul.f32 %v466, %v472
      %v475 = vmul.f32 %v467, %v472
      %v476 = vmul.f32 %v468, %v472
      %v477 = vadd.f32 %v460, %v473
      %v478 = vadd.f32 %v461, %v474
      %v479 = vadd.f32 %v462, %v475
      %v480 = vadd.f32 %v463, %v476
      %v481 = vld [vmem:[%s464 + $0x1] sm:$0xf]
      %v482 = vld [vmem:[%s464 + $0x9] sm:$0xf]
      %v483 = vld [vmem:[%s464 + $0x11] sm:$0xf]
      %v484 = vld [vmem:[%s464 + $0x19] sm:$0xf]
      %v485 = vlaneseq
      %v486 = vshrl.u32 %v485, 7
      %v487 = vsub.s32 7, %v486
      %v488 = vrot.slane %v366, %v487
      %v489 = vmul.f32 %v481, %v488
      %v490 = vmul.f32 %v482, %v488
      %v491 = vmul.f32 %v483, %v488
      %v492 = vmul.f32 %v484, %v488
      %v493 = vadd.f32 %v477, %v489
      %v494 = vadd.f32 %v478, %v490
      %v495 = vadd.f32 %v479, %v491
      %v496 = vadd.f32 %v480, %v492
      %v497 = vld [vmem:[%s464 + $0x2] sm:$0xf]
      %v498 = vld [vmem:[%s464 + $0xa] sm:$0xf]
      %v499 = vld [vmem:[%s464 + $0x12] sm:$0xf]
      %v500 = vld [vmem:[%s464 + $0x1a] sm:$0xf]
      %v501 = vlaneseq
      %v502 = vshrl.u32 %v501, 7
      %v503 = vsub.s32 0, %v502
      %v504 = vrot.slane %v367, %v503
      %v505 = vmul.f32 %v497, %v504
      %v506 = vmul.f32 %v498, %v504
      %v507 = vmul.f32 %v499, %v504
      %v508 = vmul.f32 %v500, %v504
      %v509 = vadd.f32 %v493, %v505
      %v510 = vadd.f32 %v494, %v506
      %v511 = vadd.f32 %v495, %v507
      %v512 = vadd.f32 %v496, %v508
      %v513 = vld [vmem:[%s2] sm:$0x1]
      %v514 = vld [vmem:[%s3] sm:$0x1]
      %v515 = vsel %vm361, %v509, 0.0
      %516 = vadd.xlane.f32.xlu0 %v515
      %v517 = vpop.xlane.xlu0 %516
      %v518 = vsel %vm361, %v510, 0.0
      %519 = vadd.xlane.f32.xlu0 %v518
      %v520 = vpop.xlane.xlu0 %519
      %v521 = vsel %vm361, %v511, 0.0
      %522 = vadd.xlane.f32.xlu0 %v521
      %v523 = vpop.xlane.xlu0 %522
      %v524 = vsel %vm361, %v512, 0.0
      %525 = vadd.xlane.f32.xlu0 %v524
      %v526 = vpop.xlane.xlu0 %525
      %v527 = vrcp.pop 32.0
      %v528 = vmul.f32 %v517, %v527
      %v529 = vmul.f32 %v520, %v527
      %v530 = vmul.f32 %v523, %v527
      %v531 = vmul.f32 %v526, %v527
      %v532 = vsub.f32 %v509, %v528
      %v533 = vsub.f32 %v510, %v529
      %v534 = vsub.f32 %v511, %v530
      %v535 = vsub.f32 %v512, %v531
      %v536 = vmul.f32 %v532, %v532
      %v537 = vmul.f32 %v533, %v533
      %v538 = vmul.f32 %v534, %v534
      %v539 = vmul.f32 %v535, %v535
      %v540 = vsel %vm361, %v536, 0.0
      %541 = vadd.xlane.f32.xlu0 %v540
      %v542 = vpop.xlane.xlu0 %541
      %v543 = vsel %vm361, %v537, 0.0
      %544 = vadd.xlane.f32.xlu0 %v543
      %v545 = vpop.xlane.xlu0 %544
      %v546 = vsel %vm361, %v538, 0.0
      %547 = vadd.xlane.f32.xlu0 %v546
      %v548 = vpop.xlane.xlu0 %547
      %v549 = vsel %vm361, %v539, 0.0
      %550 = vadd.xlane.f32.xlu0 %v549
      %v551 = vpop.xlane.xlu0 %550
      %v552 = vmul.f32 %v542, %v527
      %v553 = vmul.f32 %v545, %v527
      %v554 = vmul.f32 %v548, %v527
      %v555 = vmul.f32 %v551, %v527
      %v556 = vadd.f32 %v552, 1e-05
      %v557 = vadd.f32 %v553, 1e-05
      %v558 = vadd.f32 %v554, 1e-05
      %v559 = vadd.f32 %v555, 1e-05
      %v560 = vrsqrt.pop %v556
      %v561 = vrsqrt.pop %v557
      %v562 = vrsqrt.pop %v558
      %v563 = vrsqrt.pop %v559
      %v564 = vmul.f32 %v532, %v560
      %v565 = vmul.f32 %v533, %v561
      %v566 = vmul.f32 %v534, %v562
      %v567 = vmul.f32 %v535, %v563
      %v569 = vlaneseq
      %v570 = vshrl.u32 %v569, 7
      %v571 = vsub.s32 0, %v570
      %v572 = vrot.slane %v513, %v571
      %v574 = vmul.f32 %v564, %v572
      %v575 = vmul.f32 %v565, %v572
      %v576 = vmul.f32 %v566, %v572
      %v577 = vmul.f32 %v567, %v572
      %v579 = vlaneseq
      %v580 = vshrl.u32 %v579, 7
      %v581 = vsub.s32 0, %v580
      %v582 = vrot.slane %v514, %v581
      %v584 = vadd.f32 %v574, %v582
      %v585 = vadd.f32 %v575, %v582
      %v586 = vadd.f32 %v576, %v582
      %v587 = vadd.f32 %v577, %v582
      %v588 = vadd.f32 %v584, 3.0
      %v589 = vadd.f32 %v585, 3.0
      %v590 = vadd.f32 %v586, 3.0
      %v591 = vadd.f32 %v587, 3.0
      %v592 = vmax.f32 %v588, 0.0
      %v593 = vmax.f32 %v589, 0.0
      %v594 = vmax.f32 %v590, 0.0
      %v595 = vmax.f32 %v591, 0.0
      %v596 = vmin.f32 %v592, 6.0
      %v597 = vmin.f32 %v593, 6.0
      %v598 = vmin.f32 %v594, 6.0
      %v599 = vmin.f32 %v595, 6.0
      %v600 = vmul.f32 %v584, %v596
      %v601 = vmul.f32 %v585, %v597
      %v602 = vmul.f32 %v586, %v598
      %v603 = vmul.f32 %v587, %v599
      %v604 = vmul.f32 %v600, 0.16666667
      %v605 = vmul.f32 %v601, 0.16666667
      %v606 = vmul.f32 %v602, 0.16666667
      %v607 = vmul.f32 %v603, 0.16666667
      %v608 = vsel %vm361, %v604, 0.0
      %v609 = vsel %vm361, %v605, 0.0
      %v610 = vadd.f32 %v608, %v609
      %v611 = vsel %vm361, %v606, 0.0
      %v612 = vadd.f32 %v610, %v611
      %v613 = vsel %vm361, %v607, 0.0
      %v614 = vadd.f32 %v612, %v613
      %v615 = vsel %vm361, %v614, 0.0
      %v616 = vrot.slane %v615, 4
      %v617 = vadd.f32 %v615, %v616
      %v618 = vrot.slane %v617, 2
      %v619 = vadd.f32 %v617, %v618
      %v620 = vrot.slane %v619, 1
      %v621 = vadd.f32 %v619, %v620
      %v622 = vmul.f32 %v621, 0.0625
      %v623 = vld [vmem:[%s4] sm:$0xf]
      %v624 = vld [vmem:[%s4 + $0x4] sm:$0xf]
      %v625 = vld [vmem:[%s4 + $0x8] sm:$0xf]
      %v626 = vld [vmem:[%s4 + $0xc] sm:$0xf]
      %v627 = vpack.c.bf16 %v622, %v622
      %v628 = vld [vmem:[%s5] sm:$0x1]
      %v633 = vunpack.c.l.b16 %v623
      %v634 = vunpack.c.l.b16 %v624
      %v635 = vunpack.c.l.b16 %v625
      %v636 = vunpack.c.l.b16 %v626
      %v637 = vpack.c.b16 %v634, %v633
      %v638 = vpack.c.b16 %v636, %v635
      %vm641 = vcmask 261120
      %v643 = vsel %vm641, %v627, 0
      %645 = vmatprep.subr.bf16.mxu0 0
      %646 = vmatpush1.bf16.msra.mxu0 %v637
      %647 = vmatprep.subr.bf16.mxu0 0
      %648 = vmatpush1.bf16.msra.mxu0 %v638
      %649 = vmatprep.subr.bf16.mxu0 0
      %650 = vmatpush1.bf16.msra.mxu0 0
      %651 = vmatprep.subr.bf16.mxu0 0
      %652 = vmatpush1.bf16.msra.mxu0 0
      %653 = vmatprep.subr.bf16.mxu0 0
      %654 = vmatpush1.bf16.msra.mxu0 0
      %655 = vmatprep.subr.bf16.mxu0 0
      %656 = vmatpush1.bf16.msra.mxu0 0
      %657 = vmatprep.subr.bf16.mxu0 0
      %658 = vmatpush1.bf16.msra.mxu0 0
      %659 = vmatprep.subr.bf16.mxu0 0
      %660 = vmatpush1.bf16.msra.mxu0 0
      %661 = vmatprep.subr.bf16.mxu0 0
      %662 = vmatpush1.bf16.msra.mxu0 0
      %663 = vmatprep.subr.bf16.mxu0 0
      %664 = vmatpush1.bf16.msra.mxu0 0
      %665 = vmatprep.subr.bf16.mxu0 0
      %666 = vmatpush1.bf16.msra.mxu0 0
      %667 = vmatprep.subr.bf16.mxu0 0
      %668 = vmatpush1.bf16.msra.mxu0 0
      %669 = vmatprep.subr.bf16.mxu0 0
      %670 = vmatpush1.bf16.msra.mxu0 0
      %671 = vmatprep.subr.bf16.mxu0 0
      %672 = vmatpush1.bf16.msra.mxu0 0
      %673 = vmatprep.subr.bf16.mxu0 0
      %674 = vmatpush1.bf16.msra.mxu0 0
      %675 = vmatprep.subr.bf16.mxu0 0
      %676 = vmatpush1.bf16.msra.mxu0 0
      %677 = vmatprep.mubr.bf16.mxu0 0
      %678 = vmatmul.mubr.bf16.gmra.mrb[0].mxu0 %v643
      %v679 = vpop.f32.mrb[0].mxu0
      %v680 = vadd.f32 %v628, %v679
      %v681 = vpop.f32.mrb[0].mxu0
      %v682 = vpop.f32.mrb[0].mxu0
      %v683 = vpop.f32.mrb[0].mxu0
      %684 = vdwg.mxu0
      %v685 = vmax.f32 %v680, 0.0
      %v686 = vld [vmem:[%s6] sm:$0xf]
      %v687 = vpack.c.bf16 %v685, %v685
      %v688 = vld [vmem:[%s7] sm:$0x1]
      %vm689 = vcmask 64512
      %v691 = vsel %vm689, %v687, 0
      %vm693 = vcmask 1043456
      %v695 = vsel %vm693, %v686, 0
      %697 = vmatprep.subr.bf16.mxu0 0
      %698 = vmatpush1.bf16.msra.mxu0 %v695
      %699 = vmatprep.subr.bf16.mxu0 0
      %700 = vmatpush1.bf16.msra.mxu0 0
      %701 = vmatprep.subr.bf16.mxu0 0
      %702 = vmatpush1.bf16.msra.mxu0 0
      %703 = vmatprep.subr.bf16.mxu0 0
      %704 = vmatpush1.bf16.msra.mxu0 0
      %705 = vmatprep.subr.bf16.mxu0 0
      %706 = vmatpush1.bf16.msra.mxu0 0
      %707 = vmatprep.subr.bf16.mxu0 0
      %708 = vmatpush1.bf16.msra.mxu0 0
      %709 = vmatprep.subr.bf16.mxu0 0
      %710 = vmatpush1.bf16.msra.mxu0 0
      %711 = vmatprep.subr.bf16.mxu0 0
      %712 = vmatpush1.bf16.msra.mxu0 0
      %713 = vmatprep.subr.bf16.mxu0 0
      %714 = vmatpush1.bf16.msra.mxu0 0
      %715 = vmatprep.subr.bf16.mxu0 0
      %716 = vmatpush1.bf16.msra.mxu0 0
      %717 = vmatprep.subr.bf16.mxu0 0
      %718 = vmatpush1.bf16.msra.mxu0 0
      %719 = vmatprep.subr.bf16.mxu0 0
      %720 = vmatpush1.bf16.msra.mxu0 0
      %721 = vmatprep.subr.bf16.mxu0 0
      %722 = vmatpush1.bf16.msra.mxu0 0
      %723 = vmatprep.subr.bf16.mxu0 0
      %724 = vmatpush1.bf16.msra.mxu0 0
      %725 = vmatprep.subr.bf16.mxu0 0
      %726 = vmatpush1.bf16.msra.mxu0 0
      %727 = vmatprep.subr.bf16.mxu0 0
      %728 = vmatpush1.bf16.msra.mxu0 0
      %729 = vmatprep.mubr.bf16.mxu0 0
      %730 = vmatmul.mubr.bf16.gmra.mrb[0].mxu0 %v691
      %v731 = vpop.f32.mrb[0].mxu0
      %v732 = vadd.f32 %v688, %v731
      %v733 = vpop.f32.mrb[0].mxu0
      %v734 = vpop.f32.mrb[0].mxu0
      %v735 = vpop.f32.mrb[0].mxu0
      %736 = vdwg.mxu0
      %v737 = vadd.f32 %v732, 3.0
      %v738 = vmax.f32 %v737, 0.0
      %v739 = vmin.f32 %v738, 6.0
      %v740 = vmul.f32 %v739, 0.16666667
      %741 = vst.msk [vmem:[%s341] sm:$0x1] %vm348, %v740
      %742 = vst.msk [vmem:[%s338] sm:$0xf] %vm361, %v604
      %743 = vst.msk [vmem:[%s338 + $0x4] sm:$0xf] %vm361, %v605
      %744 = vst.msk [vmem:[%s338 + $0x8] sm:$0xf] %vm361, %v606
      %745 = vst.msk [vmem:[%s338 + $0xc] sm:$0xf] %vm361, %v607
      %p746 = scmp.lt.s32.totalorder %s21, 1
      %s747 = scalar_select %p746, %s21, 1
      %s748 = smul.addr %s747, 4
      %s749 = smul.addr %s748, 4
      %s750 = scalar_lea.vmem %s8, %s749
      %p751 = scmp.lt.s32.totalorder %s21, 1
      %s752 = scalar_select %p751, %s21, 1
      %s753 = scalar_lea.vmem %s9, %s752
      // Predicated region
      $region53: #{ldp_projector_forward.6} parent=51 // pred_check
        %p754 = pneg %p212
      $region54: #{ldp_projector_forward.6} parent=51 // pred_check_branch
        %756 = sbr.rel (%p754) target = $region56
      $region55: #{ldp_projector_forward.6} parent=51 // pred_region
        _
      $region56: #{ldp_projector_forward.6} parent=51 // pred_fallthru
        _
      // Predicated region
      $region57: #{ldp_projector_forward.6} parent=51 // pred_check
        %p757 = pneg %p238
      $region58: #{ldp_projector_forward.6} parent=51 // pred_check_branch
        %759 = sbr.rel (%p757) target = $region60
      $region59: #{ldp_projector_forward.6} parent=51 // pred_region
        _
      $region60: #{ldp_projector_forward.6} parent=51 // pred_fallthru
        _
    $region52: #{ldp_projector_forward.6} parent=5 // pred_fallthru
      _
    %p760 = scmp.le.s32.totalorder 2, %s16
    // Predicated region
    $region61: #{ldp_projector_forward.6} parent=5 // pred_check
      %p761 = pneg %p760
    $region62: #{ldp_projector_forward.6} parent=5 // pred_check_branch
      %763 = sbr.rel (%p761) target = $region64
    $region63: #{ldp_projector_forward.6} parent=5 // pred_region
      %s764 = ssub.s32 %s16, 2
      // Predicated region
      $region65: #{ldp_projector_forward.6} parent=63 // pred_check
        %p765 = pneg %p218
      $region66: #{ldp_projector_forward.6} parent=63 // pred_check_branch
        %767 = sbr.rel (%p765) target = $region68
      $region67: #{ldp_projector_forward.6} parent=63 // pred_region
        %p768 = scmp.lt.s32.totalorder %s22, 1
        %s769 = scalar_select %p768, %s22, 1
        %s770 = smul.addr %s769, 4
        %s771 = smul.addr %s770, 4
        %s772 = scalar_lea.vmem %s8, %s771
      $region68: #{ldp_projector_forward.6} parent=63 // pred_fallthru
        _
      // Predicated region
      $region69: #{ldp_projector_forward.6} parent=63 // pred_check
        %p773 = pneg %p244
      $region70: #{ldp_projector_forward.6} parent=63 // pred_check_branch
        %775 = sbr.rel (%p773) target = $region72
      $region71: #{ldp_projector_forward.6} parent=63 // pred_region
        %p776 = scmp.lt.s32.totalorder %s22, 1
        %s777 = scalar_select %p776, %s22, 1
        %s778 = scalar_lea.vmem %s9, %s777
      $region72: #{ldp_projector_forward.6} parent=63 // pred_fallthru
        _
    $region64: #{ldp_projector_forward.6} parent=5 // pred_fallthru
      _
  $region6: #{ldp_projector_forward.6} parent=0 // loop_footer
    %s20 = sadd.s32 1, %s16
  $region7: #{ldp_projector_forward.6} parent=0 // loop_footer_branch
    %15 = sbr.rel target = $region3
  $region8: #{ldp_projector_forward.6} parent=0 // loop_exit
    _

// kernel: ldp_projector_forward.9
$region0: #{ldp_projector_forward.9}
  #allocation0 [shape = 'u32[]', space=smem, size = 0x4, offset = 0x4, fixed_abs, tag = 'smem constant byte address 0x4 - core index']
  #allocation1 [shape = 'u32[144,128]{1,0:T(1,128)}', space=vmem, size = 0x12000, scoped, tag = 'internal scratch']
  %s0 = inlined_call_operand.vmem [shape: f32[2,1,32], index: 0, kind: input, shape index: {}]
  %s1 = inlined_call_operand.vmem [shape: f32[2,4,32], index: 1, kind: input, shape index: {}]
  %s2 = inlined_call_operand.vmem [shape: bf16[32,32], index: 2, kind: input, shape index: {}]
  %s3 = inlined_call_operand.vmem [shape: f32[1,32], index: 3, kind: input, shape index: {}]
  %s4 = inlined_call_operand.vmem [shape: f32[1,32], index: 4, kind: input, shape index: {}]
  %s5 = inlined_call_operand.hbm [shape: f32[2,4,32], index: 5, kind: output, shape index: {}]
  %s6 = sld [smem:[#allocation0]]
  $region53: #{ldp_projector_forward.9} parent=0
    _
  %s8 = ssub.s32 1, %s6
  %s9 = scalar_select 0, %s8, %s6
  $region1: #{ldp_projector_forward.9} parent=0
    #allocation2 [shape = 'u8[4096]{0}', space=vmem, size = 0x1000, scoped, tag = 'output window, operand 0']
    #allocation3 [shape = 's32[2]{0}', space=sflag, size = 0x8, scoped, tag = 'scoped memory for ldp_projector_forward.9']
    %10 = vsyncpa [#allocation3], 0
    %s11 = scalar_lea.sflag [#allocation3], 1
    %12 = vsyncpa %s11, 0
    loop: start=0, step=1, limit=4
    $region2: #{ldp_projector_forward.9} parent=1 // loop_pre_header
      _
    $region3: #{ldp_projector_forward.9} parent=1 // loop_header
      %s14 = sphi 0, %s18
      %p15 = scmp.ge.s32.totalorder %s14, 4
      %s21 = sphi 0, %s33
      %s22 = sphi 0, %s29
      %s23 = sphi 0, %s21
      %s24 = sphi 0, %s22
      %s25 = sphi 0, %s23
      %s26 = sphi 0, %s24
      %s36 = sphi 0, %s38
      %s39 = sphi 0, %s36
      %s40 = sphi 0, %s39
      %s56 = sphi 0, %s40
      %s64 = sphi 0, %s66
      %s67 = sphi 0, %s64
      %s68 = sphi 0, %s67
      %s84 = sphi 0, %s68
      %s88 = sphi 0, %s88
      %s90 = sphi 0, %s88
      %s91 = sphi 0, %s90
      %s105 = sphi 0, %s91
      %s109 = sphi 0, %s109
      %s111 = sphi 0, %s109
      %s112 = sphi 0, %s111
      %s126 = sphi 0, %s112
      %s130 = sphi 0, %s130
      %s132 = sphi 0, %s130
      %s133 = sphi 0, %s132
      %s147 = sphi 0, %s133
      %s155 = sphi 0, %s157
      %s158 = sphi 0, %s155
      %s159 = sphi 0, %s158
      %s175 = sphi 0, %s159
    $region4: #{ldp_projector_forward.9} parent=1 // loop_header_branch
      %17 = sbr.rel (%p15) target = $region8
    $region5: #{ldp_projector_forward.9} parent=1 // loop_body
      %s19 = ssub.s32 %s14, 1
      %s20 = ssub.s32 %s14, 2
      %s27 = sadd.s32 1, %s22
      %p28 = scmp.ge.s32.totalorder %s27, 1
      %s29 = scalar_select %p28, 0, %s27
      %s30 = sadd.s32 1, %s21
      %s31 = scalar_select %p28, %s30, %s21
      %p32 = scmp.ge.s32.totalorder %s31, 2
      %s33 = scalar_select %p32, 0, %s31
      %s34 = ssub.s32 %s21, %s33
      %p35 = scmp.eq.s32.totalorder %s34, 0
      %s37 = sadd.s32 %s36, 1
      %s38 = scalar_select %p35, %s36, %s37
      %p41 = pneg %p35
      %p42 = scmp.eq.s32.totalorder %s14, 1
      %p43 = por %p41, %p42
      %p44 = scmp.ne.s32.totalorder %s36, %s39
      %p45 = scmp.eq.s32.totalorder %s14, 0
      %p46 = por %p44, %p45
      %p47 = scmp.ne.s32.totalorder %s36, %s39
      %p48 = scmp.eq.s32.totalorder %s19, 1
      %p49 = por %p47, %p48
      %p50 = scmp.ne.s32.totalorder %s39, %s40
      %p51 = scmp.eq.s32.totalorder %s19, 0
      %p52 = por %p50, %p51
      %p53 = scmp.ne.s32.totalorder %s39, %s40
      %p54 = scmp.eq.s32.totalorder %s20, 1
      %p55 = por %p53, %p54
      %p57 = scmp.ne.s32.totalorder %s40, %s56
      %p58 = scmp.eq.s32.totalorder %s20, 0
      %p59 = por %p57, %p58
      %s60 = ssub.s32 %s21, %s33
      %s61 = ssub.s32 %s22, %s29
      %s62 = sor.u32 %s60, %s61
      %p63 = scmp.eq.s32.totalorder %s62, 0
      %s65 = sadd.s32 %s64, 1
      %s66 = scalar_select %p63, %s64, %s65
      %p69 = pneg %p63
      %p70 = scmp.eq.s32.totalorder %s14, 1
      %p71 = por %p69, %p70
      %p72 = scmp.ne.s32.totalorder %s64, %s67
      %p73 = scmp.eq.s32.totalorder %s14, 0
      %p74 = por %p72, %p73
      %p75 = scmp.ne.s32.totalorder %s64, %s67
      %p76 = scmp.eq.s32.totalorder %s19, 1
      %p77 = por %p75, %p76
      %p78 = scmp.ne.s32.totalorder %s67, %s68
      %p79 = scmp.eq.s32.totalorder %s19, 0
      %p80 = por %p78, %p79
      %p81 = scmp.ne.s32.totalorder %s67, %s68
      %p82 = scmp.eq.s32.totalorder %s20, 1
      %p83 = por %p81, %p82
      %p85 = scmp.ne.s32.totalorder %s68, %s84
      %p86 = scmp.eq.s32.totalorder %s20, 0
      %p87 = por %p85, %p86
      %s89 = sadd.s32 %s88, 1
      %p92 = scmp.eq.s32.totalorder %s14, 1
      %p93 = scmp.ne.s32.totalorder %s88, %s90
      %p94 = scmp.eq.s32.totalorder %s14, 0
      %p95 = por %p93, %p94
      %p96 = scmp.ne.s32.totalorder %s88, %s90
      %p97 = scmp.eq.s32.totalorder %s19, 1
      %p98 = por %p96, %p97
      %p99 = scmp.ne.s32.totalorder %s90, %s91
      %p100 = scmp.eq.s32.totalorder %s19, 0
      %p101 = por %p99, %p100
      %p102 = scmp.ne.s32.totalorder %s90, %s91
      %p103 = scmp.eq.s32.totalorder %s20, 1
      %p104 = por %p102, %p103
      %p106 = scmp.ne.s32.totalorder %s91, %s105
      %p107 = scmp.eq.s32.totalorder %s20, 0
      %p108 = por %p106, %p107
      %s110 = sadd.s32 %s109, 1
      %p113 = scmp.eq.s32.totalorder %s14, 1
      %p114 = scmp.ne.s32.totalorder %s109, %s111
      %p115 = scmp.eq.s32.totalorder %s14, 0
      %p116 = por %p114, %p115
      %p117 = scmp.ne.s32.totalorder %s109, %s111
      %p118 = scmp.eq.s32.totalorder %s19, 1
      %p119 = por %p117, %p118
      %p120 = scmp.ne.s32.totalorder %s111, %s112
      %p121 = scmp.eq.s32.totalorder %s19, 0
      %p122 = por %p120, %p121
      %p123 = scmp.ne.s32.totalorder %s111, %s112
      %p124 = scmp.eq.s32.totalorder %s20, 1
      %p125 = por %p123, %p124
      %p127 = scmp.ne.s32.totalorder %s112, %s126
      %p128 = scmp.eq.s32.totalorder %s20, 0
      %p129 = por %p127, %p128
      %s131 = sadd.s32 %s130, 1
      %p134 = scmp.eq.s32.totalorder %s14, 1
      %p135 = scmp.ne.s32.totalorder %s130, %s132
      %p136 = scmp.eq.s32.totalorder %s14, 0
      %p137 = por %p135, %p136
      %p138 = scmp.ne.s32.totalorder %s130, %s132
      %p139 = scmp.eq.s32.totalorder %s19, 1
      %p140 = por %p138, %p139
      %p141 = scmp.ne.s32.totalorder %s132, %s133
      %p142 = scmp.eq.s32.totalorder %s19, 0
      %p143 = por %p141, %p142
      %p144 = scmp.ne.s32.totalorder %s132, %s133
      %p145 = scmp.eq.s32.totalorder %s20, 1
      %p146 = por %p144, %p145
      %p148 = scmp.ne.s32.totalorder %s133, %s147
      %p149 = scmp.eq.s32.totalorder %s20, 0
      %p150 = por %p148, %p149
      %s151 = ssub.s32 %s21, %s33
      %s152 = ssub.s32 %s22, %s29
      %s153 = sor.u32 %s151, %s152
      %p154 = scmp.eq.s32.totalorder %s153, 0
      %s156 = sadd.s32 %s155, 1
      %s157 = scalar_select %p154, %s155, %s156
      %p160 = pneg %p154
      %p161 = scmp.eq.s32.totalorder %s14, 1
      %p162 = por %p160, %p161
      %p163 = scmp.ne.s32.totalorder %s155, %s158
      %p164 = scmp.eq.s32.totalorder %s14, 0
      %p165 = por %p163, %p164
      %p166 = scmp.ne.s32.totalorder %s155, %s158
      %p167 = scmp.eq.s32.totalorder %s19, 1
      %p168 = por %p166, %p167
      %p169 = scmp.ne.s32.totalorder %s158, %s159
      %p170 = scmp.eq.s32.totalorder %s19, 0
      %p171 = por %p169, %p170
      %p172 = scmp.ne.s32.totalorder %s158, %s159
      %p173 = scmp.eq.s32.totalorder %s20, 1
      %p174 = por %p172, %p173
      %p176 = scmp.ne.s32.totalorder %s159, %s175
      %p177 = scmp.eq.s32.totalorder %s20, 0
      %p178 = por %p176, %p177
      %p179 = scmp.le.s32.totalorder 1, %s14
      %p180 = scmp.lt.s32.totalorder %s14, 3
      %p181 = pnand %p179, %p180
      %p182 = pneg %p181
      // Predicated region
      $region9: #{ldp_projector_forward.9} parent=5 // pred_check
        _
      $region10: #{ldp_projector_forward.9} parent=5 // pred_check_branch
        %184 = sbr.rel (%p181) target = $region12
      $region11: #{ldp_projector_forward.9} parent=5 // pred_region
        %s185 = ssub.s32 %s14, 1
        // Predicated region
        $region13: #{ldp_projector_forward.9} parent=11 // pred_check
          %p186 = pneg %p101
        $region14: #{ldp_projector_forward.9} parent=11 // pred_check_branch
          %188 = sbr.rel (%p186) target = $region16
        $region15: #{ldp_projector_forward.9} parent=11 // pred_region
          _
        $region16: #{ldp_projector_forward.9} parent=11 // pred_fallthru
          _
        // Predicated region
        $region17: #{ldp_projector_forward.9} parent=11 // pred_check
          %p189 = pneg %p122
        $region18: #{ldp_projector_forward.9} parent=11 // pred_check_branch
          %191 = sbr.rel (%p189) target = $region20
        $region19: #{ldp_projector_forward.9} parent=11 // pred_region
          _
        $region20: #{ldp_projector_forward.9} parent=11 // pred_fallthru
          _
        // Predicated region
        $region21: #{ldp_projector_forward.9} parent=11 // pred_check
          %p192 = pneg %p143
        $region22: #{ldp_projector_forward.9} parent=11 // pred_check_branch
          %194 = sbr.rel (%p192) target = $region24
        $region23: #{ldp_projector_forward.9} parent=11 // pred_region
          _
        $region24: #{ldp_projector_forward.9} parent=11 // pred_fallthru
          _
      $region12: #{ldp_projector_forward.9} parent=5 // pred_fallthru
        _
      %p195 = scmp.lt.s32.totalorder %s14, 2
      // Predicated region
      $region25: #{ldp_projector_forward.9} parent=5 // pred_check
        %p196 = pneg %p195
      $region26: #{ldp_projector_forward.9} parent=5 // pred_check_branch
        %198 = sbr.rel (%p196) target = $region28
      $region27: #{ldp_projector_forward.9} parent=5 // pred_region
        // Predicated region
        $region29: #{ldp_projector_forward.9} parent=27 // pred_check
          %p199 = pneg %p46
        $region30: #{ldp_projector_forward.9} parent=27 // pred_check_branch
          %201 = sbr.rel (%p199) target = $region32
        $region31: #{ldp_projector_forward.9} parent=27 // pred_region
          %p202 = scmp.lt.s32.totalorder %s21, 1
          %s203 = scalar_select %p202, %s21, 1
          %s204 = scalar_lea.vmem %s0, %s203
        $region32: #{ldp_projector_forward.9} parent=27 // pred_fallthru
          _
        // Predicated region
        $region33: #{ldp_projector_forward.9} parent=27 // pred_check
          %p205 = pneg %p74
        $region34: #{ldp_projector_forward.9} parent=27 // pred_check_branch
          %207 = sbr.rel (%p205) target = $region36
        $region35: #{ldp_projector_forward.9} parent=27 // pred_region
          %p208 = scmp.lt.s32.totalorder %s21, 1
          %s209 = scalar_select %p208, %s21, 1
          %p210 = scmp.lt.s32.totalorder %s22, 0
          %s211 = scalar_select %p210, %s22, 0
          %s212 = sadd.s32 %s211, %s209
          %s213 = smul.addr %s212, 4
          %s214 = scalar_lea.vmem %s1, %s213
        $region36: #{ldp_projector_forward.9} parent=27 // pred_fallthru
          _
      $region28: #{ldp_projector_forward.9} parent=5 // pred_fallthru
        _
      %p215 = scmp.le.s32.totalorder 1, %s14
      %p216 = scmp.lt.s32.totalorder %s14, 3
      %p217 = pnand %p215, %p216
      %p218 = pneg %p217
      // Predicated region
      $region37: #{ldp_projector_forward.9} parent=5 // pred_check
        _
      $region38: #{ldp_projector_forward.9} parent=5 // pred_check_branch
        %220 = sbr.rel (%p217) target = $region40
      $region39: #{ldp_projector_forward.9} parent=5 // pred_region
        %s221 = ssub.s32 %s14, 1
        %p222 = scmp.lt.s32.totalorder %s23, 1
        %s223 = scalar_select %p222, %s23, 1
        %s224 = scalar_lea.vmem %s0, %s223
        %p225 = pneg %p52
        %p226 = pneg %p49
        %p227 = scmp.lt.s32.totalorder %s23, 1
        %s228 = scalar_select %p227, %s23, 1
        %p229 = scmp.lt.s32.totalorder %s24, 0
        %s230 = scalar_select %p229, %s24, 0
        %s231 = sadd.s32 %s230, %s228
        %s232 = smul.addr %s231, 4
        %s233 = scalar_lea.vmem %s1, %s232
        %p234 = pneg %p80
        %p235 = pneg %p77
        %p236 = pneg %p101
        %p237 = pneg %p98
        %p238 = pneg %p122
        %p239 = pneg %p119
        %p240 = pneg %p143
        %p241 = pneg %p140
        %p242 = pneg %p171
        %p243 = pneg %p168
        %s244 = sand.u32 %s158, 1
        %s245 = scalar_lea.sflag [#allocation3], %s244
        %s246 = sand.u32 %s158, 1
        %s247 = smul.addr %s246, 4
        %s248 = scalar_lea.vmem [#allocation2], %s247
        %p249 = scmp.lt.s32.totalorder %s23, 1
        %s250 = scalar_select %p249, %s23, 1
        %s251 = scalar_lea.vmem %s0, %s250
        %p252 = scmp.lt.s32.totalorder %s23, 1
        %s253 = scalar_select %p252, %s23, 1
        %p254 = scmp.lt.s32.totalorder %s24, 0
        %s255 = scalar_select %p254, %s24, 0
        %s256 = sadd.s32 %s255, %s253
        %s257 = smul.addr %s256, 4
        %s258 = scalar_lea.vmem %s1, %s257
        %v260 = vld [vmem:[%s251] sm:$0x1]
        %v261 = vld [vmem:[%s258] sm:$0xf]
        %v263 = vlaneseq
        %v264 = vshrl.u32 %v263, 7
        %v265 = vsub.s32 0, %v264
        %v266 = vrot.slane %v260, %v265
        %v268 = vmul.f32 %v261, %v266
        %v269 = vld [vmem:[%s2] sm:$0xf]
        %v270 = vld [vmem:[%s2 + $0x4] sm:$0xf]
        %v271 = vld [vmem:[%s2 + $0x8] sm:$0xf]
        %v272 = vld [vmem:[%s2 + $0xc] sm:$0xf]
        %v273 = vpack.c.bf16 %v268, %v268
        %v278 = vunpack.c.l.b16 %v269
        %v279 = vunpack.c.l.b16 %v270
        %v280 = vunpack.c.l.b16 %v271
        %v281 = vunpack.c.l.b16 %v272
        %v282 = vpack.c.b16 %v279, %v278
        %v283 = vpack.c.b16 %v281, %v280
        %vm286 = vcmask 261120
        %v288 = vsel %vm286, %v273, 0
        %290 = vmatprep.subr.bf16.mxu0 0
        %291 = vmatpush1.bf16.msra.mxu0 %v282
        %292 = vmatprep.subr.bf16.mxu0 0
        %293 = vmatpush1.bf16.msra.mxu0 %v283
        %294 = vmatprep.subr.bf16.mxu0 0
        %295 = vmatpush1.bf16.msra.mxu0 0
        %296 = vmatprep.subr.bf16.mxu0 0
        %297 = vmatpush1.bf16.msra.mxu0 0
        %298 = vmatprep.subr.bf16.mxu0 0
        %299 = vmatpush1.bf16.msra.mxu0 0
        %300 = vmatprep.subr.bf16.mxu0 0
        %301 = vmatpush1.bf16.msra.mxu0 0
        %302 = vmatprep.subr.bf16.mxu0 0
        %303 = vmatpush1.bf16.msra.mxu0 0
        %304 = vmatprep.subr.bf16.mxu0 0
        %305 = vmatpush1.bf16.msra.mxu0 0
        %306 = vmatprep.subr.bf16.mxu0 0
        %307 = vmatpush1.bf16.msra.mxu0 0
        %308 = vmatprep.subr.bf16.mxu0 0
        %309 = vmatpush1.bf16.msra.mxu0 0
        %310 = vmatprep.subr.bf16.mxu0 0
        %311 = vmatpush1.bf16.msra.mxu0 0
        %312 = vmatprep.subr.bf16.mxu0 0
        %313 = vmatpush1.bf16.msra.mxu0 0
        %314 = vmatprep.subr.bf16.mxu0 0
        %315 = vmatpush1.bf16.msra.mxu0 0
        %316 = vmatprep.subr.bf16.mxu0 0
        %317 = vmatpush1.bf16.msra.mxu0 0
        %318 = vmatprep.subr.bf16.mxu0 0
        %319 = vmatpush1.bf16.msra.mxu0 0
        %320 = vmatprep.subr.bf16.mxu0 0
        %321 = vmatpush1.bf16.msra.mxu0 0
        %322 = vmatprep.mubr.bf16.mxu0 0
        %323 = vmatmul.mubr.bf16.gmra.mrb[0].mxu0 %v288
        %v324 = vpop.f32.mrb[0].mxu0
        %v325 = vadd.f32 0.0, %v324
        %v326 = vpop.f32.mrb[0].mxu0
        %v327 = vpop.f32.mrb[0].mxu0
        %v328 = vpop.f32.mrb[0].mxu0
        %329 = vdwg.mxu0
        %v330 = vld [vmem:[%s3] sm:$0x1]
        %v331 = vld [vmem:[%s4] sm:$0x1]
        %vm332 = vcmask 257024
        %v333 = vsel %vm332, %v325, 0.0
        %334 = vadd.xlane.f32.xlu0 %v333
        %v335 = vpop.xlane.xlu0 %334
        %v336 = vrcp.pop 32.0
        %v337 = vmul.f32 %v335, %v336
        %v338 = vsub.f32 %v325, %v337
        %v339 = vmul.f32 %v338, %v338
        %v340 = vsel %vm332, %v339, 0.0
        %341 = vadd.xlane.f32.xlu0 %v340
        %v342 = vpop.xlane.xlu0 %341
        %v343 = vmul.f32 %v342, %v336
        %v344 = vadd.f32 %v343, 1e-05
        %v345 = vrsqrt.pop %v344
        %v346 = vmul.f32 %v338, %v345
        %v348 = vlaneseq
        %v349 = vshrl.u32 %v348, 7
        %v350 = vsub.s32 0, %v349
        %v351 = vrot.slane %v330, %v350
        %v353 = vmul.f32 %v346, %v351
        %v355 = vlaneseq
        %v356 = vshrl.u32 %v355, 7
        %v357 = vsub.s32 0, %v356
        %v358 = vrot.slane %v331, %v357
        %v360 = vadd.f32 %v353, %v358
        %361 = vst.msk [vmem:[%s248] sm:$0xf] %vm332, %v360
        %s362 = sand.u32 %s158, 1
        %s363 = scalar_lea.sflag [#allocation3], %s362
        %s364 = sand.u32 %s158, 1
        %s365 = smul.addr %s364, 4
        %s366 = scalar_lea.vmem [#allocation2], %s365
        // Predicated region
        $region41: #{ldp_projector_forward.9} parent=39 // pred_check
          %p367 = pneg %p168
        $region42: #{ldp_projector_forward.9} parent=39 // pred_check_branch
          %369 = sbr.rel (%p367) target = $region44
        $region43: #{ldp_projector_forward.9} parent=39 // pred_region
          %s371 = ssub.s32 64, 64
          %372 = vsyncadd %s363, %s371
          %s373 = sadd.s32 %s24, %s23
          %s374 = smul.addr %s373, 64
          %s375 = scalar_lea.hbm %s5, %s374
          %s377 = sshll.u32 %s366, 4
          %s378 = int_to_ptr.vmem [resolvable:$true] %s377
          %380 = dma.vmem_to_hbm [thread:$0]  %s378, 64, %s375, %s363
        $region44: #{ldp_projector_forward.9} parent=39 // pred_fallthru
          _
      $region40: #{ldp_projector_forward.9} parent=5 // pred_fallthru
        _
      %p381 = scmp.le.s32.totalorder 2, %s14
      // Predicated region
      $region45: #{ldp_projector_forward.9} parent=5 // pred_check
        %p382 = pneg %p381
      $region46: #{ldp_projector_forward.9} parent=5 // pred_check_branch
        %384 = sbr.rel (%p382) target = $region48
      $region47: #{ldp_projector_forward.9} parent=5 // pred_region
        %s385 = ssub.s32 %s14, 2
        // Predicated region
        $region49: #{ldp_projector_forward.9} parent=47 // pred_check
          %p386 = pneg %p174
        $region50: #{ldp_projector_forward.9} parent=47 // pred_check_branch
          %388 = sbr.rel (%p386) target = $region52
        $region51: #{ldp_projector_forward.9} parent=47 // pred_region
          %s389 = sand.u32 %s159, 1
          %s390 = scalar_lea.sflag [#allocation3], %s389
          %s391 = sand.u32 %s159, 1
          %s392 = smul.addr %s391, 4
          %s393 = scalar_lea.vmem [#allocation2], %s392
          %394 = dma.done %s390, 64
        $region52: #{ldp_projector_forward.9} parent=47 // pred_fallthru
          _
      $region48: #{ldp_projector_forward.9} parent=5 // pred_fallthru
        _
    $region6: #{ldp_projector_forward.9} parent=1 // loop_footer
      %s18 = sadd.s32 1, %s14
    $region7: #{ldp_projector_forward.9} parent=1 // loop_footer_branch
      %13 = sbr.rel target = $region3
    $region8: #{ldp_projector_forward.9} parent=1 // loop_exit
      _
    %395 = vsyncpa [#allocation3], 1
    %s396 = scalar_lea.sflag [#allocation3], 1
    %397 = vsyncpa %s396, 1

</llo_original>
